<compile_context>
chip_gen: v5e
topology: v5e:2x2
jax: 0.10.0
libtpu: 0.0.40
codegen_flags: <defaults>
</compile_context>

<pallas_src>
import jax
import jax.numpy as jnp
import numpy as np
from jax.experimental import pallas as pl
from jax.experimental.pallas import tpu as pltpu

F_VID = 1280
F_KIN = 36
NUM_FEATURES = F_VID + F_KIN        # 1316
F_KIN_PAD = 128                     # kinematic features padded to one lane tile
F_PAD = F_VID + F_KIN_PAD           # 1408
H = 32                              # RNN_OUT per direction
HS = 2 * H                          # 64  = per-stream hidden [fwd|bwd]
NGS = 4 * HS                        # 256 = per-stream gates  [I|F|G|O] x 64
GW = 2 * HS                         # 128 = concat hidden width [vf|vb|kf|kb]
NUM_TARGETS = 6
OUT_PAD = 128                       # lane-dense padded output width


def _leaky(x, slope=0.01):
    return jnp.where(x >= 0, x, slope * x)


# --------------------------------------------------------------------------
# Kernel
# --------------------------------------------------------------------------
def combine_late_kernel(x_ref, w_ihv_ref, w_ihk_ref, bv_ref, bk_ref,
                        w_hhv_ref, w_hhk_ref,
                        w1v_ref, w1k_ref, b1_ref, w2_ref, b2_ref,
                        w3_ref, b3_ref, out_ref):
    T, TB, Fp = x_ref.shape

    # ---- Per-stream input projections (bf16 x bf16, f32 accumulate) ----
    x2d = x_ref[...].reshape(T * TB, Fp)
    xg_v = (jnp.dot(x2d[:, :F_VID], w_ihv_ref[...],
                    preferred_element_type=jnp.float32)
            + bv_ref[...]).reshape(T, TB, NGS)
    xg_k = (jnp.dot(x2d[:, F_VID:], w_ihk_ref[...],
                    preferred_element_type=jnp.float32)
            + bk_ref[...]).reshape(T, TB, NGS)

    # ---- Direction select hoisted out of the recurrence ----
    # Within every 64-wide gate block, lanes [0:32) are the forward direction
    # (reads time t), lanes [32:64) the backward direction (reads time T-1-t).
    col = jax.lax.broadcasted_iota(jnp.int32, (TB, NGS), 1)
    fwd = (col % HS) < H
    gx_v = [jnp.where(fwd, xg_v[t], xg_v[T - 1 - t]) for t in range(T)]
    gx_k = [jnp.where(fwd, xg_k[t], xg_k[T - 1 - t]) for t in range(T)]

    w_hhv = w_hhv_ref[...]                     # (64, 256) bf16
    w_hhk = w_hhk_ref[...]                     # (64, 256) bf16

    def lstm_step(gx, h, c, w_hh):
        g = gx + jnp.dot(h.astype(jnp.bfloat16), w_hh,
                         preferred_element_type=jnp.float32)
        i_g = jax.nn.sigmoid(g[:, 0 * HS:1 * HS])
        f_g = jax.nn.sigmoid(g[:, 1 * HS:2 * HS])
        g_g = jnp.tanh(g[:, 2 * HS:3 * HS])
        o_g = jax.nn.sigmoid(g[:, 3 * HS:4 * HS])
        c = f_g * c + i_g * g_g
        h = o_g * jnp.tanh(c)
        return h, c

    # ---- Two independent 64-wide recurrences (T small & static -> unrolled) --
    h_v = jnp.zeros((TB, HS), jnp.float32)
    c_v = jnp.zeros((TB, HS), jnp.float32)
    h_k = jnp.zeros((TB, HS), jnp.float32)
    c_k = jnp.zeros((TB, HS), jnp.float32)
    for t in range(T):
        h_v, c_v = lstm_step(gx_v[t], h_v, c_v, w_hhv)
        h_k, c_k = lstm_step(gx_k[t], h_k, c_k, w_hhk)

    # ---- MLP head (dropout p=0 == identity); dense1 split per stream ----
    y = _leaky(jnp.dot(h_v.astype(jnp.bfloat16), w1v_ref[...],
                       preferred_element_type=jnp.float32)
               + jnp.dot(h_k.astype(jnp.bfloat16), w1k_ref[...],
                         preferred_element_type=jnp.float32)
               + b1_ref[...])
    y = jnp.tanh(jnp.dot(y.astype(jnp.bfloat16), w2_ref[...],
                         preferred_element_type=jnp.float32) + b2_ref[...])
    y = _leaky(jnp.dot(y.astype(jnp.bfloat16), w3_ref[...],
                       preferred_element_type=jnp.float32) + b3_ref[...])
    out_ref[...] = y.astype(out_ref.dtype)


# --------------------------------------------------------------------------
# Weight packing (host-side, done once)
# --------------------------------------------------------------------------
def pack_params(p):
    """Pre-transpose / pack PyTorch-layout weights for the kernel."""

    def pack_stream(fdim, rows, fwd, bwd):
        w_ih_big = np.zeros((rows, NGS), np.float32)
        w_hh_big = np.zeros((HS, NGS), np.float32)
        b_big = np.zeros((1, NGS), np.float32)
        for d, (w_ih, w_hh, b) in enumerate((fwd, bwd)):
            w_ih_t = np.asarray(w_ih).T          # (fdim, 4H), gate order [i,f,g,o]
            w_hh_t = np.asarray(w_hh).T          # (H, 4H)
            b = np.asarray(b)                    # (4H,)  (= b_ih + b_hh)
            for gi in range(4):                  # gate-major, [fwd|bwd] per block
                cols = slice(gi * HS + d * H, gi * HS + (d + 1) * H)
                w_ih_big[:fdim, cols] = w_ih_t[:, gi * H:(gi + 1) * H]
                w_hh_big[d * H:(d + 1) * H, cols] = w_hh_t[:, gi * H:(gi + 1) * H]
                b_big[0, cols] = b[gi * H:(gi + 1) * H]
        return w_ih_big, w_hh_big, b_big

    w_ihv, w_hhv, bv = pack_stream(
        F_VID, F_VID,
        (p["w_ih_vf"], p["w_hh_vf"], np.asarray(p["b_ih_vf"]) + np.asarray(p["b_hh_vf"])),
        (p["w_ih_vb"], p["w_hh_vb"], np.asarray(p["b_ih_vb"]) + np.asarray(p["b_hh_vb"])))
    w_ihk, w_hhk, bk = pack_stream(
        F_KIN, F_KIN_PAD,
        (p["w_ih_kf"], p["w_hh_kf"], np.asarray(p["b_ih_kf"]) + np.asarray(p["b_hh_kf"])),
        (p["w_ih_kb"], p["w_hh_kb"], np.asarray(p["b_ih_kb"]) + np.asarray(p["b_hh_kb"])))

    # dense1 split by stream; kernel h layout [vf|vb] / [kf|kb] already matches
    # torch's concat order, so rows are just split - no permutation needed.
    w1_t = np.asarray(p["w1"]).T                 # (128 in, 128 out)
    w1v = w1_t[:HS, :]
    w1k = w1_t[HS:, :]
    w2 = np.asarray(p["w2"]).T                   # (128, 64)
    w3 = np.zeros((2 * H, OUT_PAD), np.float32)  # lane-dense padded head
    w3[:, :NUM_TARGETS] = np.asarray(p["w3"]).T
    b3 = np.zeros((1, OUT_PAD), np.float32)
    b3[0, :NUM_TARGETS] = np.asarray(p["b3"])

    bf = lambda a: jnp.asarray(a, jnp.bfloat16)
    f32 = lambda a: jnp.asarray(a, jnp.float32)
    return dict(
        w_ihv=bf(w_ihv), w_ihk=bf(w_ihk), bv=f32(bv), bk=f32(bk),
        w_hhv=bf(w_hhv), w_hhk=bf(w_hhk),
        w1v=bf(w1v), w1k=bf(w1k),
        b1=f32(np.asarray(p["b1"]).reshape(1, -1)),
        w2=bf(w2), b2=f32(np.asarray(p["b2"]).reshape(1, -1)),
        w3=bf(w3), b3=f32(b3),
    )


# --------------------------------------------------------------------------
# Wrapper
# --------------------------------------------------------------------------
def _round_up(n, m):
    return ((n + m - 1) // m) * m


@jax.jit
def combine_late_forward(x, packed):
    B, T, F = x.shape
    assert F == NUM_FEATURES
    # Multiple of 16 (bf16 sublane packing); cap at 128 so v5e's MXU stays
    # filled and larger batches give v7x's two TensorCores a >=2-step grid.
    tile_b = min(128, _round_up(B, 16))
    b_pad = _round_up(B, tile_b)

    # cast -> pad -> transpose: fuses into a single copy pass under jit
    xb = jnp.pad(x.astype(jnp.bfloat16),
                 ((0, b_pad - B), (0, 0), (0, F_PAD - F)))
    xb = jnp.transpose(xb, (1, 0, 2))            # time-major (T, b_pad, F_PAD)

    const = lambda i: (0, 0)                     # resident weight blocks
    in_specs = [
        pl.BlockSpec((T, tile_b, F_PAD), lambda i: (0, i, 0)),
        pl.BlockSpec((F_VID, NGS), const),
        pl.BlockSpec((F_KIN_PAD, NGS), const),
        pl.BlockSpec((1, NGS), const),
        pl.BlockSpec((1, NGS), const),
        pl.BlockSpec((HS, NGS), const),
        pl.BlockSpec((HS, NGS), const),
        pl.BlockSpec((HS, GW), const),
        pl.BlockSpec((HS, GW), const),
        pl.BlockSpec((1, GW), const),
        pl.BlockSpec((GW, 2 * H), const),
        pl.BlockSpec((1, 2 * H), const),
        pl.BlockSpec((2 * H, OUT_PAD), const),
        pl.BlockSpec((1, OUT_PAD), const),
    ]

    flops = (2 * b_pad * T * (F_VID + F_KIN_PAD) * NGS
             + 2 * b_pad * T * 2 * HS * NGS
             + 2 * b_pad * (2 * HS * GW + GW * 2 * H + 2 * H * OUT_PAD))
    transcendentals = b_pad * T * 5 * GW + b_pad * 2 * H
    bytes_accessed = (T * b_pad * F_PAD * 2
                      + ((F_VID + F_KIN_PAD) * NGS + 2 * HS * NGS
                         + 2 * HS * GW + GW * 2 * H + 2 * H * OUT_PAD) * 2
                      + (2 * NGS + GW + 2 * H + OUT_PAD) * 4
                      + b_pad * OUT_PAD * 4)

    out = pl.pallas_call(
        combine_late_kernel,
        out_shape=jax.ShapeDtypeStruct((b_pad, OUT_PAD), jnp.float32),
        grid=(b_pad // tile_b,),
        in_specs=in_specs,
        out_specs=pl.BlockSpec((tile_b, OUT_PAD), lambda i: (i, 0)),
        compiler_params=pltpu.CompilerParams(
            dimension_semantics=("parallel",),
            vmem_limit_bytes=32 * 1024 * 1024),
        cost_estimate=pl.CostEstimate(flops=flops,
                                      transcendentals=transcendentals,
                                      bytes_accessed=bytes_accessed),
    )(xb, packed["w_ihv"], packed["w_ihk"], packed["bv"], packed["bk"],
      packed["w_hhv"], packed["w_hhk"],
      packed["w1v"], packed["w1k"], packed["b1"],
      packed["w2"], packed["b2"], packed["w3"], packed["b3"])
    return out[:B, :NUM_TARGETS]


# --------------------------------------------------------------------------
# Pure-JAX reference (mirrors the kernel's bf16 weight/input quantization,
# computes in f32) for a correctness check.
# --------------------------------------------------------------------------
def reference_forward(x, params):
    q = lambda a: jnp.asarray(a, jnp.float32).astype(jnp.bfloat16).astype(jnp.float32)
    B, T, _ = x.shape
    xb = q(x)
    vid, kin = xb[:, :, :F_VID], xb[:, :, F_VID:]

    def run_dir(feat, w_ih, w_hh, b_ih, b_hh, reverse):
        w_ih = q(w_ih)
        w_hh = q(w_hh)
        b = jnp.asarray(b_ih) + jnp.asarray(b_hh)
        h = jnp.zeros((B, H), jnp.float32)
        c = jnp.zeros((B, H), jnp.float32)
        order = range(T - 1, -1, -1) if reverse else range(T)
        for t in order:
            g = feat[:, t, :] @ w_ih.T + h @ w_hh.T + b
            i_g = jax.nn.sigmoid(g[:, 0 * H:1 * H])
            f_g = jax.nn.sigmoid(g[:, 1 * H:2 * H])
            g_g = jnp.tanh(g[:, 2 * H:3 * H])
            o_g = jax.nn.sigmoid(g[:, 3 * H:4 * H])
            c = f_g * c + i_g * g_g
            h = o_g * jnp.tanh(c)
        return h

    h_vf = run_dir(vid, params["w_ih_vf"], params["w_hh_vf"],
                   params["b_ih_vf"], params["b_hh_vf"], False)
    h_vb = run_dir(vid, params["w_ih_vb"], params["w_hh_vb"],
                   params["b_ih_vb"], params["b_hh_vb"], True)
    h_kf = run_dir(kin, params["w_ih_kf"], params["w_hh_kf"],
                   params["b_ih_kf"], params["b_hh_kf"], False)
    h_kb = run_dir(kin, params["w_ih_kb"], params["w_hh_kb"],
                   params["b_ih_kb"], params["b_hh_kb"], True)
    feat = jnp.concatenate([h_vf, h_vb, h_kf, h_kb], axis=-1)  # torch concat order
    y = _leaky(feat @ q(params["w1"]).T + params["b1"])
    y = jnp.tanh(y @ q(params["w2"]).T + params["b2"])
    y = _leaky(y @ q(params["w3"]).T + params["b3"])
    return y


def init_params(key):
    ks = iter(jax.random.split(key, 32))

    def u(shape, bound):
        return jax.random.uniform(next(ks), shape, jnp.float32, -bound, bound)

    k_lstm = 1.0 / float(np.sqrt(H))
    p = {}
    for name, fdim in (("v", F_VID), ("k", F_KIN)):
        for dsuf in ("f", "b"):
            p[f"w_ih_{name}{dsuf}"] = u((4 * H, fdim), k_lstm)
            p[f"w_hh_{name}{dsuf}"] = u((4 * H, H), k_lstm)
            p[f"b_ih_{name}{dsuf}"] = u((4 * H,), k_lstm)
            p[f"b_hh_{name}{dsuf}"] = u((4 * H,), k_lstm)
    k1 = 1.0 / float(np.sqrt(4 * H))
    k2 = 1.0 / float(np.sqrt(128))
    k3 = 1.0 / float(np.sqrt(64))
    p["w1"] = u((128, 4 * H), k1); p["b1"] = u((128,), k1)
    p["w2"] = u((64, 128), k2);    p["b2"] = u((64,), k2)
    p["w3"] = u((NUM_TARGETS, 64), k3); p["b3"] = u((NUM_TARGETS,), k3)
    return p


if __name__ == "__main__":
    key = jax.random.PRNGKey(0)
    pkey, xkey = jax.random.split(key)
    params = init_params(pkey)
    packed = pack_params(params)

    B, T = 2, 8  # clip_len = 8
    x = jax.random.normal(xkey, (B, T, NUM_FEATURES), jnp.float32)

    out = jax.block_until_ready(combine_late_forward(x, packed))
    assert out.shape == (B, NUM_TARGETS)
    assert bool(jnp.all(jnp.isfinite(out)))

    ref = jax.block_until_ready(reference_forward(x, params))
    np.testing.assert_allclose(np.asarray(out), np.asarray(ref),
                               rtol=1e-2, atol=1e-2)
    print("KERNEL_OK")
</pallas_src>

<mosaic_0001>
module attributes {stable_mosaic.version = 11 : i64} {
  func.func @combine_late_kernel(%arg0: i32, %arg1: memref<8x16x1408xbf16, #tpu.memory_space<vmem>>, %arg2: memref<1280x256xbf16, #tpu.memory_space<vmem>>, %arg3: memref<128x256xbf16, #tpu.memory_space<vmem>>, %arg4: memref<1x256xf32, #tpu.memory_space<vmem>>, %arg5: memref<1x256xf32, #tpu.memory_space<vmem>>, %arg6: memref<64x256xbf16, #tpu.memory_space<vmem>>, %arg7: memref<64x256xbf16, #tpu.memory_space<vmem>>, %arg8: memref<64x128xbf16, #tpu.memory_space<vmem>>, %arg9: memref<64x128xbf16, #tpu.memory_space<vmem>>, %arg10: memref<1x128xf32, #tpu.memory_space<vmem>>, %arg11: memref<128x64xbf16, #tpu.memory_space<vmem>>, %arg12: memref<1x64xf32, #tpu.memory_space<vmem>>, %arg13: memref<64x128xbf16, #tpu.memory_space<vmem>>, %arg14: memref<1x128xf32, #tpu.memory_space<vmem>>, %arg15: memref<16x128xf32, #tpu.memory_space<vmem>>) attributes {dimension_semantics = [#tpu.dimension_semantics<parallel>], iteration_bounds = array<i64: 1>, scalar_prefetch = 0 : i64, scratch_operands = 0 : i64, tpu.core_type = #tpu.core_type<tc>, window_params = [{transform_indices = @transform_0, window_bounds = array<i64: 8, 16, 1408>}, {pipeline_mode = #tpu.pipeline_mode<synchronous>, transform_indices = @transform_1, window_bounds = array<i64: 1280, 256>}, {pipeline_mode = #tpu.pipeline_mode<synchronous>, transform_indices = @transform_2, window_bounds = array<i64: 128, 256>}, {pipeline_mode = #tpu.pipeline_mode<synchronous>, transform_indices = @transform_3, window_bounds = array<i64: 1, 256>}, {pipeline_mode = #tpu.pipeline_mode<synchronous>, transform_indices = @transform_4, window_bounds = array<i64: 1, 256>}, {pipeline_mode = #tpu.pipeline_mode<synchronous>, transform_indices = @transform_5, window_bounds = array<i64: 64, 256>}, {pipeline_mode = #tpu.pipeline_mode<synchronous>, transform_indices = @transform_6, window_bounds = array<i64: 64, 256>}, {pipeline_mode = #tpu.pipeline_mode<synchronous>, transform_indices = @transform_7, window_bounds = array<i64: 64, 128>}, {pipeline_mode = #tpu.pipeline_mode<synchronous>, transform_indices = @transform_8, window_bounds = array<i64: 64, 128>}, {pipeline_mode = #tpu.pipeline_mode<synchronous>, transform_indices = @transform_9, window_bounds = array<i64: 1, 128>}, {pipeline_mode = #tpu.pipeline_mode<synchronous>, transform_indices = @transform_10, window_bounds = array<i64: 128, 64>}, {pipeline_mode = #tpu.pipeline_mode<synchronous>, transform_indices = @transform_11, window_bounds = array<i64: 1, 64>}, {pipeline_mode = #tpu.pipeline_mode<synchronous>, transform_indices = @transform_12, window_bounds = array<i64: 64, 128>}, {pipeline_mode = #tpu.pipeline_mode<synchronous>, transform_indices = @transform_13, window_bounds = array<i64: 1, 128>}, {transform_indices = @transform_14, window_bounds = array<i64: 16, 128>}]} {
    %c0 = arith.constant 0 : index
    %c0_0 = arith.constant 0 : index
    %c0_1 = arith.constant 0 : index
    %0 = vector.load %arg1[%c0, %c0_0, %c0_1] : memref<8x16x1408xbf16, #tpu.memory_space<vmem>>, vector<8x16x1408xbf16>
    %1 = vector.shape_cast %0 : vector<8x16x1408xbf16> to vector<128x1408xbf16>
    %2 = vector.extract_strided_slice %1 {offsets = [0, 0], sizes = [128, 1280], strides = [1, 1]} : vector<128x1408xbf16> to vector<128x1280xbf16>
    %c0_2 = arith.constant 0 : index
    %c0_3 = arith.constant 0 : index
    %3 = vector.load %arg2[%c0_2, %c0_3] : memref<1280x256xbf16, #tpu.memory_space<vmem>>, vector<1280x256xbf16>
    %cst = arith.constant dense<0.000000e+00> : vector<128x256xf32>
    %4 = tpu.matmul %2, %3, %cst {dimension_numbers = #tpu.dot_dimension_numbers<[1], [0], [0], [1], [0, 0, 1, 1], [], []>} : vector<128x1280xbf16>, vector<1280x256xbf16>, vector<128x256xf32> -> vector<128x256xf32>
    %c0_4 = arith.constant 0 : index
    %c0_5 = arith.constant 0 : index
    %5 = vector.load %arg4[%c0_4, %c0_5] : memref<1x256xf32, #tpu.memory_space<vmem>>, vector<1x256xf32>
    %6 = vector.broadcast %5 : vector<1x256xf32> to vector<128x256xf32>
    %7 = arith.addf %4, %6 : vector<128x256xf32>
    %8 = vector.shape_cast %7 : vector<128x256xf32> to vector<8x16x256xf32>
    %9 = vector.extract_strided_slice %1 {offsets = [0, 1280], sizes = [128, 128], strides = [1, 1]} : vector<128x1408xbf16> to vector<128x128xbf16>
    %c0_6 = arith.constant 0 : index
    %c0_7 = arith.constant 0 : index
    %10 = vector.load %arg3[%c0_6, %c0_7] : memref<128x256xbf16, #tpu.memory_space<vmem>>, vector<128x256xbf16>
    %cst_8 = arith.constant dense<0.000000e+00> : vector<128x256xf32>
    %11 = tpu.matmul %9, %10, %cst_8 {dimension_numbers = #tpu.dot_dimension_numbers<[1], [0], [0], [1], [0, 0, 1, 1], [], []>} : vector<128x128xbf16>, vector<128x256xbf16>, vector<128x256xf32> -> vector<128x256xf32>
    %c0_9 = arith.constant 0 : index
    %c0_10 = arith.constant 0 : index
    %12 = vector.load %arg5[%c0_9, %c0_10] : memref<1x256xf32, #tpu.memory_space<vmem>>, vector<1x256xf32>
    %13 = vector.broadcast %12 : vector<1x256xf32> to vector<128x256xf32>
    %14 = arith.addf %11, %13 : vector<128x256xf32>
    %15 = vector.shape_cast %14 : vector<128x256xf32> to vector<8x16x256xf32>
    %16 = tpu.iota {dimensions = array<i32: 1>} : vector<16x256xi32>
    %c64_i32 = arith.constant 64 : i32
    %c0_i32 = arith.constant 0 : i32
    %17 = arith.cmpi eq, %c64_i32, %c0_i32 : i32
    %c1_i32 = arith.constant 1 : i32
    %18 = arith.select %17, %c1_i32, %c64_i32 : i32
    %19 = vector.broadcast %18 : i32 to vector<16x256xi32>
    %20 = arith.remsi %16, %19 : vector<16x256xi32>
    %c0_i32_11 = arith.constant 0 : i32
    %21 = vector.broadcast %c0_i32_11 : i32 to vector<16x256xi32>
    %22 = arith.cmpi ne, %20, %21 : vector<16x256xi32>
    %c0_i32_12 = arith.constant 0 : i32
    %23 = vector.broadcast %c0_i32_12 : i32 to vector<16x256xi32>
    %24 = arith.cmpi slt, %20, %23 : vector<16x256xi32>
    %c0_i32_13 = arith.constant 0 : i32
    %25 = arith.cmpi slt, %18, %c0_i32_13 : i32
    %26 = vector.broadcast %25 : i1 to vector<16x256xi1>
    %27 = vector.broadcast %26 : vector<16x256xi1> to vector<16x256xi1>
    %28 = arith.xori %24, %27 : vector<16x256xi1>
    %29 = arith.andi %28, %22 : vector<16x256xi1>
    %30 = vector.broadcast %18 : i32 to vector<16x256xi32>
    %31 = arith.addi %20, %30 : vector<16x256xi32>
    %32 = arith.select %29, %31, %20 : vector<16x256xi1>, vector<16x256xi32>
    %c32_i32 = arith.constant 32 : i32
    %33 = vector.broadcast %c32_i32 : i32 to vector<16x256xi32>
    %34 = arith.cmpi slt, %32, %33 : vector<16x256xi32>
    %35 = vector.extract_strided_slice %8 {offsets = [0, 0, 0], sizes = [1, 16, 256], strides = [1, 1, 1]} : vector<8x16x256xf32> to vector<1x16x256xf32>
    %36 = vector.shape_cast %35 : vector<1x16x256xf32> to vector<16x256xf32>
    %37 = vector.extract_strided_slice %8 {offsets = [7, 0, 0], sizes = [1, 16, 256], strides = [1, 1, 1]} : vector<8x16x256xf32> to vector<1x16x256xf32>
    %38 = vector.shape_cast %37 : vector<1x16x256xf32> to vector<16x256xf32>
    %39 = arith.select %34, %36, %38 : vector<16x256xi1>, vector<16x256xf32>
    %40 = vector.extract_strided_slice %8 {offsets = [1, 0, 0], sizes = [1, 16, 256], strides = [1, 1, 1]} : vector<8x16x256xf32> to vector<1x16x256xf32>
    %41 = vector.shape_cast %40 : vector<1x16x256xf32> to vector<16x256xf32>
    %42 = vector.extract_strided_slice %8 {offsets = [6, 0, 0], sizes = [1, 16, 256], strides = [1, 1, 1]} : vector<8x16x256xf32> to vector<1x16x256xf32>
    %43 = vector.shape_cast %42 : vector<1x16x256xf32> to vector<16x256xf32>
    %44 = arith.select %34, %41, %43 : vector<16x256xi1>, vector<16x256xf32>
    %45 = vector.extract_strided_slice %8 {offsets = [2, 0, 0], sizes = [1, 16, 256], strides = [1, 1, 1]} : vector<8x16x256xf32> to vector<1x16x256xf32>
    %46 = vector.shape_cast %45 : vector<1x16x256xf32> to vector<16x256xf32>
    %47 = vector.extract_strided_slice %8 {offsets = [5, 0, 0], sizes = [1, 16, 256], strides = [1, 1, 1]} : vector<8x16x256xf32> to vector<1x16x256xf32>
    %48 = vector.shape_cast %47 : vector<1x16x256xf32> to vector<16x256xf32>
    %49 = arith.select %34, %46, %48 : vector<16x256xi1>, vector<16x256xf32>
    %50 = vector.extract_strided_slice %8 {offsets = [3, 0, 0], sizes = [1, 16, 256], strides = [1, 1, 1]} : vector<8x16x256xf32> to vector<1x16x256xf32>
    %51 = vector.shape_cast %50 : vector<1x16x256xf32> to vector<16x256xf32>
    %52 = vector.extract_strided_slice %8 {offsets = [4, 0, 0], sizes = [1, 16, 256], strides = [1, 1, 1]} : vector<8x16x256xf32> to vector<1x16x256xf32>
    %53 = vector.shape_cast %52 : vector<1x16x256xf32> to vector<16x256xf32>
    %54 = arith.select %34, %51, %53 : vector<16x256xi1>, vector<16x256xf32>
    %55 = vector.extract_strided_slice %8 {offsets = [4, 0, 0], sizes = [1, 16, 256], strides = [1, 1, 1]} : vector<8x16x256xf32> to vector<1x16x256xf32>
    %56 = vector.shape_cast %55 : vector<1x16x256xf32> to vector<16x256xf32>
    %57 = vector.extract_strided_slice %8 {offsets = [3, 0, 0], sizes = [1, 16, 256], strides = [1, 1, 1]} : vector<8x16x256xf32> to vector<1x16x256xf32>
    %58 = vector.shape_cast %57 : vector<1x16x256xf32> to vector<16x256xf32>
    %59 = arith.select %34, %56, %58 : vector<16x256xi1>, vector<16x256xf32>
    %60 = vector.extract_strided_slice %8 {offsets = [5, 0, 0], sizes = [1, 16, 256], strides = [1, 1, 1]} : vector<8x16x256xf32> to vector<1x16x256xf32>
    %61 = vector.shape_cast %60 : vector<1x16x256xf32> to vector<16x256xf32>
    %62 = vector.extract_strided_slice %8 {offsets = [2, 0, 0], sizes = [1, 16, 256], strides = [1, 1, 1]} : vector<8x16x256xf32> to vector<1x16x256xf32>
    %63 = vector.shape_cast %62 : vector<1x16x256xf32> to vector<16x256xf32>
    %64 = arith.select %34, %61, %63 : vector<16x256xi1>, vector<16x256xf32>
    %65 = vector.extract_strided_slice %8 {offsets = [6, 0, 0], sizes = [1, 16, 256], strides = [1, 1, 1]} : vector<8x16x256xf32> to vector<1x16x256xf32>
    %66 = vector.shape_cast %65 : vector<1x16x256xf32> to vector<16x256xf32>
    %67 = vector.extract_strided_slice %8 {offsets = [1, 0, 0], sizes = [1, 16, 256], strides = [1, 1, 1]} : vector<8x16x256xf32> to vector<1x16x256xf32>
    %68 = vector.shape_cast %67 : vector<1x16x256xf32> to vector<16x256xf32>
    %69 = arith.select %34, %66, %68 : vector<16x256xi1>, vector<16x256xf32>
    %70 = vector.extract_strided_slice %8 {offsets = [7, 0, 0], sizes = [1, 16, 256], strides = [1, 1, 1]} : vector<8x16x256xf32> to vector<1x16x256xf32>
    %71 = vector.shape_cast %70 : vector<1x16x256xf32> to vector<16x256xf32>
    %72 = vector.extract_strided_slice %8 {offsets = [0, 0, 0], sizes = [1, 16, 256], strides = [1, 1, 1]} : vector<8x16x256xf32> to vector<1x16x256xf32>
    %73 = vector.shape_cast %72 : vector<1x16x256xf32> to vector<16x256xf32>
    %74 = arith.select %34, %71, %73 : vector<16x256xi1>, vector<16x256xf32>
    %75 = vector.extract_strided_slice %15 {offsets = [0, 0, 0], sizes = [1, 16, 256], strides = [1, 1, 1]} : vector<8x16x256xf32> to vector<1x16x256xf32>
    %76 = vector.shape_cast %75 : vector<1x16x256xf32> to vector<16x256xf32>
    %77 = vector.extract_strided_slice %15 {offsets = [7, 0, 0], sizes = [1, 16, 256], strides = [1, 1, 1]} : vector<8x16x256xf32> to vector<1x16x256xf32>
    %78 = vector.shape_cast %77 : vector<1x16x256xf32> to vector<16x256xf32>
    %79 = arith.select %34, %76, %78 : vector<16x256xi1>, vector<16x256xf32>
    %80 = vector.extract_strided_slice %15 {offsets = [1, 0, 0], sizes = [1, 16, 256], strides = [1, 1, 1]} : vector<8x16x256xf32> to vector<1x16x256xf32>
    %81 = vector.shape_cast %80 : vector<1x16x256xf32> to vector<16x256xf32>
    %82 = vector.extract_strided_slice %15 {offsets = [6, 0, 0], sizes = [1, 16, 256], strides = [1, 1, 1]} : vector<8x16x256xf32> to vector<1x16x256xf32>
    %83 = vector.shape_cast %82 : vector<1x16x256xf32> to vector<16x256xf32>
    %84 = arith.select %34, %81, %83 : vector<16x256xi1>, vector<16x256xf32>
    %85 = vector.extract_strided_slice %15 {offsets = [2, 0, 0], sizes = [1, 16, 256], strides = [1, 1, 1]} : vector<8x16x256xf32> to vector<1x16x256xf32>
    %86 = vector.shape_cast %85 : vector<1x16x256xf32> to vector<16x256xf32>
    %87 = vector.extract_strided_slice %15 {offsets = [5, 0, 0], sizes = [1, 16, 256], strides = [1, 1, 1]} : vector<8x16x256xf32> to vector<1x16x256xf32>
    %88 = vector.shape_cast %87 : vector<1x16x256xf32> to vector<16x256xf32>
    %89 = arith.select %34, %86, %88 : vector<16x256xi1>, vector<16x256xf32>
    %90 = vector.extract_strided_slice %15 {offsets = [3, 0, 0], sizes = [1, 16, 256], strides = [1, 1, 1]} : vector<8x16x256xf32> to vector<1x16x256xf32>
    %91 = vector.shape_cast %90 : vector<1x16x256xf32> to vector<16x256xf32>
    %92 = vector.extract_strided_slice %15 {offsets = [4, 0, 0], sizes = [1, 16, 256], strides = [1, 1, 1]} : vector<8x16x256xf32> to vector<1x16x256xf32>
    %93 = vector.shape_cast %92 : vector<1x16x256xf32> to vector<16x256xf32>
    %94 = arith.select %34, %91, %93 : vector<16x256xi1>, vector<16x256xf32>
    %95 = vector.extract_strided_slice %15 {offsets = [4, 0, 0], sizes = [1, 16, 256], strides = [1, 1, 1]} : vector<8x16x256xf32> to vector<1x16x256xf32>
    %96 = vector.shape_cast %95 : vector<1x16x256xf32> to vector<16x256xf32>
    %97 = vector.extract_strided_slice %15 {offsets = [3, 0, 0], sizes = [1, 16, 256], strides = [1, 1, 1]} : vector<8x16x256xf32> to vector<1x16x256xf32>
    %98 = vector.shape_cast %97 : vector<1x16x256xf32> to vector<16x256xf32>
    %99 = arith.select %34, %96, %98 : vector<16x256xi1>, vector<16x256xf32>
    %100 = vector.extract_strided_slice %15 {offsets = [5, 0, 0], sizes = [1, 16, 256], strides = [1, 1, 1]} : vector<8x16x256xf32> to vector<1x16x256xf32>
    %101 = vector.shape_cast %100 : vector<1x16x256xf32> to vector<16x256xf32>
    %102 = vector.extract_strided_slice %15 {offsets = [2, 0, 0], sizes = [1, 16, 256], strides = [1, 1, 1]} : vector<8x16x256xf32> to vector<1x16x256xf32>
    %103 = vector.shape_cast %102 : vector<1x16x256xf32> to vector<16x256xf32>
    %104 = arith.select %34, %101, %103 : vector<16x256xi1>, vector<16x256xf32>
    %105 = vector.extract_strided_slice %15 {offsets = [6, 0, 0], sizes = [1, 16, 256], strides = [1, 1, 1]} : vector<8x16x256xf32> to vector<1x16x256xf32>
    %106 = vector.shape_cast %105 : vector<1x16x256xf32> to vector<16x256xf32>
    %107 = vector.extract_strided_slice %15 {offsets = [1, 0, 0], sizes = [1, 16, 256], strides = [1, 1, 1]} : vector<8x16x256xf32> to vector<1x16x256xf32>
    %108 = vector.shape_cast %107 : vector<1x16x256xf32> to vector<16x256xf32>
    %109 = arith.select %34, %106, %108 : vector<16x256xi1>, vector<16x256xf32>
    %110 = vector.extract_strided_slice %15 {offsets = [7, 0, 0], sizes = [1, 16, 256], strides = [1, 1, 1]} : vector<8x16x256xf32> to vector<1x16x256xf32>
    %111 = vector.shape_cast %110 : vector<1x16x256xf32> to vector<16x256xf32>
    %112 = vector.extract_strided_slice %15 {offsets = [0, 0, 0], sizes = [1, 16, 256], strides = [1, 1, 1]} : vector<8x16x256xf32> to vector<1x16x256xf32>
    %113 = vector.shape_cast %112 : vector<1x16x256xf32> to vector<16x256xf32>
    %114 = arith.select %34, %111, %113 : vector<16x256xi1>, vector<16x256xf32>
    %c0_14 = arith.constant 0 : index
    %c0_15 = arith.constant 0 : index
    %115 = vector.load %arg6[%c0_14, %c0_15] : memref<64x256xbf16, #tpu.memory_space<vmem>>, vector<64x256xbf16>
    %c0_16 = arith.constant 0 : index
    %c0_17 = arith.constant 0 : index
    %116 = vector.load %arg7[%c0_16, %c0_17] : memref<64x256xbf16, #tpu.memory_space<vmem>>, vector<64x256xbf16>
    %cst_18 = arith.constant 0.000000e+00 : f32
    %117 = vector.broadcast %cst_18 : f32 to vector<16x64xf32>
    %cst_19 = arith.constant 0.000000e+00 : f32
    %118 = vector.broadcast %cst_19 : f32 to vector<16x64xf32>
    %cst_20 = arith.constant 0.000000e+00 : f32
    %119 = vector.broadcast %cst_20 : f32 to vector<16x64xf32>
    %cst_21 = arith.constant 0.000000e+00 : f32
    %120 = vector.broadcast %cst_21 : f32 to vector<16x64xf32>
    %121 = arith.truncf %117 : vector<16x64xf32> to vector<16x64xbf16>
    %cst_22 = arith.constant dense<0.000000e+00> : vector<16x256xf32>
    %122 = tpu.matmul %121, %115, %cst_22 {dimension_numbers = #tpu.dot_dimension_numbers<[1], [0], [0], [1], [0, 0, 1, 1], [], []>} : vector<16x64xbf16>, vector<64x256xbf16>, vector<16x256xf32> -> vector<16x256xf32>
    %123 = arith.addf %39, %122 : vector<16x256xf32>
    %124 = vector.extract_strided_slice %123 {offsets = [0, 0], sizes = [16, 64], strides = [1, 1]} : vector<16x256xf32> to vector<16x64xf32>
    %125 = arith.negf %124 : vector<16x64xf32>
    %126 = math.exp %125 : vector<16x64xf32>
    %cst_23 = arith.constant 1.000000e+00 : f32
    %127 = vector.broadcast %cst_23 : f32 to vector<16x64xf32>
    %128 = arith.addf %127, %126 : vector<16x64xf32>
    %129 = arith.divf %127, %128 : vector<16x64xf32>
    %130 = vector.extract_strided_slice %123 {offsets = [0, 64], sizes = [16, 64], strides = [1, 1]} : vector<16x256xf32> to vector<16x64xf32>
    %131 = arith.negf %130 : vector<16x64xf32>
    %132 = math.exp %131 : vector<16x64xf32>
    %cst_24 = arith.constant 1.000000e+00 : f32
    %133 = vector.broadcast %cst_24 : f32 to vector<16x64xf32>
    %134 = arith.addf %133, %132 : vector<16x64xf32>
    %135 = arith.divf %133, %134 : vector<16x64xf32>
    %136 = vector.extract_strided_slice %123 {offsets = [0, 128], sizes = [16, 64], strides = [1, 1]} : vector<16x256xf32> to vector<16x64xf32>
    %137 = math.tanh %136 : vector<16x64xf32>
    %138 = vector.extract_strided_slice %123 {offsets = [0, 192], sizes = [16, 64], strides = [1, 1]} : vector<16x256xf32> to vector<16x64xf32>
    %139 = arith.negf %138 : vector<16x64xf32>
    %140 = math.exp %139 : vector<16x64xf32>
    %cst_25 = arith.constant 1.000000e+00 : f32
    %141 = vector.broadcast %cst_25 : f32 to vector<16x64xf32>
    %142 = arith.addf %141, %140 : vector<16x64xf32>
    %143 = arith.divf %141, %142 : vector<16x64xf32>
    %144 = arith.mulf %135, %118 : vector<16x64xf32>
    %145 = arith.mulf %129, %137 : vector<16x64xf32>
    %146 = arith.addf %144, %145 : vector<16x64xf32>
    %147 = math.tanh %146 : vector<16x64xf32>
    %148 = arith.mulf %143, %147 : vector<16x64xf32>
    %149 = arith.truncf %119 : vector<16x64xf32> to vector<16x64xbf16>
    %cst_26 = arith.constant dense<0.000000e+00> : vector<16x256xf32>
    %150 = tpu.matmul %149, %116, %cst_26 {dimension_numbers = #tpu.dot_dimension_numbers<[1], [0], [0], [1], [0, 0, 1, 1], [], []>} : vector<16x64xbf16>, vector<64x256xbf16>, vector<16x256xf32> -> vector<16x256xf32>
    %151 = arith.addf %79, %150 : vector<16x256xf32>
    %152 = vector.extract_strided_slice %151 {offsets = [0, 0], sizes = [16, 64], strides = [1, 1]} : vector<16x256xf32> to vector<16x64xf32>
    %153 = arith.negf %152 : vector<16x64xf32>
    %154 = math.exp %153 : vector<16x64xf32>
    %cst_27 = arith.constant 1.000000e+00 : f32
    %155 = vector.broadcast %cst_27 : f32 to vector<16x64xf32>
    %156 = arith.addf %155, %154 : vector<16x64xf32>
    %157 = arith.divf %155, %156 : vector<16x64xf32>
    %158 = vector.extract_strided_slice %151 {offsets = [0, 64], sizes = [16, 64], strides = [1, 1]} : vector<16x256xf32> to vector<16x64xf32>
    %159 = arith.negf %158 : vector<16x64xf32>
    %160 = math.exp %159 : vector<16x64xf32>
    %cst_28 = arith.constant 1.000000e+00 : f32
    %161 = vector.broadcast %cst_28 : f32 to vector<16x64xf32>
    %162 = arith.addf %161, %160 : vector<16x64xf32>
    %163 = arith.divf %161, %162 : vector<16x64xf32>
    %164 = vector.extract_strided_slice %151 {offsets = [0, 128], sizes = [16, 64], strides = [1, 1]} : vector<16x256xf32> to vector<16x64xf32>
    %165 = math.tanh %164 : vector<16x64xf32>
    %166 = vector.extract_strided_slice %151 {offsets = [0, 192], sizes = [16, 64], strides = [1, 1]} : vector<16x256xf32> to vector<16x64xf32>
    %167 = arith.negf %166 : vector<16x64xf32>
    %168 = math.exp %167 : vector<16x64xf32>
    %cst_29 = arith.constant 1.000000e+00 : f32
    %169 = vector.broadcast %cst_29 : f32 to vector<16x64xf32>
    %170 = arith.addf %169, %168 : vector<16x64xf32>
    %171 = arith.divf %169, %170 : vector<16x64xf32>
    %172 = arith.mulf %163, %120 : vector<16x64xf32>
    %173 = arith.mulf %157, %165 : vector<16x64xf32>
    %174 = arith.addf %172, %173 : vector<16x64xf32>
    %175 = math.tanh %174 : vector<16x64xf32>
    %176 = arith.mulf %171, %175 : vector<16x64xf32>
    %177 = arith.truncf %148 : vector<16x64xf32> to vector<16x64xbf16>
    %cst_30 = arith.constant dense<0.000000e+00> : vector<16x256xf32>
    %178 = tpu.matmul %177, %115, %cst_30 {dimension_numbers = #tpu.dot_dimension_numbers<[1], [0], [0], [1], [0, 0, 1, 1], [], []>} : vector<16x64xbf16>, vector<64x256xbf16>, vector<16x256xf32> -> vector<16x256xf32>
    %179 = arith.addf %44, %178 : vector<16x256xf32>
    %180 = vector.extract_strided_slice %179 {offsets = [0, 0], sizes = [16, 64], strides = [1, 1]} : vector<16x256xf32> to vector<16x64xf32>
    %181 = arith.negf %180 : vector<16x64xf32>
    %182 = math.exp %181 : vector<16x64xf32>
    %cst_31 = arith.constant 1.000000e+00 : f32
    %183 = vector.broadcast %cst_31 : f32 to vector<16x64xf32>
    %184 = arith.addf %183, %182 : vector<16x64xf32>
    %185 = arith.divf %183, %184 : vector<16x64xf32>
    %186 = vector.extract_strided_slice %179 {offsets = [0, 64], sizes = [16, 64], strides = [1, 1]} : vector<16x256xf32> to vector<16x64xf32>
    %187 = arith.negf %186 : vector<16x64xf32>
    %188 = math.exp %187 : vector<16x64xf32>
    %cst_32 = arith.constant 1.000000e+00 : f32
    %189 = vector.broadcast %cst_32 : f32 to vector<16x64xf32>
    %190 = arith.addf %189, %188 : vector<16x64xf32>
    %191 = arith.divf %189, %190 : vector<16x64xf32>
    %192 = vector.extract_strided_slice %179 {offsets = [0, 128], sizes = [16, 64], strides = [1, 1]} : vector<16x256xf32> to vector<16x64xf32>
    %193 = math.tanh %192 : vector<16x64xf32>
    %194 = vector.extract_strided_slice %179 {offsets = [0, 192], sizes = [16, 64], strides = [1, 1]} : vector<16x256xf32> to vector<16x64xf32>
    %195 = arith.negf %194 : vector<16x64xf32>
    %196 = math.exp %195 : vector<16x64xf32>
    %cst_33 = arith.constant 1.000000e+00 : f32
    %197 = vector.broadcast %cst_33 : f32 to vector<16x64xf32>
    %198 = arith.addf %197, %196 : vector<16x64xf32>
    %199 = arith.divf %197, %198 : vector<16x64xf32>
    %200 = arith.mulf %191, %146 : vector<16x64xf32>
    %201 = arith.mulf %185, %193 : vector<16x64xf32>
    %202 = arith.addf %200, %201 : vector<16x64xf32>
    %203 = math.tanh %202 : vector<16x64xf32>
    %204 = arith.mulf %199, %203 : vector<16x64xf32>
    %205 = arith.truncf %176 : vector<16x64xf32> to vector<16x64xbf16>
    %cst_34 = arith.constant dense<0.000000e+00> : vector<16x256xf32>
    %206 = tpu.matmul %205, %116, %cst_34 {dimension_numbers = #tpu.dot_dimension_numbers<[1], [0], [0], [1], [0, 0, 1, 1], [], []>} : vector<16x64xbf16>, vector<64x256xbf16>, vector<16x256xf32> -> vector<16x256xf32>
    %207 = arith.addf %84, %206 : vector<16x256xf32>
    %208 = vector.extract_strided_slice %207 {offsets = [0, 0], sizes = [16, 64], strides = [1, 1]} : vector<16x256xf32> to vector<16x64xf32>
    %209 = arith.negf %208 : vector<16x64xf32>
    %210 = math.exp %209 : vector<16x64xf32>
    %cst_35 = arith.constant 1.000000e+00 : f32
    %211 = vector.broadcast %cst_35 : f32 to vector<16x64xf32>
    %212 = arith.addf %211, %210 : vector<16x64xf32>
    %213 = arith.divf %211, %212 : vector<16x64xf32>
    %214 = vector.extract_strided_slice %207 {offsets = [0, 64], sizes = [16, 64], strides = [1, 1]} : vector<16x256xf32> to vector<16x64xf32>
    %215 = arith.negf %214 : vector<16x64xf32>
    %216 = math.exp %215 : vector<16x64xf32>
    %cst_36 = arith.constant 1.000000e+00 : f32
    %217 = vector.broadcast %cst_36 : f32 to vector<16x64xf32>
    %218 = arith.addf %217, %216 : vector<16x64xf32>
    %219 = arith.divf %217, %218 : vector<16x64xf32>
    %220 = vector.extract_strided_slice %207 {offsets = [0, 128], sizes = [16, 64], strides = [1, 1]} : vector<16x256xf32> to vector<16x64xf32>
    %221 = math.tanh %220 : vector<16x64xf32>
    %222 = vector.extract_strided_slice %207 {offsets = [0, 192], sizes = [16, 64], strides = [1, 1]} : vector<16x256xf32> to vector<16x64xf32>
    %223 = arith.negf %222 : vector<16x64xf32>
    %224 = math.exp %223 : vector<16x64xf32>
    %cst_37 = arith.constant 1.000000e+00 : f32
    %225 = vector.broadcast %cst_37 : f32 to vector<16x64xf32>
    %226 = arith.addf %225, %224 : vector<16x64xf32>
    %227 = arith.divf %225, %226 : vector<16x64xf32>
    %228 = arith.mulf %219, %174 : vector<16x64xf32>
    %229 = arith.mulf %213, %221 : vector<16x64xf32>
    %230 = arith.addf %228, %229 : vector<16x64xf32>
    %231 = math.tanh %230 : vector<16x64xf32>
    %232 = arith.mulf %227, %231 : vector<16x64xf32>
    %233 = arith.truncf %204 : vector<16x64xf32> to vector<16x64xbf16>
    %cst_38 = arith.constant dense<0.000000e+00> : vector<16x256xf32>
    %234 = tpu.matmul %233, %115, %cst_38 {dimension_numbers = #tpu.dot_dimension_numbers<[1], [0], [0], [1], [0, 0, 1, 1], [], []>} : vector<16x64xbf16>, vector<64x256xbf16>, vector<16x256xf32> -> vector<16x256xf32>
    %235 = arith.addf %49, %234 : vector<16x256xf32>
    %236 = vector.extract_strided_slice %235 {offsets = [0, 0], sizes = [16, 64], strides = [1, 1]} : vector<16x256xf32> to vector<16x64xf32>
    %237 = arith.negf %236 : vector<16x64xf32>
    %238 = math.exp %237 : vector<16x64xf32>
    %cst_39 = arith.constant 1.000000e+00 : f32
    %239 = vector.broadcast %cst_39 : f32 to vector<16x64xf32>
    %240 = arith.addf %239, %238 : vector<16x64xf32>
    %241 = arith.divf %239, %240 : vector<16x64xf32>
    %242 = vector.extract_strided_slice %235 {offsets = [0, 64], sizes = [16, 64], strides = [1, 1]} : vector<16x256xf32> to vector<16x64xf32>
    %243 = arith.negf %242 : vector<16x64xf32>
    %244 = math.exp %243 : vector<16x64xf32>
    %cst_40 = arith.constant 1.000000e+00 : f32
    %245 = vector.broadcast %cst_40 : f32 to vector<16x64xf32>
    %246 = arith.addf %245, %244 : vector<16x64xf32>
    %247 = arith.divf %245, %246 : vector<16x64xf32>
    %248 = vector.extract_strided_slice %235 {offsets = [0, 128], sizes = [16, 64], strides = [1, 1]} : vector<16x256xf32> to vector<16x64xf32>
    %249 = math.tanh %248 : vector<16x64xf32>
    %250 = vector.extract_strided_slice %235 {offsets = [0, 192], sizes = [16, 64], strides = [1, 1]} : vector<16x256xf32> to vector<16x64xf32>
    %251 = arith.negf %250 : vector<16x64xf32>
    %252 = math.exp %251 : vector<16x64xf32>
    %cst_41 = arith.constant 1.000000e+00 : f32
    %253 = vector.broadcast %cst_41 : f32 to vector<16x64xf32>
    %254 = arith.addf %253, %252 : vector<16x64xf32>
    %255 = arith.divf %253, %254 : vector<16x64xf32>
    %256 = arith.mulf %247, %202 : vector<16x64xf32>
    %257 = arith.mulf %241, %249 : vector<16x64xf32>
    %258 = arith.addf %256, %257 : vector<16x64xf32>
    %259 = math.tanh %258 : vector<16x64xf32>
    %260 = arith.mulf %255, %259 : vector<16x64xf32>
    %261 = arith.truncf %232 : vector<16x64xf32> to vector<16x64xbf16>
    %cst_42 = arith.constant dense<0.000000e+00> : vector<16x256xf32>
    %262 = tpu.matmul %261, %116, %cst_42 {dimension_numbers = #tpu.dot_dimension_numbers<[1], [0], [0], [1], [0, 0, 1, 1], [], []>} : vector<16x64xbf16>, vector<64x256xbf16>, vector<16x256xf32> -> vector<16x256xf32>
    %263 = arith.addf %89, %262 : vector<16x256xf32>
    %264 = vector.extract_strided_slice %263 {offsets = [0, 0], sizes = [16, 64], strides = [1, 1]} : vector<16x256xf32> to vector<16x64xf32>
    %265 = arith.negf %264 : vector<16x64xf32>
    %266 = math.exp %265 : vector<16x64xf32>
    %cst_43 = arith.constant 1.000000e+00 : f32
    %267 = vector.broadcast %cst_43 : f32 to vector<16x64xf32>
    %268 = arith.addf %267, %266 : vector<16x64xf32>
    %269 = arith.divf %267, %268 : vector<16x64xf32>
    %270 = vector.extract_strided_slice %263 {offsets = [0, 64], sizes = [16, 64], strides = [1, 1]} : vector<16x256xf32> to vector<16x64xf32>
    %271 = arith.negf %270 : vector<16x64xf32>
    %272 = math.exp %271 : vector<16x64xf32>
    %cst_44 = arith.constant 1.000000e+00 : f32
    %273 = vector.broadcast %cst_44 : f32 to vector<16x64xf32>
    %274 = arith.addf %273, %272 : vector<16x64xf32>
    %275 = arith.divf %273, %274 : vector<16x64xf32>
    %276 = vector.extract_strided_slice %263 {offsets = [0, 128], sizes = [16, 64], strides = [1, 1]} : vector<16x256xf32> to vector<16x64xf32>
    %277 = math.tanh %276 : vector<16x64xf32>
    %278 = vector.extract_strided_slice %263 {offsets = [0, 192], sizes = [16, 64], strides = [1, 1]} : vector<16x256xf32> to vector<16x64xf32>
    %279 = arith.negf %278 : vector<16x64xf32>
    %280 = math.exp %279 : vector<16x64xf32>
    %cst_45 = arith.constant 1.000000e+00 : f32
    %281 = vector.broadcast %cst_45 : f32 to vector<16x64xf32>
    %282 = arith.addf %281, %280 : vector<16x64xf32>
    %283 = arith.divf %281, %282 : vector<16x64xf32>
    %284 = arith.mulf %275, %230 : vector<16x64xf32>
    %285 = arith.mulf %269, %277 : vector<16x64xf32>
    %286 = arith.addf %284, %285 : vector<16x64xf32>
    %287 = math.tanh %286 : vector<16x64xf32>
    %288 = arith.mulf %283, %287 : vector<16x64xf32>
    %289 = arith.truncf %260 : vector<16x64xf32> to vector<16x64xbf16>
    %cst_46 = arith.constant dense<0.000000e+00> : vector<16x256xf32>
    %290 = tpu.matmul %289, %115, %cst_46 {dimension_numbers = #tpu.dot_dimension_numbers<[1], [0], [0], [1], [0, 0, 1, 1], [], []>} : vector<16x64xbf16>, vector<64x256xbf16>, vector<16x256xf32> -> vector<16x256xf32>
    %291 = arith.addf %54, %290 : vector<16x256xf32>
    %292 = vector.extract_strided_slice %291 {offsets = [0, 0], sizes = [16, 64], strides = [1, 1]} : vector<16x256xf32> to vector<16x64xf32>
    %293 = arith.negf %292 : vector<16x64xf32>
    %294 = math.exp %293 : vector<16x64xf32>
    %cst_47 = arith.constant 1.000000e+00 : f32
    %295 = vector.broadcast %cst_47 : f32 to vector<16x64xf32>
    %296 = arith.addf %295, %294 : vector<16x64xf32>
    %297 = arith.divf %295, %296 : vector<16x64xf32>
    %298 = vector.extract_strided_slice %291 {offsets = [0, 64], sizes = [16, 64], strides = [1, 1]} : vector<16x256xf32> to vector<16x64xf32>
    %299 = arith.negf %298 : vector<16x64xf32>
    %300 = math.exp %299 : vector<16x64xf32>
    %cst_48 = arith.constant 1.000000e+00 : f32
    %301 = vector.broadcast %cst_48 : f32 to vector<16x64xf32>
    %302 = arith.addf %301, %300 : vector<16x64xf32>
    %303 = arith.divf %301, %302 : vector<16x64xf32>
    %304 = vector.extract_strided_slice %291 {offsets = [0, 128], sizes = [16, 64], strides = [1, 1]} : vector<16x256xf32> to vector<16x64xf32>
    %305 = math.tanh %304 : vector<16x64xf32>
    %306 = vector.extract_strided_slice %291 {offsets = [0, 192], sizes = [16, 64], strides = [1, 1]} : vector<16x256xf32> to vector<16x64xf32>
    %307 = arith.negf %306 : vector<16x64xf32>
    %308 = math.exp %307 : vector<16x64xf32>
    %cst_49 = arith.constant 1.000000e+00 : f32
    %309 = vector.broadcast %cst_49 : f32 to vector<16x64xf32>
    %310 = arith.addf %309, %308 : vector<16x64xf32>
    %311 = arith.divf %309, %310 : vector<16x64xf32>
    %312 = arith.mulf %303, %258 : vector<16x64xf32>
    %313 = arith.mulf %297, %305 : vector<16x64xf32>
    %314 = arith.addf %312, %313 : vector<16x64xf32>
    %315 = math.tanh %314 : vector<16x64xf32>
    %316 = arith.mulf %311, %315 : vector<16x64xf32>
    %317 = arith.truncf %288 : vector<16x64xf32> to vector<16x64xbf16>
    %cst_50 = arith.constant dense<0.000000e+00> : vector<16x256xf32>
    %318 = tpu.matmul %317, %116, %cst_50 {dimension_numbers = #tpu.dot_dimension_numbers<[1], [0], [0], [1], [0, 0, 1, 1], [], []>} : vector<16x64xbf16>, vector<64x256xbf16>, vector<16x256xf32> -> vector<16x256xf32>
    %319 = arith.addf %94, %318 : vector<16x256xf32>
    %320 = vector.extract_strided_slice %319 {offsets = [0, 0], sizes = [16, 64], strides = [1, 1]} : vector<16x256xf32> to vector<16x64xf32>
    %321 = arith.negf %320 : vector<16x64xf32>
    %322 = math.exp %321 : vector<16x64xf32>
    %cst_51 = arith.constant 1.000000e+00 : f32
    %323 = vector.broadcast %cst_51 : f32 to vector<16x64xf32>
    %324 = arith.addf %323, %322 : vector<16x64xf32>
    %325 = arith.divf %323, %324 : vector<16x64xf32>
    %326 = vector.extract_strided_slice %319 {offsets = [0, 64], sizes = [16, 64], strides = [1, 1]} : vector<16x256xf32> to vector<16x64xf32>
    %327 = arith.negf %326 : vector<16x64xf32>
    %328 = math.exp %327 : vector<16x64xf32>
    %cst_52 = arith.constant 1.000000e+00 : f32
    %329 = vector.broadcast %cst_52 : f32 to vector<16x64xf32>
    %330 = arith.addf %329, %328 : vector<16x64xf32>
    %331 = arith.divf %329, %330 : vector<16x64xf32>
    %332 = vector.extract_strided_slice %319 {offsets = [0, 128], sizes = [16, 64], strides = [1, 1]} : vector<16x256xf32> to vector<16x64xf32>
    %333 = math.tanh %332 : vector<16x64xf32>
    %334 = vector.extract_strided_slice %319 {offsets = [0, 192], sizes = [16, 64], strides = [1, 1]} : vector<16x256xf32> to vector<16x64xf32>
    %335 = arith.negf %334 : vector<16x64xf32>
    %336 = math.exp %335 : vector<16x64xf32>
    %cst_53 = arith.constant 1.000000e+00 : f32
    %337 = vector.broadcast %cst_53 : f32 to vector<16x64xf32>
    %338 = arith.addf %337, %336 : vector<16x64xf32>
    %339 = arith.divf %337, %338 : vector<16x64xf32>
    %340 = arith.mulf %331, %286 : vector<16x64xf32>
    %341 = arith.mulf %325, %333 : vector<16x64xf32>
    %342 = arith.addf %340, %341 : vector<16x64xf32>
    %343 = math.tanh %342 : vector<16x64xf32>
    %344 = arith.mulf %339, %343 : vector<16x64xf32>
    %345 = arith.truncf %316 : vector<16x64xf32> to vector<16x64xbf16>
    %cst_54 = arith.constant dense<0.000000e+00> : vector<16x256xf32>
    %346 = tpu.matmul %345, %115, %cst_54 {dimension_numbers = #tpu.dot_dimension_numbers<[1], [0], [0], [1], [0, 0, 1, 1], [], []>} : vector<16x64xbf16>, vector<64x256xbf16>, vector<16x256xf32> -> vector<16x256xf32>
    %347 = arith.addf %59, %346 : vector<16x256xf32>
    %348 = vector.extract_strided_slice %347 {offsets = [0, 0], sizes = [16, 64], strides = [1, 1]} : vector<16x256xf32> to vector<16x64xf32>
    %349 = arith.negf %348 : vector<16x64xf32>
    %350 = math.exp %349 : vector<16x64xf32>
    %cst_55 = arith.constant 1.000000e+00 : f32
    %351 = vector.broadcast %cst_55 : f32 to vector<16x64xf32>
    %352 = arith.addf %351, %350 : vector<16x64xf32>
    %353 = arith.divf %351, %352 : vector<16x64xf32>
    %354 = vector.extract_strided_slice %347 {offsets = [0, 64], sizes = [16, 64], strides = [1, 1]} : vector<16x256xf32> to vector<16x64xf32>
    %355 = arith.negf %354 : vector<16x64xf32>
    %356 = math.exp %355 : vector<16x64xf32>
    %cst_56 = arith.constant 1.000000e+00 : f32
    %357 = vector.broadcast %cst_56 : f32 to vector<16x64xf32>
    %358 = arith.addf %357, %356 : vector<16x64xf32>
    %359 = arith.divf %357, %358 : vector<16x64xf32>
    %360 = vector.extract_strided_slice %347 {offsets = [0, 128], sizes = [16, 64], strides = [1, 1]} : vector<16x256xf32> to vector<16x64xf32>
    %361 = math.tanh %360 : vector<16x64xf32>
    %362 = vector.extract_strided_slice %347 {offsets = [0, 192], sizes = [16, 64], strides = [1, 1]} : vector<16x256xf32> to vector<16x64xf32>
    %363 = arith.negf %362 : vector<16x64xf32>
    %364 = math.exp %363 : vector<16x64xf32>
    %cst_57 = arith.constant 1.000000e+00 : f32
    %365 = vector.broadcast %cst_57 : f32 to vector<16x64xf32>
    %366 = arith.addf %365, %364 : vector<16x64xf32>
    %367 = arith.divf %365, %366 : vector<16x64xf32>
    %368 = arith.mulf %359, %314 : vector<16x64xf32>
    %369 = arith.mulf %353, %361 : vector<16x64xf32>
    %370 = arith.addf %368, %369 : vector<16x64xf32>
    %371 = math.tanh %370 : vector<16x64xf32>
    %372 = arith.mulf %367, %371 : vector<16x64xf32>
    %373 = arith.truncf %344 : vector<16x64xf32> to vector<16x64xbf16>
    %cst_58 = arith.constant dense<0.000000e+00> : vector<16x256xf32>
    %374 = tpu.matmul %373, %116, %cst_58 {dimension_numbers = #tpu.dot_dimension_numbers<[1], [0], [0], [1], [0, 0, 1, 1], [], []>} : vector<16x64xbf16>, vector<64x256xbf16>, vector<16x256xf32> -> vector<16x256xf32>
    %375 = arith.addf %99, %374 : vector<16x256xf32>
    %376 = vector.extract_strided_slice %375 {offsets = [0, 0], sizes = [16, 64], strides = [1, 1]} : vector<16x256xf32> to vector<16x64xf32>
    %377 = arith.negf %376 : vector<16x64xf32>
    %378 = math.exp %377 : vector<16x64xf32>
    %cst_59 = arith.constant 1.000000e+00 : f32
    %379 = vector.broadcast %cst_59 : f32 to vector<16x64xf32>
    %380 = arith.addf %379, %378 : vector<16x64xf32>
    %381 = arith.divf %379, %380 : vector<16x64xf32>
    %382 = vector.extract_strided_slice %375 {offsets = [0, 64], sizes = [16, 64], strides = [1, 1]} : vector<16x256xf32> to vector<16x64xf32>
    %383 = arith.negf %382 : vector<16x64xf32>
    %384 = math.exp %383 : vector<16x64xf32>
    %cst_60 = arith.constant 1.000000e+00 : f32
    %385 = vector.broadcast %cst_60 : f32 to vector<16x64xf32>
    %386 = arith.addf %385, %384 : vector<16x64xf32>
    %387 = arith.divf %385, %386 : vector<16x64xf32>
    %388 = vector.extract_strided_slice %375 {offsets = [0, 128], sizes = [16, 64], strides = [1, 1]} : vector<16x256xf32> to vector<16x64xf32>
    %389 = math.tanh %388 : vector<16x64xf32>
    %390 = vector.extract_strided_slice %375 {offsets = [0, 192], sizes = [16, 64], strides = [1, 1]} : vector<16x256xf32> to vector<16x64xf32>
    %391 = arith.negf %390 : vector<16x64xf32>
    %392 = math.exp %391 : vector<16x64xf32>
    %cst_61 = arith.constant 1.000000e+00 : f32
    %393 = vector.broadcast %cst_61 : f32 to vector<16x64xf32>
    %394 = arith.addf %393, %392 : vector<16x64xf32>
    %395 = arith.divf %393, %394 : vector<16x64xf32>
    %396 = arith.mulf %387, %342 : vector<16x64xf32>
    %397 = arith.mulf %381, %389 : vector<16x64xf32>
    %398 = arith.addf %396, %397 : vector<16x64xf32>
    %399 = math.tanh %398 : vector<16x64xf32>
    %400 = arith.mulf %395, %399 : vector<16x64xf32>
    %401 = arith.truncf %372 : vector<16x64xf32> to vector<16x64xbf16>
    %cst_62 = arith.constant dense<0.000000e+00> : vector<16x256xf32>
    %402 = tpu.matmul %401, %115, %cst_62 {dimension_numbers = #tpu.dot_dimension_numbers<[1], [0], [0], [1], [0, 0, 1, 1], [], []>} : vector<16x64xbf16>, vector<64x256xbf16>, vector<16x256xf32> -> vector<16x256xf32>
    %403 = arith.addf %64, %402 : vector<16x256xf32>
    %404 = vector.extract_strided_slice %403 {offsets = [0, 0], sizes = [16, 64], strides = [1, 1]} : vector<16x256xf32> to vector<16x64xf32>
    %405 = arith.negf %404 : vector<16x64xf32>
    %406 = math.exp %405 : vector<16x64xf32>
    %cst_63 = arith.constant 1.000000e+00 : f32
    %407 = vector.broadcast %cst_63 : f32 to vector<16x64xf32>
    %408 = arith.addf %407, %406 : vector<16x64xf32>
    %409 = arith.divf %407, %408 : vector<16x64xf32>
    %410 = vector.extract_strided_slice %403 {offsets = [0, 64], sizes = [16, 64], strides = [1, 1]} : vector<16x256xf32> to vector<16x64xf32>
    %411 = arith.negf %410 : vector<16x64xf32>
    %412 = math.exp %411 : vector<16x64xf32>
    %cst_64 = arith.constant 1.000000e+00 : f32
    %413 = vector.broadcast %cst_64 : f32 to vector<16x64xf32>
    %414 = arith.addf %413, %412 : vector<16x64xf32>
    %415 = arith.divf %413, %414 : vector<16x64xf32>
    %416 = vector.extract_strided_slice %403 {offsets = [0, 128], sizes = [16, 64], strides = [1, 1]} : vector<16x256xf32> to vector<16x64xf32>
    %417 = math.tanh %416 : vector<16x64xf32>
    %418 = vector.extract_strided_slice %403 {offsets = [0, 192], sizes = [16, 64], strides = [1, 1]} : vector<16x256xf32> to vector<16x64xf32>
    %419 = arith.negf %418 : vector<16x64xf32>
    %420 = math.exp %419 : vector<16x64xf32>
    %cst_65 = arith.constant 1.000000e+00 : f32
    %421 = vector.broadcast %cst_65 : f32 to vector<16x64xf32>
    %422 = arith.addf %421, %420 : vector<16x64xf32>
    %423 = arith.divf %421, %422 : vector<16x64xf32>
    %424 = arith.mulf %415, %370 : vector<16x64xf32>
    %425 = arith.mulf %409, %417 : vector<16x64xf32>
    %426 = arith.addf %424, %425 : vector<16x64xf32>
    %427 = math.tanh %426 : vector<16x64xf32>
    %428 = arith.mulf %423, %427 : vector<16x64xf32>
    %429 = arith.truncf %400 : vector<16x64xf32> to vector<16x64xbf16>
    %cst_66 = arith.constant dense<0.000000e+00> : vector<16x256xf32>
    %430 = tpu.matmul %429, %116, %cst_66 {dimension_numbers = #tpu.dot_dimension_numbers<[1], [0], [0], [1], [0, 0, 1, 1], [], []>} : vector<16x64xbf16>, vector<64x256xbf16>, vector<16x256xf32> -> vector<16x256xf32>
    %431 = arith.addf %104, %430 : vector<16x256xf32>
    %432 = vector.extract_strided_slice %431 {offsets = [0, 0], sizes = [16, 64], strides = [1, 1]} : vector<16x256xf32> to vector<16x64xf32>
    %433 = arith.negf %432 : vector<16x64xf32>
    %434 = math.exp %433 : vector<16x64xf32>
    %cst_67 = arith.constant 1.000000e+00 : f32
    %435 = vector.broadcast %cst_67 : f32 to vector<16x64xf32>
    %436 = arith.addf %435, %434 : vector<16x64xf32>
    %437 = arith.divf %435, %436 : vector<16x64xf32>
    %438 = vector.extract_strided_slice %431 {offsets = [0, 64], sizes = [16, 64], strides = [1, 1]} : vector<16x256xf32> to vector<16x64xf32>
    %439 = arith.negf %438 : vector<16x64xf32>
    %440 = math.exp %439 : vector<16x64xf32>
    %cst_68 = arith.constant 1.000000e+00 : f32
    %441 = vector.broadcast %cst_68 : f32 to vector<16x64xf32>
    %442 = arith.addf %441, %440 : vector<16x64xf32>
    %443 = arith.divf %441, %442 : vector<16x64xf32>
    %444 = vector.extract_strided_slice %431 {offsets = [0, 128], sizes = [16, 64], strides = [1, 1]} : vector<16x256xf32> to vector<16x64xf32>
    %445 = math.tanh %444 : vector<16x64xf32>
    %446 = vector.extract_strided_slice %431 {offsets = [0, 192], sizes = [16, 64], strides = [1, 1]} : vector<16x256xf32> to vector<16x64xf32>
    %447 = arith.negf %446 : vector<16x64xf32>
    %448 = math.exp %447 : vector<16x64xf32>
    %cst_69 = arith.constant 1.000000e+00 : f32
    %449 = vector.broadcast %cst_69 : f32 to vector<16x64xf32>
    %450 = arith.addf %449, %448 : vector<16x64xf32>
    %451 = arith.divf %449, %450 : vector<16x64xf32>
    %452 = arith.mulf %443, %398 : vector<16x64xf32>
    %453 = arith.mulf %437, %445 : vector<16x64xf32>
    %454 = arith.addf %452, %453 : vector<16x64xf32>
    %455 = math.tanh %454 : vector<16x64xf32>
    %456 = arith.mulf %451, %455 : vector<16x64xf32>
    %457 = arith.truncf %428 : vector<16x64xf32> to vector<16x64xbf16>
    %cst_70 = arith.constant dense<0.000000e+00> : vector<16x256xf32>
    %458 = tpu.matmul %457, %115, %cst_70 {dimension_numbers = #tpu.dot_dimension_numbers<[1], [0], [0], [1], [0, 0, 1, 1], [], []>} : vector<16x64xbf16>, vector<64x256xbf16>, vector<16x256xf32> -> vector<16x256xf32>
    %459 = arith.addf %69, %458 : vector<16x256xf32>
    %460 = vector.extract_strided_slice %459 {offsets = [0, 0], sizes = [16, 64], strides = [1, 1]} : vector<16x256xf32> to vector<16x64xf32>
    %461 = arith.negf %460 : vector<16x64xf32>
    %462 = math.exp %461 : vector<16x64xf32>
    %cst_71 = arith.constant 1.000000e+00 : f32
    %463 = vector.broadcast %cst_71 : f32 to vector<16x64xf32>
    %464 = arith.addf %463, %462 : vector<16x64xf32>
    %465 = arith.divf %463, %464 : vector<16x64xf32>
    %466 = vector.extract_strided_slice %459 {offsets = [0, 64], sizes = [16, 64], strides = [1, 1]} : vector<16x256xf32> to vector<16x64xf32>
    %467 = arith.negf %466 : vector<16x64xf32>
    %468 = math.exp %467 : vector<16x64xf32>
    %cst_72 = arith.constant 1.000000e+00 : f32
    %469 = vector.broadcast %cst_72 : f32 to vector<16x64xf32>
    %470 = arith.addf %469, %468 : vector<16x64xf32>
    %471 = arith.divf %469, %470 : vector<16x64xf32>
    %472 = vector.extract_strided_slice %459 {offsets = [0, 128], sizes = [16, 64], strides = [1, 1]} : vector<16x256xf32> to vector<16x64xf32>
    %473 = math.tanh %472 : vector<16x64xf32>
    %474 = vector.extract_strided_slice %459 {offsets = [0, 192], sizes = [16, 64], strides = [1, 1]} : vector<16x256xf32> to vector<16x64xf32>
    %475 = arith.negf %474 : vector<16x64xf32>
    %476 = math.exp %475 : vector<16x64xf32>
    %cst_73 = arith.constant 1.000000e+00 : f32
    %477 = vector.broadcast %cst_73 : f32 to vector<16x64xf32>
    %478 = arith.addf %477, %476 : vector<16x64xf32>
    %479 = arith.divf %477, %478 : vector<16x64xf32>
    %480 = arith.mulf %471, %426 : vector<16x64xf32>
    %481 = arith.mulf %465, %473 : vector<16x64xf32>
    %482 = arith.addf %480, %481 : vector<16x64xf32>
    %483 = math.tanh %482 : vector<16x64xf32>
    %484 = arith.mulf %479, %483 : vector<16x64xf32>
    %485 = arith.truncf %456 : vector<16x64xf32> to vector<16x64xbf16>
    %cst_74 = arith.constant dense<0.000000e+00> : vector<16x256xf32>
    %486 = tpu.matmul %485, %116, %cst_74 {dimension_numbers = #tpu.dot_dimension_numbers<[1], [0], [0], [1], [0, 0, 1, 1], [], []>} : vector<16x64xbf16>, vector<64x256xbf16>, vector<16x256xf32> -> vector<16x256xf32>
    %487 = arith.addf %109, %486 : vector<16x256xf32>
    %488 = vector.extract_strided_slice %487 {offsets = [0, 0], sizes = [16, 64], strides = [1, 1]} : vector<16x256xf32> to vector<16x64xf32>
    %489 = arith.negf %488 : vector<16x64xf32>
    %490 = math.exp %489 : vector<16x64xf32>
    %cst_75 = arith.constant 1.000000e+00 : f32
    %491 = vector.broadcast %cst_75 : f32 to vector<16x64xf32>
    %492 = arith.addf %491, %490 : vector<16x64xf32>
    %493 = arith.divf %491, %492 : vector<16x64xf32>
    %494 = vector.extract_strided_slice %487 {offsets = [0, 64], sizes = [16, 64], strides = [1, 1]} : vector<16x256xf32> to vector<16x64xf32>
    %495 = arith.negf %494 : vector<16x64xf32>
    %496 = math.exp %495 : vector<16x64xf32>
    %cst_76 = arith.constant 1.000000e+00 : f32
    %497 = vector.broadcast %cst_76 : f32 to vector<16x64xf32>
    %498 = arith.addf %497, %496 : vector<16x64xf32>
    %499 = arith.divf %497, %498 : vector<16x64xf32>
    %500 = vector.extract_strided_slice %487 {offsets = [0, 128], sizes = [16, 64], strides = [1, 1]} : vector<16x256xf32> to vector<16x64xf32>
    %501 = math.tanh %500 : vector<16x64xf32>
    %502 = vector.extract_strided_slice %487 {offsets = [0, 192], sizes = [16, 64], strides = [1, 1]} : vector<16x256xf32> to vector<16x64xf32>
    %503 = arith.negf %502 : vector<16x64xf32>
    %504 = math.exp %503 : vector<16x64xf32>
    %cst_77 = arith.constant 1.000000e+00 : f32
    %505 = vector.broadcast %cst_77 : f32 to vector<16x64xf32>
    %506 = arith.addf %505, %504 : vector<16x64xf32>
    %507 = arith.divf %505, %506 : vector<16x64xf32>
    %508 = arith.mulf %499, %454 : vector<16x64xf32>
    %509 = arith.mulf %493, %501 : vector<16x64xf32>
    %510 = arith.addf %508, %509 : vector<16x64xf32>
    %511 = math.tanh %510 : vector<16x64xf32>
    %512 = arith.mulf %507, %511 : vector<16x64xf32>
    %513 = arith.truncf %484 : vector<16x64xf32> to vector<16x64xbf16>
    %cst_78 = arith.constant dense<0.000000e+00> : vector<16x256xf32>
    %514 = tpu.matmul %513, %115, %cst_78 {dimension_numbers = #tpu.dot_dimension_numbers<[1], [0], [0], [1], [0, 0, 1, 1], [], []>} : vector<16x64xbf16>, vector<64x256xbf16>, vector<16x256xf32> -> vector<16x256xf32>
    %515 = arith.addf %74, %514 : vector<16x256xf32>
    %516 = vector.extract_strided_slice %515 {offsets = [0, 0], sizes = [16, 64], strides = [1, 1]} : vector<16x256xf32> to vector<16x64xf32>
    %517 = arith.negf %516 : vector<16x64xf32>
    %518 = math.exp %517 : vector<16x64xf32>
    %cst_79 = arith.constant 1.000000e+00 : f32
    %519 = vector.broadcast %cst_79 : f32 to vector<16x64xf32>
    %520 = arith.addf %519, %518 : vector<16x64xf32>
    %521 = arith.divf %519, %520 : vector<16x64xf32>
    %522 = vector.extract_strided_slice %515 {offsets = [0, 64], sizes = [16, 64], strides = [1, 1]} : vector<16x256xf32> to vector<16x64xf32>
    %523 = arith.negf %522 : vector<16x64xf32>
    %524 = math.exp %523 : vector<16x64xf32>
    %cst_80 = arith.constant 1.000000e+00 : f32
    %525 = vector.broadcast %cst_80 : f32 to vector<16x64xf32>
    %526 = arith.addf %525, %524 : vector<16x64xf32>
    %527 = arith.divf %525, %526 : vector<16x64xf32>
    %528 = vector.extract_strided_slice %515 {offsets = [0, 128], sizes = [16, 64], strides = [1, 1]} : vector<16x256xf32> to vector<16x64xf32>
    %529 = math.tanh %528 : vector<16x64xf32>
    %530 = vector.extract_strided_slice %515 {offsets = [0, 192], sizes = [16, 64], strides = [1, 1]} : vector<16x256xf32> to vector<16x64xf32>
    %531 = arith.negf %530 : vector<16x64xf32>
    %532 = math.exp %531 : vector<16x64xf32>
    %cst_81 = arith.constant 1.000000e+00 : f32
    %533 = vector.broadcast %cst_81 : f32 to vector<16x64xf32>
    %534 = arith.addf %533, %532 : vector<16x64xf32>
    %535 = arith.divf %533, %534 : vector<16x64xf32>
    %536 = arith.mulf %527, %482 : vector<16x64xf32>
    %537 = arith.mulf %521, %529 : vector<16x64xf32>
    %538 = arith.addf %536, %537 : vector<16x64xf32>
    %539 = math.tanh %538 : vector<16x64xf32>
    %540 = arith.mulf %535, %539 : vector<16x64xf32>
    %541 = arith.truncf %512 : vector<16x64xf32> to vector<16x64xbf16>
    %cst_82 = arith.constant dense<0.000000e+00> : vector<16x256xf32>
    %542 = tpu.matmul %541, %116, %cst_82 {dimension_numbers = #tpu.dot_dimension_numbers<[1], [0], [0], [1], [0, 0, 1, 1], [], []>} : vector<16x64xbf16>, vector<64x256xbf16>, vector<16x256xf32> -> vector<16x256xf32>
    %543 = arith.addf %114, %542 : vector<16x256xf32>
    %544 = vector.extract_strided_slice %543 {offsets = [0, 0], sizes = [16, 64], strides = [1, 1]} : vector<16x256xf32> to vector<16x64xf32>
    %545 = arith.negf %544 : vector<16x64xf32>
    %546 = math.exp %545 : vector<16x64xf32>
    %cst_83 = arith.constant 1.000000e+00 : f32
    %547 = vector.broadcast %cst_83 : f32 to vector<16x64xf32>
    %548 = arith.addf %547, %546 : vector<16x64xf32>
    %549 = arith.divf %547, %548 : vector<16x64xf32>
    %550 = vector.extract_strided_slice %543 {offsets = [0, 64], sizes = [16, 64], strides = [1, 1]} : vector<16x256xf32> to vector<16x64xf32>
    %551 = arith.negf %550 : vector<16x64xf32>
    %552 = math.exp %551 : vector<16x64xf32>
    %cst_84 = arith.constant 1.000000e+00 : f32
    %553 = vector.broadcast %cst_84 : f32 to vector<16x64xf32>
    %554 = arith.addf %553, %552 : vector<16x64xf32>
    %555 = arith.divf %553, %554 : vector<16x64xf32>
    %556 = vector.extract_strided_slice %543 {offsets = [0, 128], sizes = [16, 64], strides = [1, 1]} : vector<16x256xf32> to vector<16x64xf32>
    %557 = math.tanh %556 : vector<16x64xf32>
    %558 = vector.extract_strided_slice %543 {offsets = [0, 192], sizes = [16, 64], strides = [1, 1]} : vector<16x256xf32> to vector<16x64xf32>
    %559 = arith.negf %558 : vector<16x64xf32>
    %560 = math.exp %559 : vector<16x64xf32>
    %cst_85 = arith.constant 1.000000e+00 : f32
    %561 = vector.broadcast %cst_85 : f32 to vector<16x64xf32>
    %562 = arith.addf %561, %560 : vector<16x64xf32>
    %563 = arith.divf %561, %562 : vector<16x64xf32>
    %564 = arith.mulf %555, %510 : vector<16x64xf32>
    %565 = arith.mulf %549, %557 : vector<16x64xf32>
    %566 = arith.addf %564, %565 : vector<16x64xf32>
    %567 = math.tanh %566 : vector<16x64xf32>
    %568 = arith.mulf %563, %567 : vector<16x64xf32>
    %569 = arith.truncf %540 : vector<16x64xf32> to vector<16x64xbf16>
    %c0_86 = arith.constant 0 : index
    %c0_87 = arith.constant 0 : index
    %570 = vector.load %arg8[%c0_86, %c0_87] : memref<64x128xbf16, #tpu.memory_space<vmem>>, vector<64x128xbf16>
    %cst_88 = arith.constant dense<0.000000e+00> : vector<16x128xf32>
    %571 = tpu.matmul %569, %570, %cst_88 {dimension_numbers = #tpu.dot_dimension_numbers<[1], [0], [0], [1], [0, 0, 1, 1], [], []>} : vector<16x64xbf16>, vector<64x128xbf16>, vector<16x128xf32> -> vector<16x128xf32>
    %572 = arith.truncf %568 : vector<16x64xf32> to vector<16x64xbf16>
    %c0_89 = arith.constant 0 : index
    %c0_90 = arith.constant 0 : index
    %573 = vector.load %arg9[%c0_89, %c0_90] : memref<64x128xbf16, #tpu.memory_space<vmem>>, vector<64x128xbf16>
    %cst_91 = arith.constant dense<0.000000e+00> : vector<16x128xf32>
    %574 = tpu.matmul %572, %573, %cst_91 {dimension_numbers = #tpu.dot_dimension_numbers<[1], [0], [0], [1], [0, 0, 1, 1], [], []>} : vector<16x64xbf16>, vector<64x128xbf16>, vector<16x128xf32> -> vector<16x128xf32>
    %575 = arith.addf %571, %574 : vector<16x128xf32>
    %c0_92 = arith.constant 0 : index
    %c0_93 = arith.constant 0 : index
    %576 = vector.load %arg10[%c0_92, %c0_93] : memref<1x128xf32, #tpu.memory_space<vmem>>, vector<1x128xf32>
    %577 = vector.broadcast %576 : vector<1x128xf32> to vector<16x128xf32>
    %578 = arith.addf %575, %577 : vector<16x128xf32>
    %cst_94 = arith.constant 0.000000e+00 : f32
    %579 = vector.broadcast %cst_94 : f32 to vector<16x128xf32>
    %580 = arith.cmpf oge, %578, %579 : vector<16x128xf32>
    %cst_95 = arith.constant 0.00999999977 : f32
    %581 = vector.broadcast %cst_95 : f32 to vector<16x128xf32>
    %582 = arith.mulf %581, %578 : vector<16x128xf32>
    %583 = arith.select %580, %578, %582 : vector<16x128xi1>, vector<16x128xf32>
    %584 = arith.truncf %583 : vector<16x128xf32> to vector<16x128xbf16>
    %c0_96 = arith.constant 0 : index
    %c0_97 = arith.constant 0 : index
    %585 = vector.load %arg11[%c0_96, %c0_97] : memref<128x64xbf16, #tpu.memory_space<vmem>>, vector<128x64xbf16>
    %cst_98 = arith.constant dense<0.000000e+00> : vector<16x64xf32>
    %586 = tpu.matmul %584, %585, %cst_98 {dimension_numbers = #tpu.dot_dimension_numbers<[1], [0], [0], [1], [0, 0, 1, 1], [], []>} : vector<16x128xbf16>, vector<128x64xbf16>, vector<16x64xf32> -> vector<16x64xf32>
    %c0_99 = arith.constant 0 : index
    %c0_100 = arith.constant 0 : index
    %587 = vector.load %arg12[%c0_99, %c0_100] : memref<1x64xf32, #tpu.memory_space<vmem>>, vector<1x64xf32>
    %588 = vector.broadcast %587 : vector<1x64xf32> to vector<16x64xf32>
    %589 = arith.addf %586, %588 : vector<16x64xf32>
    %590 = math.tanh %589 : vector<16x64xf32>
    %591 = arith.truncf %590 : vector<16x64xf32> to vector<16x64xbf16>
    %c0_101 = arith.constant 0 : index
    %c0_102 = arith.constant 0 : index
    %592 = vector.load %arg13[%c0_101, %c0_102] : memref<64x128xbf16, #tpu.memory_space<vmem>>, vector<64x128xbf16>
    %cst_103 = arith.constant dense<0.000000e+00> : vector<16x128xf32>
    %593 = tpu.matmul %591, %592, %cst_103 {dimension_numbers = #tpu.dot_dimension_numbers<[1], [0], [0], [1], [0, 0, 1, 1], [], []>} : vector<16x64xbf16>, vector<64x128xbf16>, vector<16x128xf32> -> vector<16x128xf32>
    %c0_104 = arith.constant 0 : index
    %c0_105 = arith.constant 0 : index
    %594 = vector.load %arg14[%c0_104, %c0_105] : memref<1x128xf32, #tpu.memory_space<vmem>>, vector<1x128xf32>
    %595 = vector.broadcast %594 : vector<1x128xf32> to vector<16x128xf32>
    %596 = arith.addf %593, %595 : vector<16x128xf32>
    %cst_106 = arith.constant 0.000000e+00 : f32
    %597 = vector.broadcast %cst_106 : f32 to vector<16x128xf32>
    %598 = arith.cmpf oge, %596, %597 : vector<16x128xf32>
    %cst_107 = arith.constant 0.00999999977 : f32
    %599 = vector.broadcast %cst_107 : f32 to vector<16x128xf32>
    %600 = arith.mulf %599, %596 : vector<16x128xf32>
    %601 = arith.select %598, %596, %600 : vector<16x128xi1>, vector<16x128xf32>
    %c0_108 = arith.constant 0 : index
    %c0_109 = arith.constant 0 : index
    %602 = vector.load %arg15[%c0_108, %c0_109] : memref<16x128xf32, #tpu.memory_space<vmem>>, vector<16x128xf32>
    tpu.vector_store %arg15[%c0_108, %c0_109], %601 {strides = array<i32>} : memref<16x128xf32, #tpu.memory_space<vmem>>, vector<16x128xf32>,
    return
  }
  func.func @transform_0(%arg0: i32) -> (i32, i32, i32) {
    %c0_i32 = arith.constant 0 : i32
    %c0_i32_0 = arith.constant 0 : i32
    %c0_i32_1 = arith.constant 0 : i32
    return %c0_i32, %arg0, %c0_i32_0 : i32, i32, i32
  }
  func.func @transform_1(%arg0: i32) -> (i32, i32) {
    %c0_i32 = arith.constant 0 : i32
    %c0_i32_0 = arith.constant 0 : i32
    %c0_i32_1 = arith.constant 0 : i32
    return %c0_i32, %c0_i32_0 : i32, i32
  }
  func.func @transform_2(%arg0: i32) -> (i32, i32) {
    %c0_i32 = arith.constant 0 : i32
    %c0_i32_0 = arith.constant 0 : i32
    %c0_i32_1 = arith.constant 0 : i32
    return %c0_i32, %c0_i32_0 : i32, i32
  }
  func.func @transform_3(%arg0: i32) -> (i32, i32) {
    %c0_i32 = arith.constant 0 : i32
    %c0_i32_0 = arith.constant 0 : i32
    %c0_i32_1 = arith.constant 0 : i32
    return %c0_i32, %c0_i32_0 : i32, i32
  }
  func.func @transform_4(%arg0: i32) -> (i32, i32) {
    %c0_i32 = arith.constant 0 : i32
    %c0_i32_0 = arith.constant 0 : i32
    %c0_i32_1 = arith.constant 0 : i32
    return %c0_i32, %c0_i32_0 : i32, i32
  }
  func.func @transform_5(%arg0: i32) -> (i32, i32) {
    %c0_i32 = arith.constant 0 : i32
    %c0_i32_0 = arith.constant 0 : i32
    %c0_i32_1 = arith.constant 0 : i32
    return %c0_i32, %c0_i32_0 : i32, i32
  }
  func.func @transform_6(%arg0: i32) -> (i32, i32) {
    %c0_i32 = arith.constant 0 : i32
    %c0_i32_0 = arith.constant 0 : i32
    %c0_i32_1 = arith.constant 0 : i32
    return %c0_i32, %c0_i32_0 : i32, i32
  }
  func.func @transform_7(%arg0: i32) -> (i32, i32) {
    %c0_i32 = arith.constant 0 : i32
    %c0_i32_0 = arith.constant 0 : i32
    %c0_i32_1 = arith.constant 0 : i32
    return %c0_i32, %c0_i32_0 : i32, i32
  }
  func.func @transform_8(%arg0: i32) -> (i32, i32) {
    %c0_i32 = arith.constant 0 : i32
    %c0_i32_0 = arith.constant 0 : i32
    %c0_i32_1 = arith.constant 0 : i32
    return %c0_i32, %c0_i32_0 : i32, i32
  }
  func.func @transform_9(%arg0: i32) -> (i32, i32) {
    %c0_i32 = arith.constant 0 : i32
    %c0_i32_0 = arith.constant 0 : i32
    %c0_i32_1 = arith.constant 0 : i32
    return %c0_i32, %c0_i32_0 : i32, i32
  }
  func.func @transform_10(%arg0: i32) -> (i32, i32) {
    %c0_i32 = arith.constant 0 : i32
    %c0_i32_0 = arith.constant 0 : i32
    %c0_i32_1 = arith.constant 0 : i32
    return %c0_i32, %c0_i32_0 : i32, i32
  }
  func.func @transform_11(%arg0: i32) -> (i32, i32) {
    %c0_i32 = arith.constant 0 : i32
    %c0_i32_0 = arith.constant 0 : i32
    %c0_i32_1 = arith.constant 0 : i32
    return %c0_i32, %c0_i32_0 : i32, i32
  }
  func.func @transform_12(%arg0: i32) -> (i32, i32) {
    %c0_i32 = arith.constant 0 : i32
    %c0_i32_0 = arith.constant 0 : i32
    %c0_i32_1 = arith.constant 0 : i32
    return %c0_i32, %c0_i32_0 : i32, i32
  }
  func.func @transform_13(%arg0: i32) -> (i32, i32) {
    %c0_i32 = arith.constant 0 : i32
    %c0_i32_0 = arith.constant 0 : i32
    %c0_i32_1 = arith.constant 0 : i32
    return %c0_i32, %c0_i32_0 : i32, i32
  }
  func.func @transform_14(%arg0: i32) -> (i32, i32) {
    %c0_i32 = arith.constant 0 : i32
    %c0_i32_0 = arith.constant 0 : i32
    return %arg0, %c0_i32 : i32, i32
  }
}

</mosaic_0001>

<llo_original>
// kernel: combine_late_forward.1
$region0: #{combine_late_forward.1}
  #allocation0 [shape = 'u32[]', space=smem, size = 0x4, offset = 0x4, fixed_abs, tag = 'smem constant byte address 0x4 - core index']
  #allocation1 [shape = 'u32[72,128]{1,0:T(1,128)}', space=vmem, size = 0x9000, scoped, tag = 'internal scratch']
  %s0 = inlined_call_operand.vmem [shape: bf16[8,16,1408], index: 0, kind: input, shape index: {}]
  %s1 = inlined_call_operand.hbm [shape: bf16[1280,256], index: 1, kind: input, shape index: {}]
  %s2 = inlined_call_operand.vmem [shape: bf16[128,256], index: 2, kind: input, shape index: {}]
  %s3 = inlined_call_operand.vmem [shape: f32[1,256], index: 3, kind: input, shape index: {}]
  %s4 = inlined_call_operand.vmem [shape: f32[1,256], index: 4, kind: input, shape index: {}]
  %s5 = inlined_call_operand.vmem [shape: bf16[64,256], index: 5, kind: input, shape index: {}]
  %s6 = inlined_call_operand.vmem [shape: bf16[64,256], index: 6, kind: input, shape index: {}]
  %s7 = inlined_call_operand.vmem [shape: bf16[64,128], index: 7, kind: input, shape index: {}]
  %s8 = inlined_call_operand.vmem [shape: bf16[64,128], index: 8, kind: input, shape index: {}]
  %s9 = inlined_call_operand.vmem [shape: f32[1,128], index: 9, kind: input, shape index: {}]
  %s10 = inlined_call_operand.vmem [shape: bf16[128,64], index: 10, kind: input, shape index: {}]
  %s11 = inlined_call_operand.vmem [shape: f32[1,64], index: 11, kind: input, shape index: {}]
  %s12 = inlined_call_operand.vmem [shape: bf16[64,128], index: 12, kind: input, shape index: {}]
  %s13 = inlined_call_operand.vmem [shape: f32[1,128], index: 13, kind: input, shape index: {}]
  %s14 = inlined_call_operand.vmem [shape: f32[16,128], index: 14, kind: output, shape index: {}]
  %s15 = sld [smem:[#allocation0]]
  $region70: #{combine_late_forward.1} parent=0
    _
  %s17 = ssub.s32 1, %s15
  %s18 = scalar_select 0, %s17, %s15
  $region1: #{combine_late_forward.1} parent=0
    #allocation2 [shape = 'u8[655360]{0}', space=vmem, size = 0xa0000, scoped, tag = 'input window, operand 1, single buffered']
    #allocation3 [shape = 's32[1]{0}', space=sflag, size = 0x4, scoped, tag = 'scoped memory for combine_late_forward.1']
    %19 = vsyncpa [#allocation3], 0
    // Predicated region
    $region2: #{combine_late_forward.1} parent=1 // pred_check
      _
    $region3: #{combine_late_forward.1} parent=1 // pred_check_branch
      %21 = sbr.rel (0) target = $region5
    $region4: #{combine_late_forward.1} parent=1 // pred_region
      _
    $region5: #{combine_late_forward.1} parent=1 // pred_fallthru
      _
    // Predicated region
    $region6: #{combine_late_forward.1} parent=1 // pred_check
      _
    $region7: #{combine_late_forward.1} parent=1 // pred_check_branch
      %23 = sbr.rel (0) target = $region9
    $region8: #{combine_late_forward.1} parent=1 // pred_region
      %25 = vsyncadd [#allocation3], 0
      %s26 = sshll.u32 %s1, 4
      %s27 = int_to_ptr.hbm [resolvable:$true] %s26
      %s28 = sshll.u32 [#allocation2], 4
      %s29 = int_to_ptr.vmem [resolvable:$true] %s28
      %34 = dma.hbm_to_vmem [thread:$0]  %s27, 20480, %s29, [#allocation3], 128, 128, 8
    $region9: #{combine_late_forward.1} parent=1 // pred_fallthru
      _
    // Predicated region
    $region10: #{combine_late_forward.1} parent=1 // pred_check
      _
    $region11: #{combine_late_forward.1} parent=1 // pred_check_branch
      %36 = sbr.rel (0) target = $region13
    $region12: #{combine_late_forward.1} parent=1 // pred_region
      _
    $region13: #{combine_late_forward.1} parent=1 // pred_fallthru
      _
    // Predicated region
    $region14: #{combine_late_forward.1} parent=1 // pred_check
      _
    $region15: #{combine_late_forward.1} parent=1 // pred_check_branch
      %38 = sbr.rel (0) target = $region17
    $region16: #{combine_late_forward.1} parent=1 // pred_region
      _
    $region17: #{combine_late_forward.1} parent=1 // pred_fallthru
      _
    // Predicated region
    $region18: #{combine_late_forward.1} parent=1 // pred_check
      _
    $region19: #{combine_late_forward.1} parent=1 // pred_check_branch
      %40 = sbr.rel (0) target = $region21
    $region20: #{combine_late_forward.1} parent=1 // pred_region
      _
    $region21: #{combine_late_forward.1} parent=1 // pred_fallthru
      _
    // Predicated region
    $region22: #{combine_late_forward.1} parent=1 // pred_check
      _
    $region23: #{combine_late_forward.1} parent=1 // pred_check_branch
      %42 = sbr.rel (0) target = $region25
    $region24: #{combine_late_forward.1} parent=1 // pred_region
      _
    $region25: #{combine_late_forward.1} parent=1 // pred_fallthru
      _
    // Predicated region
    $region26: #{combine_late_forward.1} parent=1 // pred_check
      _
    $region27: #{combine_late_forward.1} parent=1 // pred_check_branch
      %44 = sbr.rel (0) target = $region29
    $region28: #{combine_late_forward.1} parent=1 // pred_region
      _
    $region29: #{combine_late_forward.1} parent=1 // pred_fallthru
      _
    // Predicated region
    $region30: #{combine_late_forward.1} parent=1 // pred_check
      _
    $region31: #{combine_late_forward.1} parent=1 // pred_check_branch
      %46 = sbr.rel (0) target = $region33
    $region32: #{combine_late_forward.1} parent=1 // pred_region
      _
    $region33: #{combine_late_forward.1} parent=1 // pred_fallthru
      _
    // Predicated region
    $region34: #{combine_late_forward.1} parent=1 // pred_check
      _
    $region35: #{combine_late_forward.1} parent=1 // pred_check_branch
      %48 = sbr.rel (0) target = $region37
    $region36: #{combine_late_forward.1} parent=1 // pred_region
      _
    $region37: #{combine_late_forward.1} parent=1 // pred_fallthru
      _
    // Predicated region
    $region38: #{combine_late_forward.1} parent=1 // pred_check
      _
    $region39: #{combine_late_forward.1} parent=1 // pred_check_branch
      %50 = sbr.rel (0) target = $region41
    $region40: #{combine_late_forward.1} parent=1 // pred_region
      _
    $region41: #{combine_late_forward.1} parent=1 // pred_fallthru
      _
    // Predicated region
    $region42: #{combine_late_forward.1} parent=1 // pred_check
      _
    $region43: #{combine_late_forward.1} parent=1 // pred_check_branch
      %52 = sbr.rel (0) target = $region45
    $region44: #{combine_late_forward.1} parent=1 // pred_region
      _
    $region45: #{combine_late_forward.1} parent=1 // pred_fallthru
      _
    // Predicated region
    $region46: #{combine_late_forward.1} parent=1 // pred_check
      _
    $region47: #{combine_late_forward.1} parent=1 // pred_check_branch
      %54 = sbr.rel (0) target = $region49
    $region48: #{combine_late_forward.1} parent=1 // pred_region
      _
    $region49: #{combine_late_forward.1} parent=1 // pred_fallthru
      _
    // Predicated region
    $region50: #{combine_late_forward.1} parent=1 // pred_check
      _
    $region51: #{combine_late_forward.1} parent=1 // pred_check_branch
      %56 = sbr.rel (0) target = $region53
    $region52: #{combine_late_forward.1} parent=1 // pred_region
      _
    $region53: #{combine_late_forward.1} parent=1 // pred_fallthru
      _
    // Predicated region
    $region54: #{combine_late_forward.1} parent=1 // pred_check
      _
    $region55: #{combine_late_forward.1} parent=1 // pred_check_branch
      %58 = sbr.rel (0) target = $region57
    $region56: #{combine_late_forward.1} parent=1 // pred_region
      _
    $region57: #{combine_late_forward.1} parent=1 // pred_fallthru
      _
    // Predicated region
    $region58: #{combine_late_forward.1} parent=1 // pred_check
      _
    $region59: #{combine_late_forward.1} parent=1 // pred_check_branch
      %60 = sbr.rel (0) target = $region61
    $region60: #{combine_late_forward.1} parent=1 // pred_region
      %62 = dma.done [#allocation3], 20480
    $region61: #{combine_late_forward.1} parent=1 // pred_fallthru
      _
    %v64 = vld [vmem:[%s0] sm:$0xff]
    %v65 = vld [vmem:[%s0 + $0x8] sm:$0xff]
    %v66 = vld [vmem:[%s0 + $0x10] sm:$0xff]
    %v67 = vld [vmem:[%s0 + $0x18] sm:$0xff]
    %v68 = vld [vmem:[%s0 + $0x20] sm:$0xff]
    %v69 = vld [vmem:[%s0 + $0x28] sm:$0xf]
    %v70 = vld [vmem:[%s0 + $0x2c] sm:$0xff]
    %v71 = vld [vmem:[%s0 + $0x34] sm:$0xff]
    %v72 = vld [vmem:[%s0 + $0x3c] sm:$0xff]
    %v73 = vld [vmem:[%s0 + $0x44] sm:$0xff]
    %v74 = vld [vmem:[%s0 + $0x4c] sm:$0xff]
    %v75 = vld [vmem:[%s0 + $0x54] sm:$0xf]
    %v76 = vld [vmem:[%s0 + $0x58] sm:$0xff]
    %v77 = vld [vmem:[%s0 + $0x60] sm:$0xff]
    %v78 = vld [vmem:[%s0 + $0x68] sm:$0xff]
    %v79 = vld [vmem:[%s0 + $0x70] sm:$0xff]
    %v80 = vld [vmem:[%s0 + $0x78] sm:$0xff]
    %v81 = vld [vmem:[%s0 + $0x80] sm:$0xf]
    %v82 = vld [vmem:[%s0 + $0x84] sm:$0xff]
    %v83 = vld [vmem:[%s0 + $0x8c] sm:$0xff]
    %v84 = vld [vmem:[%s0 + $0x94] sm:$0xff]
    %v85 = vld [vmem:[%s0 + $0x9c] sm:$0xff]
    %v86 = vld [vmem:[%s0 + $0xa4] sm:$0xff]
    %v87 = vld [vmem:[%s0 + $0xac] sm:$0xf]
    %v88 = vld [vmem:[%s0 + $0xb0] sm:$0xff]
    %v89 = vld [vmem:[%s0 + $0xb8] sm:$0xff]
    %v90 = vld [vmem:[%s0 + $0xc0] sm:$0xff]
    %v91 = vld [vmem:[%s0 + $0xc8] sm:$0xff]
    %v92 = vld [vmem:[%s0 + $0xd0] sm:$0xff]
    %v93 = vld [vmem:[%s0 + $0xd8] sm:$0xf]
    %v94 = vld [vmem:[%s0 + $0xdc] sm:$0xff]
    %v95 = vld [vmem:[%s0 + $0xe4] sm:$0xff]
    %v96 = vld [vmem:[%s0 + $0xec] sm:$0xff]
    %v97 = vld [vmem:[%s0 + $0xf4] sm:$0xff]
    %v98 = vld [vmem:[%s0 + $0xfc] sm:$0xff]
    %v99 = vld [vmem:[%s0 + $0x104] sm:$0xf]
    %v100 = vld [vmem:[%s0 + $0x108] sm:$0xff]
    %v101 = vld [vmem:[%s0 + $0x110] sm:$0xff]
    %v102 = vld [vmem:[%s0 + $0x118] sm:$0xff]
    %v103 = vld [vmem:[%s0 + $0x120] sm:$0xff]
    %v104 = vld [vmem:[%s0 + $0x128] sm:$0xff]
    %v105 = vld [vmem:[%s0 + $0x130] sm:$0xf]
    %v106 = vld [vmem:[%s0 + $0x134] sm:$0xff]
    %v107 = vld [vmem:[%s0 + $0x13c] sm:$0xff]
    %v108 = vld [vmem:[%s0 + $0x144] sm:$0xff]
    %v109 = vld [vmem:[%s0 + $0x14c] sm:$0xff]
    %v110 = vld [vmem:[%s0 + $0x154] sm:$0xff]
    %v111 = vld [vmem:[%s0 + $0x15c] sm:$0xf]
    %v112 = vld [vmem:[%s0 + $0x160] sm:$0xff]
    %v113 = vld [vmem:[%s0 + $0x168] sm:$0xff]
    %v114 = vld [vmem:[%s0 + $0x170] sm:$0xff]
    %v115 = vld [vmem:[%s0 + $0x178] sm:$0xff]
    %v116 = vld [vmem:[%s0 + $0x180] sm:$0xff]
    %v117 = vld [vmem:[%s0 + $0x188] sm:$0xf]
    %v118 = vld [vmem:[%s0 + $0x18c] sm:$0xff]
    %v119 = vld [vmem:[%s0 + $0x194] sm:$0xff]
    %v120 = vld [vmem:[%s0 + $0x19c] sm:$0xff]
    %v121 = vld [vmem:[%s0 + $0x1a4] sm:$0xff]
    %v122 = vld [vmem:[%s0 + $0x1ac] sm:$0xff]
    %v123 = vld [vmem:[%s0 + $0x1b4] sm:$0xf]
    %v124 = vld [vmem:[%s0 + $0x1b8] sm:$0xff]
    %v125 = vld [vmem:[%s0 + $0x1c0] sm:$0xff]
    %v126 = vld [vmem:[%s0 + $0x1c8] sm:$0xff]
    %v127 = vld [vmem:[%s0 + $0x1d0] sm:$0xff]
    %v128 = vld [vmem:[%s0 + $0x1d8] sm:$0xff]
    %v129 = vld [vmem:[%s0 + $0x1e0] sm:$0xf]
    %v130 = vld [vmem:[%s0 + $0x1e4] sm:$0xff]
    %v131 = vld [vmem:[%s0 + $0x1ec] sm:$0xff]
    %v132 = vld [vmem:[%s0 + $0x1f4] sm:$0xff]
    %v133 = vld [vmem:[%s0 + $0x1fc] sm:$0xff]
    %v134 = vld [vmem:[%s0 + $0x204] sm:$0xff]
    %v135 = vld [vmem:[%s0 + $0x20c] sm:$0xf]
    %v136 = vld [vmem:[%s0 + $0x210] sm:$0xff]
    %v137 = vld [vmem:[%s0 + $0x218] sm:$0xff]
    %v138 = vld [vmem:[%s0 + $0x220] sm:$0xff]
    %v139 = vld [vmem:[%s0 + $0x228] sm:$0xff]
    %v140 = vld [vmem:[%s0 + $0x230] sm:$0xff]
    %v141 = vld [vmem:[%s0 + $0x238] sm:$0xf]
    %v142 = vld [vmem:[%s0 + $0x23c] sm:$0xff]
    %v143 = vld [vmem:[%s0 + $0x244] sm:$0xff]
    %v144 = vld [vmem:[%s0 + $0x24c] sm:$0xff]
    %v145 = vld [vmem:[%s0 + $0x254] sm:$0xff]
    %v146 = vld [vmem:[%s0 + $0x25c] sm:$0xff]
    %v147 = vld [vmem:[%s0 + $0x264] sm:$0xf]
    %v148 = vld [vmem:[%s0 + $0x268] sm:$0xff]
    %v149 = vld [vmem:[%s0 + $0x270] sm:$0xff]
    %v150 = vld [vmem:[%s0 + $0x278] sm:$0xff]
    %v151 = vld [vmem:[%s0 + $0x280] sm:$0xff]
    %v152 = vld [vmem:[%s0 + $0x288] sm:$0xff]
    %v153 = vld [vmem:[%s0 + $0x290] sm:$0xf]
    %v154 = vld [vmem:[%s0 + $0x294] sm:$0xff]
    %v155 = vld [vmem:[%s0 + $0x29c] sm:$0xff]
    %v156 = vld [vmem:[%s0 + $0x2a4] sm:$0xff]
    %v157 = vld [vmem:[%s0 + $0x2ac] sm:$0xff]
    %v158 = vld [vmem:[%s0 + $0x2b4] sm:$0xff]
    %v159 = vld [vmem:[%s0 + $0x2bc] sm:$0xf]
    %v160 = vld [vmem:[#allocation2] sm:$0xff]
    %v161 = vld [vmem:[#allocation2 + $0x8] sm:$0xff]
    %v162 = vld [vmem:[#allocation2 + $0x10] sm:$0xff]
    %v163 = vld [vmem:[#allocation2 + $0x18] sm:$0xff]
    %v164 = vld [vmem:[#allocation2 + $0x20] sm:$0xff]
    %v165 = vld [vmem:[#allocation2 + $0x28] sm:$0xff]
    %v166 = vld [vmem:[#allocation2 + $0x30] sm:$0xff]
    %v167 = vld [vmem:[#allocation2 + $0x38] sm:$0xff]
    %v168 = vld [vmem:[#allocation2 + $0x40] sm:$0xff]
    %v169 = vld [vmem:[#allocation2 + $0x48] sm:$0xff]
    %v170 = vld [vmem:[#allocation2 + $0x50] sm:$0xff]
    %v171 = vld [vmem:[#allocation2 + $0x58] sm:$0xff]
    %v172 = vld [vmem:[#allocation2 + $0x60] sm:$0xff]
    %v173 = vld [vmem:[#allocation2 + $0x68] sm:$0xff]
    %v174 = vld [vmem:[#allocation2 + $0x70] sm:$0xff]
    %v175 = vld [vmem:[#allocation2 + $0x78] sm:$0xff]
    %v176 = vld [vmem:[#allocation2 + $0x80] sm:$0xff]
    %v177 = vld [vmem:[#allocation2 + $0x88] sm:$0xff]
    %v178 = vld [vmem:[#allocation2 + $0x90] sm:$0xff]
    %v179 = vld [vmem:[#allocation2 + $0x98] sm:$0xff]
    %v180 = vld [vmem:[#allocation2 + $0xa0] sm:$0xff]
    %v181 = vld [vmem:[#allocation2 + $0xa8] sm:$0xff]
    %v182 = vld [vmem:[#allocation2 + $0xb0] sm:$0xff]
    %v183 = vld [vmem:[#allocation2 + $0xb8] sm:$0xff]
    %v184 = vld [vmem:[#allocation2 + $0xc0] sm:$0xff]
    %v185 = vld [vmem:[#allocation2 + $0xc8] sm:$0xff]
    %v186 = vld [vmem:[#allocation2 + $0xd0] sm:$0xff]
    %v187 = vld [vmem:[#allocation2 + $0xd8] sm:$0xff]
    %v188 = vld [vmem:[#allocation2 + $0xe0] sm:$0xff]
    %v189 = vld [vmem:[#allocation2 + $0xe8] sm:$0xff]
    %v190 = vld [vmem:[#allocation2 + $0xf0] sm:$0xff]
    %v191 = vld [vmem:[#allocation2 + $0xf8] sm:$0xff]
    %v192 = vld [vmem:[#allocation2 + $0x100] sm:$0xff]
    %v193 = vld [vmem:[#allocation2 + $0x108] sm:$0xff]
    %v194 = vld [vmem:[#allocation2 + $0x110] sm:$0xff]
    %v195 = vld [vmem:[#allocation2 + $0x118] sm:$0xff]
    %v196 = vld [vmem:[#allocation2 + $0x120] sm:$0xff]
    %v197 = vld [vmem:[#allocation2 + $0x128] sm:$0xff]
    %v198 = vld [vmem:[#allocation2 + $0x130] sm:$0xff]
    %v199 = vld [vmem:[#allocation2 + $0x138] sm:$0xff]
    %v200 = vld [vmem:[#allocation2 + $0x140] sm:$0xff]
    %v201 = vld [vmem:[#allocation2 + $0x148] sm:$0xff]
    %v202 = vld [vmem:[#allocation2 + $0x150] sm:$0xff]
    %v203 = vld [vmem:[#allocation2 + $0x158] sm:$0xff]
    %v204 = vld [vmem:[#allocation2 + $0x160] sm:$0xff]
    %v205 = vld [vmem:[#allocation2 + $0x168] sm:$0xff]
    %v206 = vld [vmem:[#allocation2 + $0x170] sm:$0xff]
    %v207 = vld [vmem:[#allocation2 + $0x178] sm:$0xff]
    %v208 = vld [vmem:[#allocation2 + $0x180] sm:$0xff]
    %v209 = vld [vmem:[#allocation2 + $0x188] sm:$0xff]
    %v210 = vld [vmem:[#allocation2 + $0x190] sm:$0xff]
    %v211 = vld [vmem:[#allocation2 + $0x198] sm:$0xff]
    %v212 = vld [vmem:[#allocation2 + $0x1a0] sm:$0xff]
    %v213 = vld [vmem:[#allocation2 + $0x1a8] sm:$0xff]
    %v214 = vld [vmem:[#allocation2 + $0x1b0] sm:$0xff]
    %v215 = vld [vmem:[#allocation2 + $0x1b8] sm:$0xff]
    %v216 = vld [vmem:[#allocation2 + $0x1c0] sm:$0xff]
    %v217 = vld [vmem:[#allocation2 + $0x1c8] sm:$0xff]
    %v218 = vld [vmem:[#allocation2 + $0x1d0] sm:$0xff]
    %v219 = vld [vmem:[#allocation2 + $0x1d8] sm:$0xff]
    %v220 = vld [vmem:[#allocation2 + $0x1e0] sm:$0xff]
    %v221 = vld [vmem:[#allocation2 + $0x1e8] sm:$0xff]
    %v222 = vld [vmem:[#allocation2 + $0x1f0] sm:$0xff]
    %v223 = vld [vmem:[#allocation2 + $0x1f8] sm:$0xff]
    %v224 = vld [vmem:[#allocation2 + $0x200] sm:$0xff]
    %v225 = vld [vmem:[#allocation2 + $0x208] sm:$0xff]
    %v226 = vld [vmem:[#allocation2 + $0x210] sm:$0xff]
    %v227 = vld [vmem:[#allocation2 + $0x218] sm:$0xff]
    %v228 = vld [vmem:[#allocation2 + $0x220] sm:$0xff]
    %v229 = vld [vmem:[#allocation2 + $0x228] sm:$0xff]
    %v230 = vld [vmem:[#allocation2 + $0x230] sm:$0xff]
    %v231 = vld [vmem:[#allocation2 + $0x238] sm:$0xff]
    %v232 = vld [vmem:[#allocation2 + $0x240] sm:$0xff]
    %v233 = vld [vmem:[#allocation2 + $0x248] sm:$0xff]
    %v234 = vld [vmem:[#allocation2 + $0x250] sm:$0xff]
    %v235 = vld [vmem:[#allocation2 + $0x258] sm:$0xff]
    %v236 = vld [vmem:[#allocation2 + $0x260] sm:$0xff]
    %v237 = vld [vmem:[#allocation2 + $0x268] sm:$0xff]
    %v238 = vld [vmem:[#allocation2 + $0x270] sm:$0xff]
    %v239 = vld [vmem:[#allocation2 + $0x278] sm:$0xff]
    %v240 = vld [vmem:[#allocation2 + $0x280] sm:$0xff]
    %v241 = vld [vmem:[#allocation2 + $0x288] sm:$0xff]
    %v242 = vld [vmem:[#allocation2 + $0x290] sm:$0xff]
    %v243 = vld [vmem:[#allocation2 + $0x298] sm:$0xff]
    %v244 = vld [vmem:[#allocation2 + $0x2a0] sm:$0xff]
    %v245 = vld [vmem:[#allocation2 + $0x2a8] sm:$0xff]
    %v246 = vld [vmem:[#allocation2 + $0x2b0] sm:$0xff]
    %v247 = vld [vmem:[#allocation2 + $0x2b8] sm:$0xff]
    %v248 = vld [vmem:[#allocation2 + $0x2c0] sm:$0xff]
    %v249 = vld [vmem:[#allocation2 + $0x2c8] sm:$0xff]
    %v250 = vld [vmem:[#allocation2 + $0x2d0] sm:$0xff]
    %v251 = vld [vmem:[#allocation2 + $0x2d8] sm:$0xff]
    %v252 = vld [vmem:[#allocation2 + $0x2e0] sm:$0xff]
    %v253 = vld [vmem:[#allocation2 + $0x2e8] sm:$0xff]
    %v254 = vld [vmem:[#allocation2 + $0x2f0] sm:$0xff]
    %v255 = vld [vmem:[#allocation2 + $0x2f8] sm:$0xff]
    %v256 = vld [vmem:[#allocation2 + $0x300] sm:$0xff]
    %v257 = vld [vmem:[#allocation2 + $0x308] sm:$0xff]
    %v258 = vld [vmem:[#allocation2 + $0x310] sm:$0xff]
    %v259 = vld [vmem:[#allocation2 + $0x318] sm:$0xff]
    %v260 = vld [vmem:[#allocation2 + $0x320] sm:$0xff]
    %v261 = vld [vmem:[#allocation2 + $0x328] sm:$0xff]
    %v262 = vld [vmem:[#allocation2 + $0x330] sm:$0xff]
    %v263 = vld [vmem:[#allocation2 + $0x338] sm:$0xff]
    %v264 = vld [vmem:[#allocation2 + $0x340] sm:$0xff]
    %v265 = vld [vmem:[#allocation2 + $0x348] sm:$0xff]
    %v266 = vld [vmem:[#allocation2 + $0x350] sm:$0xff]
    %v267 = vld [vmem:[#allocation2 + $0x358] sm:$0xff]
    %v268 = vld [vmem:[#allocation2 + $0x360] sm:$0xff]
    %v269 = vld [vmem:[#allocation2 + $0x368] sm:$0xff]
    %v270 = vld [vmem:[#allocation2 + $0x370] sm:$0xff]
    %v271 = vld [vmem:[#allocation2 + $0x378] sm:$0xff]
    %v272 = vld [vmem:[#allocation2 + $0x380] sm:$0xff]
    %v273 = vld [vmem:[#allocation2 + $0x388] sm:$0xff]
    %v274 = vld [vmem:[#allocation2 + $0x390] sm:$0xff]
    %v275 = vld [vmem:[#allocation2 + $0x398] sm:$0xff]
    %v276 = vld [vmem:[#allocation2 + $0x3a0] sm:$0xff]
    %v277 = vld [vmem:[#allocation2 + $0x3a8] sm:$0xff]
    %v278 = vld [vmem:[#allocation2 + $0x3b0] sm:$0xff]
    %v279 = vld [vmem:[#allocation2 + $0x3b8] sm:$0xff]
    %v280 = vld [vmem:[#allocation2 + $0x3c0] sm:$0xff]
    %v281 = vld [vmem:[#allocation2 + $0x3c8] sm:$0xff]
    %v282 = vld [vmem:[#allocation2 + $0x3d0] sm:$0xff]
    %v283 = vld [vmem:[#allocation2 + $0x3d8] sm:$0xff]
    %v284 = vld [vmem:[#allocation2 + $0x3e0] sm:$0xff]
    %v285 = vld [vmem:[#allocation2 + $0x3e8] sm:$0xff]
    %v286 = vld [vmem:[#allocation2 + $0x3f0] sm:$0xff]
    %v287 = vld [vmem:[#allocation2 + $0x3f8] sm:$0xff]
    %v288 = vld [vmem:[#allocation2 + $0x400] sm:$0xff]
    %v289 = vld [vmem:[#allocation2 + $0x408] sm:$0xff]
    %v290 = vld [vmem:[#allocation2 + $0x410] sm:$0xff]
    %v291 = vld [vmem:[#allocation2 + $0x418] sm:$0xff]
    %v292 = vld [vmem:[#allocation2 + $0x420] sm:$0xff]
    %v293 = vld [vmem:[#allocation2 + $0x428] sm:$0xff]
    %v294 = vld [vmem:[#allocation2 + $0x430] sm:$0xff]
    %v295 = vld [vmem:[#allocation2 + $0x438] sm:$0xff]
    %v296 = vld [vmem:[#allocation2 + $0x440] sm:$0xff]
    %v297 = vld [vmem:[#allocation2 + $0x448] sm:$0xff]
    %v298 = vld [vmem:[#allocation2 + $0x450] sm:$0xff]
    %v299 = vld [vmem:[#allocation2 + $0x458] sm:$0xff]
    %v300 = vld [vmem:[#allocation2 + $0x460] sm:$0xff]
    %v301 = vld [vmem:[#allocation2 + $0x468] sm:$0xff]
    %v302 = vld [vmem:[#allocation2 + $0x470] sm:$0xff]
    %v303 = vld [vmem:[#allocation2 + $0x478] sm:$0xff]
    %v304 = vld [vmem:[#allocation2 + $0x480] sm:$0xff]
    %v305 = vld [vmem:[#allocation2 + $0x488] sm:$0xff]
    %v306 = vld [vmem:[#allocation2 + $0x490] sm:$0xff]
    %v307 = vld [vmem:[#allocation2 + $0x498] sm:$0xff]
    %v308 = vld [vmem:[#allocation2 + $0x4a0] sm:$0xff]
    %v309 = vld [vmem:[#allocation2 + $0x4a8] sm:$0xff]
    %v310 = vld [vmem:[#allocation2 + $0x4b0] sm:$0xff]
    %v311 = vld [vmem:[#allocation2 + $0x4b8] sm:$0xff]
    %v312 = vld [vmem:[#allocation2 + $0x4c0] sm:$0xff]
    %v313 = vld [vmem:[#allocation2 + $0x4c8] sm:$0xff]
    %v314 = vld [vmem:[#allocation2 + $0x4d0] sm:$0xff]
    %v315 = vld [vmem:[#allocation2 + $0x4d8] sm:$0xff]
    %v316 = vld [vmem:[#allocation2 + $0x4e0] sm:$0xff]
    %v317 = vld [vmem:[#allocation2 + $0x4e8] sm:$0xff]
    %v318 = vld [vmem:[#allocation2 + $0x4f0] sm:$0xff]
    %v319 = vld [vmem:[#allocation2 + $0x4f8] sm:$0xff]
    %v320 = vld [vmem:[%s3] sm:$0x3]
    %v322 = vperm.slane %v320, 0
    %v323 = vperm.slane %v320, 1
    %v406 = vunpack.c.l.b16 %v64
    %v407 = vunpack.c.h.b16 %v64
    %v408 = vunpack.c.l.b16 %v65
    %v409 = vunpack.c.h.b16 %v65
    %v410 = vunpack.c.l.b16 %v66
    %v411 = vunpack.c.h.b16 %v66
    %v412 = vunpack.c.l.b16 %v67
    %v413 = vunpack.c.h.b16 %v67
    %v414 = vunpack.c.l.b16 %v68
    %v415 = vunpack.c.h.b16 %v68
    %v416 = vunpack.c.l.b16 %v70
    %v417 = vunpack.c.h.b16 %v70
    %v418 = vunpack.c.l.b16 %v71
    %v419 = vunpack.c.h.b16 %v71
    %v420 = vunpack.c.l.b16 %v72
    %v421 = vunpack.c.h.b16 %v72
    %v422 = vunpack.c.l.b16 %v73
    %v423 = vunpack.c.h.b16 %v73
    %v424 = vunpack.c.l.b16 %v74
    %v425 = vunpack.c.h.b16 %v74
    %v426 = vunpack.c.l.b16 %v76
    %v427 = vunpack.c.h.b16 %v76
    %v428 = vunpack.c.l.b16 %v77
    %v429 = vunpack.c.h.b16 %v77
    %v430 = vunpack.c.l.b16 %v78
    %v431 = vunpack.c.h.b16 %v78
    %v432 = vunpack.c.l.b16 %v79
    %v433 = vunpack.c.h.b16 %v79
    %v434 = vunpack.c.l.b16 %v80
    %v435 = vunpack.c.h.b16 %v80
    %v436 = vunpack.c.l.b16 %v82
    %v437 = vunpack.c.h.b16 %v82
    %v438 = vunpack.c.l.b16 %v83
    %v439 = vunpack.c.h.b16 %v83
    %v440 = vunpack.c.l.b16 %v84
    %v441 = vunpack.c.h.b16 %v84
    %v442 = vunpack.c.l.b16 %v85
    %v443 = vunpack.c.h.b16 %v85
    %v444 = vunpack.c.l.b16 %v86
    %v445 = vunpack.c.h.b16 %v86
    %v446 = vunpack.c.l.b16 %v88
    %v447 = vunpack.c.h.b16 %v88
    %v448 = vunpack.c.l.b16 %v89
    %v449 = vunpack.c.h.b16 %v89
    %v450 = vunpack.c.l.b16 %v90
    %v451 = vunpack.c.h.b16 %v90
    %v452 = vunpack.c.l.b16 %v91
    %v453 = vunpack.c.h.b16 %v91
    %v454 = vunpack.c.l.b16 %v92
    %v455 = vunpack.c.h.b16 %v92
    %v456 = vunpack.c.l.b16 %v94
    %v457 = vunpack.c.h.b16 %v94
    %v458 = vunpack.c.l.b16 %v95
    %v459 = vunpack.c.h.b16 %v95
    %v460 = vunpack.c.l.b16 %v96
    %v461 = vunpack.c.h.b16 %v96
    %v462 = vunpack.c.l.b16 %v97
    %v463 = vunpack.c.h.b16 %v97
    %v464 = vunpack.c.l.b16 %v98
    %v465 = vunpack.c.h.b16 %v98
    %v466 = vunpack.c.l.b16 %v100
    %v467 = vunpack.c.h.b16 %v100
    %v468 = vunpack.c.l.b16 %v101
    %v469 = vunpack.c.h.b16 %v101
    %v470 = vunpack.c.l.b16 %v102
    %v471 = vunpack.c.h.b16 %v102
    %v472 = vunpack.c.l.b16 %v103
    %v473 = vunpack.c.h.b16 %v103
    %v474 = vunpack.c.l.b16 %v104
    %v475 = vunpack.c.h.b16 %v104
    %v476 = vunpack.c.l.b16 %v106
    %v477 = vunpack.c.h.b16 %v106
    %v478 = vunpack.c.l.b16 %v107
    %v479 = vunpack.c.h.b16 %v107
    %v480 = vunpack.c.l.b16 %v108
    %v481 = vunpack.c.h.b16 %v108
    %v482 = vunpack.c.l.b16 %v109
    %v483 = vunpack.c.h.b16 %v109
    %v484 = vunpack.c.l.b16 %v110
    %v485 = vunpack.c.h.b16 %v110
    %v486 = vunpack.c.l.b16 %v112
    %v487 = vunpack.c.h.b16 %v112
    %v488 = vunpack.c.l.b16 %v113
    %v489 = vunpack.c.h.b16 %v113
    %v490 = vunpack.c.l.b16 %v114
    %v491 = vunpack.c.h.b16 %v114
    %v492 = vunpack.c.l.b16 %v115
    %v493 = vunpack.c.h.b16 %v115
    %v494 = vunpack.c.l.b16 %v116
    %v495 = vunpack.c.h.b16 %v116
    %v496 = vunpack.c.l.b16 %v118
    %v497 = vunpack.c.h.b16 %v118
    %v498 = vunpack.c.l.b16 %v119
    %v499 = vunpack.c.h.b16 %v119
    %v500 = vunpack.c.l.b16 %v120
    %v501 = vunpack.c.h.b16 %v120
    %v502 = vunpack.c.l.b16 %v121
    %v503 = vunpack.c.h.b16 %v121
    %v504 = vunpack.c.l.b16 %v122
    %v505 = vunpack.c.h.b16 %v122
    %v506 = vunpack.c.l.b16 %v124
    %v507 = vunpack.c.h.b16 %v124
    %v508 = vunpack.c.l.b16 %v125
    %v509 = vunpack.c.h.b16 %v125
    %v510 = vunpack.c.l.b16 %v126
    %v511 = vunpack.c.h.b16 %v126
    %v512 = vunpack.c.l.b16 %v127
    %v513 = vunpack.c.h.b16 %v127
    %v514 = vunpack.c.l.b16 %v128
    %v515 = vunpack.c.h.b16 %v128
    %v516 = vunpack.c.l.b16 %v130
    %v517 = vunpack.c.h.b16 %v130
    %v518 = vunpack.c.l.b16 %v131
    %v519 = vunpack.c.h.b16 %v131
    %v520 = vunpack.c.l.b16 %v132
    %v521 = vunpack.c.h.b16 %v132
    %v522 = vunpack.c.l.b16 %v133
    %v523 = vunpack.c.h.b16 %v133
    %v524 = vunpack.c.l.b16 %v134
    %v525 = vunpack.c.h.b16 %v134
    %v526 = vunpack.c.l.b16 %v136
    %v527 = vunpack.c.h.b16 %v136
    %v528 = vunpack.c.l.b16 %v137
    %v529 = vunpack.c.h.b16 %v137
    %v530 = vunpack.c.l.b16 %v138
    %v531 = vunpack.c.h.b16 %v138
    %v532 = vunpack.c.l.b16 %v139
    %v533 = vunpack.c.h.b16 %v139
    %v534 = vunpack.c.l.b16 %v140
    %v535 = vunpack.c.h.b16 %v140
    %v536 = vunpack.c.l.b16 %v142
    %v537 = vunpack.c.h.b16 %v142
    %v538 = vunpack.c.l.b16 %v143
    %v539 = vunpack.c.h.b16 %v143
    %v540 = vunpack.c.l.b16 %v144
    %v541 = vunpack.c.h.b16 %v144
    %v542 = vunpack.c.l.b16 %v145
    %v543 = vunpack.c.h.b16 %v145
    %v544 = vunpack.c.l.b16 %v146
    %v545 = vunpack.c.h.b16 %v146
    %v546 = vunpack.c.l.b16 %v148
    %v547 = vunpack.c.h.b16 %v148
    %v548 = vunpack.c.l.b16 %v149
    %v549 = vunpack.c.h.b16 %v149
    %v550 = vunpack.c.l.b16 %v150
    %v551 = vunpack.c.h.b16 %v150
    %v552 = vunpack.c.l.b16 %v151
    %v553 = vunpack.c.h.b16 %v151
    %v554 = vunpack.c.l.b16 %v152
    %v555 = vunpack.c.h.b16 %v152
    %v556 = vunpack.c.l.b16 %v154
    %v557 = vunpack.c.h.b16 %v154
    %v558 = vunpack.c.l.b16 %v155
    %v559 = vunpack.c.h.b16 %v155
    %v560 = vunpack.c.l.b16 %v156
    %v561 = vunpack.c.h.b16 %v156
    %v562 = vunpack.c.l.b16 %v157
    %v563 = vunpack.c.h.b16 %v157
    %v564 = vunpack.c.l.b16 %v158
    %v565 = vunpack.c.h.b16 %v158
    %v566 = vpack.c.b16 %v416, %v406
    %v567 = vpack.c.b16 %v417, %v407
    %v568 = vpack.c.b16 %v418, %v408
    %v569 = vpack.c.b16 %v419, %v409
    %v570 = vpack.c.b16 %v420, %v410
    %v571 = vpack.c.b16 %v421, %v411
    %v572 = vpack.c.b16 %v422, %v412
    %v573 = vpack.c.b16 %v423, %v413
    %v574 = vpack.c.b16 %v424, %v414
    %v575 = vpack.c.b16 %v425, %v415
    %v576 = vpack.c.b16 %v436, %v426
    %v577 = vpack.c.b16 %v437, %v427
    %v578 = vpack.c.b16 %v438, %v428
    %v579 = vpack.c.b16 %v439, %v429
    %v580 = vpack.c.b16 %v440, %v430
    %v581 = vpack.c.b16 %v441, %v431
    %v582 = vpack.c.b16 %v442, %v432
    %v583 = vpack.c.b16 %v443, %v433
    %v584 = vpack.c.b16 %v444, %v434
    %v585 = vpack.c.b16 %v445, %v435
    %v586 = vpack.c.b16 %v456, %v446
    %v587 = vpack.c.b16 %v457, %v447
    %v588 = vpack.c.b16 %v458, %v448
    %v589 = vpack.c.b16 %v459, %v449
    %v590 = vpack.c.b16 %v460, %v450
    %v591 = vpack.c.b16 %v461, %v451
    %v592 = vpack.c.b16 %v462, %v452
    %v593 = vpack.c.b16 %v463, %v453
    %v594 = vpack.c.b16 %v464, %v454
    %v595 = vpack.c.b16 %v465, %v455
    %v596 = vpack.c.b16 %v476, %v466
    %v597 = vpack.c.b16 %v477, %v467
    %v598 = vpack.c.b16 %v478, %v468
    %v599 = vpack.c.b16 %v479, %v469
    %v600 = vpack.c.b16 %v480, %v470
    %v601 = vpack.c.b16 %v481, %v471
    %v602 = vpack.c.b16 %v482, %v472
    %v603 = vpack.c.b16 %v483, %v473
    %v604 = vpack.c.b16 %v484, %v474
    %v605 = vpack.c.b16 %v485, %v475
    %v606 = vpack.c.b16 %v496, %v486
    %v607 = vpack.c.b16 %v497, %v487
    %v608 = vpack.c.b16 %v498, %v488
    %v609 = vpack.c.b16 %v499, %v489
    %v610 = vpack.c.b16 %v500, %v490
    %v611 = vpack.c.b16 %v501, %v491
    %v612 = vpack.c.b16 %v502, %v492
    %v613 = vpack.c.b16 %v503, %v493
    %v614 = vpack.c.b16 %v504, %v494
    %v615 = vpack.c.b16 %v505, %v495
    %v616 = vpack.c.b16 %v516, %v506
    %v617 = vpack.c.b16 %v517, %v507
    %v618 = vpack.c.b16 %v518, %v508
    %v619 = vpack.c.b16 %v519, %v509
    %v620 = vpack.c.b16 %v520, %v510
    %v621 = vpack.c.b16 %v521, %v511
    %v622 = vpack.c.b16 %v522, %v512
    %v623 = vpack.c.b16 %v523, %v513
    %v624 = vpack.c.b16 %v524, %v514
    %v625 = vpack.c.b16 %v525, %v515
    %v626 = vpack.c.b16 %v536, %v526
    %v627 = vpack.c.b16 %v537, %v527
    %v628 = vpack.c.b16 %v538, %v528
    %v629 = vpack.c.b16 %v539, %v529
    %v630 = vpack.c.b16 %v540, %v530
    %v631 = vpack.c.b16 %v541, %v531
    %v632 = vpack.c.b16 %v542, %v532
    %v633 = vpack.c.b16 %v543, %v533
    %v634 = vpack.c.b16 %v544, %v534
    %v635 = vpack.c.b16 %v545, %v535
    %v636 = vpack.c.b16 %v556, %v546
    %v637 = vpack.c.b16 %v557, %v547
    %v638 = vpack.c.b16 %v558, %v548
    %v639 = vpack.c.b16 %v559, %v549
    %v640 = vpack.c.b16 %v560, %v550
    %v641 = vpack.c.b16 %v561, %v551
    %v642 = vpack.c.b16 %v562, %v552
    %v643 = vpack.c.b16 %v563, %v553
    %v644 = vpack.c.b16 %v564, %v554
    %v645 = vpack.c.b16 %v565, %v555
    %v886 = vunpack.c.l.b16 %v160
    %v887 = vunpack.c.h.b16 %v160
    %v888 = vunpack.c.l.b16 %v161
    %v889 = vunpack.c.h.b16 %v161
    %v890 = vunpack.c.l.b16 %v162
    %v891 = vunpack.c.h.b16 %v162
    %v892 = vunpack.c.l.b16 %v163
    %v893 = vunpack.c.h.b16 %v163
    %v894 = vunpack.c.l.b16 %v164
    %v895 = vunpack.c.h.b16 %v164
    %v896 = vunpack.c.l.b16 %v165
    %v897 = vunpack.c.h.b16 %v165
    %v898 = vunpack.c.l.b16 %v166
    %v899 = vunpack.c.h.b16 %v166
    %v900 = vunpack.c.l.b16 %v167
    %v901 = vunpack.c.h.b16 %v167
    %v902 = vunpack.c.l.b16 %v168
    %v903 = vunpack.c.h.b16 %v168
    %v904 = vunpack.c.l.b16 %v169
    %v905 = vunpack.c.h.b16 %v169
    %v906 = vunpack.c.l.b16 %v170
    %v907 = vunpack.c.h.b16 %v170
    %v908 = vunpack.c.l.b16 %v171
    %v909 = vunpack.c.h.b16 %v171
    %v910 = vunpack.c.l.b16 %v172
    %v911 = vunpack.c.h.b16 %v172
    %v912 = vunpack.c.l.b16 %v173
    %v913 = vunpack.c.h.b16 %v173
    %v914 = vunpack.c.l.b16 %v174
    %v915 = vunpack.c.h.b16 %v174
    %v916 = vunpack.c.l.b16 %v175
    %v917 = vunpack.c.h.b16 %v175
    %v918 = vunpack.c.l.b16 %v176
    %v919 = vunpack.c.h.b16 %v176
    %v920 = vunpack.c.l.b16 %v177
    %v921 = vunpack.c.h.b16 %v177
    %v922 = vunpack.c.l.b16 %v178
    %v923 = vunpack.c.h.b16 %v178
    %v924 = vunpack.c.l.b16 %v179
    %v925 = vunpack.c.h.b16 %v179
    %v926 = vunpack.c.l.b16 %v180
    %v927 = vunpack.c.h.b16 %v180
    %v928 = vunpack.c.l.b16 %v181
    %v929 = vunpack.c.h.b16 %v181
    %v930 = vunpack.c.l.b16 %v182
    %v931 = vunpack.c.h.b16 %v182
    %v932 = vunpack.c.l.b16 %v183
    %v933 = vunpack.c.h.b16 %v183
    %v934 = vunpack.c.l.b16 %v184
    %v935 = vunpack.c.h.b16 %v184
    %v936 = vunpack.c.l.b16 %v185
    %v937 = vunpack.c.h.b16 %v185
    %v938 = vunpack.c.l.b16 %v186
    %v939 = vunpack.c.h.b16 %v186
    %v940 = vunpack.c.l.b16 %v187
    %v941 = vunpack.c.h.b16 %v187
    %v942 = vunpack.c.l.b16 %v188
    %v943 = vunpack.c.h.b16 %v188
    %v944 = vunpack.c.l.b16 %v189
    %v945 = vunpack.c.h.b16 %v189
    %v946 = vunpack.c.l.b16 %v190
    %v947 = vunpack.c.h.b16 %v190
    %v948 = vunpack.c.l.b16 %v191
    %v949 = vunpack.c.h.b16 %v191
    %v950 = vunpack.c.l.b16 %v192
    %v951 = vunpack.c.h.b16 %v192
    %v952 = vunpack.c.l.b16 %v193
    %v953 = vunpack.c.h.b16 %v193
    %v954 = vunpack.c.l.b16 %v194
    %v955 = vunpack.c.h.b16 %v194
    %v956 = vunpack.c.l.b16 %v195
    %v957 = vunpack.c.h.b16 %v195
    %v958 = vunpack.c.l.b16 %v196
    %v959 = vunpack.c.h.b16 %v196
    %v960 = vunpack.c.l.b16 %v197
    %v961 = vunpack.c.h.b16 %v197
    %v962 = vunpack.c.l.b16 %v198
    %v963 = vunpack.c.h.b16 %v198
    %v964 = vunpack.c.l.b16 %v199
    %v965 = vunpack.c.h.b16 %v199
    %v966 = vunpack.c.l.b16 %v200
    %v967 = vunpack.c.h.b16 %v200
    %v968 = vunpack.c.l.b16 %v201
    %v969 = vunpack.c.h.b16 %v201
    %v970 = vunpack.c.l.b16 %v202
    %v971 = vunpack.c.h.b16 %v202
    %v972 = vunpack.c.l.b16 %v203
    %v973 = vunpack.c.h.b16 %v203
    %v974 = vunpack.c.l.b16 %v204
    %v975 = vunpack.c.h.b16 %v204
    %v976 = vunpack.c.l.b16 %v205
    %v977 = vunpack.c.h.b16 %v205
    %v978 = vunpack.c.l.b16 %v206
    %v979 = vunpack.c.h.b16 %v206
    %v980 = vunpack.c.l.b16 %v207
    %v981 = vunpack.c.h.b16 %v207
    %v982 = vunpack.c.l.b16 %v208
    %v983 = vunpack.c.h.b16 %v208
    %v984 = vunpack.c.l.b16 %v209
    %v985 = vunpack.c.h.b16 %v209
    %v986 = vunpack.c.l.b16 %v210
    %v987 = vunpack.c.h.b16 %v210
    %v988 = vunpack.c.l.b16 %v211
    %v989 = vunpack.c.h.b16 %v211
    %v990 = vunpack.c.l.b16 %v212
    %v991 = vunpack.c.h.b16 %v212
    %v992 = vunpack.c.l.b16 %v213
    %v993 = vunpack.c.h.b16 %v213
    %v994 = vunpack.c.l.b16 %v214
    %v995 = vunpack.c.h.b16 %v214
    %v996 = vunpack.c.l.b16 %v215
    %v997 = vunpack.c.h.b16 %v215
    %v998 = vunpack.c.l.b16 %v216
    %v999 = vunpack.c.h.b16 %v216
    %v1000 = vunpack.c.l.b16 %v217
    %v1001 = vunpack.c.h.b16 %v217
    %v1002 = vunpack.c.l.b16 %v218
    %v1003 = vunpack.c.h.b16 %v218
    %v1004 = vunpack.c.l.b16 %v219
    %v1005 = vunpack.c.h.b16 %v219
    %v1006 = vunpack.c.l.b16 %v220
    %v1007 = vunpack.c.h.b16 %v220
    %v1008 = vunpack.c.l.b16 %v221
    %v1009 = vunpack.c.h.b16 %v221
    %v1010 = vunpack.c.l.b16 %v222
    %v1011 = vunpack.c.h.b16 %v222
    %v1012 = vunpack.c.l.b16 %v223
    %v1013 = vunpack.c.h.b16 %v223
    %v1014 = vunpack.c.l.b16 %v224
    %v1015 = vunpack.c.h.b16 %v224
    %v1016 = vunpack.c.l.b16 %v225
    %v1017 = vunpack.c.h.b16 %v225
    %v1018 = vunpack.c.l.b16 %v226
    %v1019 = vunpack.c.h.b16 %v226
    %v1020 = vunpack.c.l.b16 %v227
    %v1021 = vunpack.c.h.b16 %v227
    %v1022 = vunpack.c.l.b16 %v228
    %v1023 = vunpack.c.h.b16 %v228
    %v1024 = vunpack.c.l.b16 %v229
    %v1025 = vunpack.c.h.b16 %v229
    %v1026 = vunpack.c.l.b16 %v230
    %v1027 = vunpack.c.h.b16 %v230
    %v1028 = vunpack.c.l.b16 %v231
    %v1029 = vunpack.c.h.b16 %v231
    %v1030 = vunpack.c.l.b16 %v232
    %v1031 = vunpack.c.h.b16 %v232
    %v1032 = vunpack.c.l.b16 %v233
    %v1033 = vunpack.c.h.b16 %v233
    %v1034 = vunpack.c.l.b16 %v234
    %v1035 = vunpack.c.h.b16 %v234
    %v1036 = vunpack.c.l.b16 %v235
    %v1037 = vunpack.c.h.b16 %v235
    %v1038 = vunpack.c.l.b16 %v236
    %v1039 = vunpack.c.h.b16 %v236
    %v1040 = vunpack.c.l.b16 %v237
    %v1041 = vunpack.c.h.b16 %v237
    %v1042 = vunpack.c.l.b16 %v238
    %v1043 = vunpack.c.h.b16 %v238
    %v1044 = vunpack.c.l.b16 %v239
    %v1045 = vunpack.c.h.b16 %v239
    %v1046 = vunpack.c.l.b16 %v240
    %v1047 = vunpack.c.h.b16 %v240
    %v1048 = vunpack.c.l.b16 %v241
    %v1049 = vunpack.c.h.b16 %v241
    %v1050 = vunpack.c.l.b16 %v242
    %v1051 = vunpack.c.h.b16 %v242
    %v1052 = vunpack.c.l.b16 %v243
    %v1053 = vunpack.c.h.b16 %v243
    %v1054 = vunpack.c.l.b16 %v244
    %v1055 = vunpack.c.h.b16 %v244
    %v1056 = vunpack.c.l.b16 %v245
    %v1057 = vunpack.c.h.b16 %v245
    %v1058 = vunpack.c.l.b16 %v246
    %v1059 = vunpack.c.h.b16 %v246
    %v1060 = vunpack.c.l.b16 %v247
    %v1061 = vunpack.c.h.b16 %v247
    %v1062 = vunpack.c.l.b16 %v248
    %v1063 = vunpack.c.h.b16 %v248
    %v1064 = vunpack.c.l.b16 %v249
    %v1065 = vunpack.c.h.b16 %v249
    %v1066 = vunpack.c.l.b16 %v250
    %v1067 = vunpack.c.h.b16 %v250
    %v1068 = vunpack.c.l.b16 %v251
    %v1069 = vunpack.c.h.b16 %v251
    %v1070 = vunpack.c.l.b16 %v252
    %v1071 = vunpack.c.h.b16 %v252
    %v1072 = vunpack.c.l.b16 %v253
    %v1073 = vunpack.c.h.b16 %v253
    %v1074 = vunpack.c.l.b16 %v254
    %v1075 = vunpack.c.h.b16 %v254
    %v1076 = vunpack.c.l.b16 %v255
    %v1077 = vunpack.c.h.b16 %v255
    %v1078 = vunpack.c.l.b16 %v256
    %v1079 = vunpack.c.h.b16 %v256
    %v1080 = vunpack.c.l.b16 %v257
    %v1081 = vunpack.c.h.b16 %v257
    %v1082 = vunpack.c.l.b16 %v258
    %v1083 = vunpack.c.h.b16 %v258
    %v1084 = vunpack.c.l.b16 %v259
    %v1085 = vunpack.c.h.b16 %v259
    %v1086 = vunpack.c.l.b16 %v260
    %v1087 = vunpack.c.h.b16 %v260
    %v1088 = vunpack.c.l.b16 %v261
    %v1089 = vunpack.c.h.b16 %v261
    %v1090 = vunpack.c.l.b16 %v262
    %v1091 = vunpack.c.h.b16 %v262
    %v1092 = vunpack.c.l.b16 %v263
    %v1093 = vunpack.c.h.b16 %v263
    %v1094 = vunpack.c.l.b16 %v264
    %v1095 = vunpack.c.h.b16 %v264
    %v1096 = vunpack.c.l.b16 %v265
    %v1097 = vunpack.c.h.b16 %v265
    %v1098 = vunpack.c.l.b16 %v266
    %v1099 = vunpack.c.h.b16 %v266
    %v1100 = vunpack.c.l.b16 %v267
    %v1101 = vunpack.c.h.b16 %v267
    %v1102 = vunpack.c.l.b16 %v268
    %v1103 = vunpack.c.h.b16 %v268
    %v1104 = vunpack.c.l.b16 %v269
    %v1105 = vunpack.c.h.b16 %v269
    %v1106 = vunpack.c.l.b16 %v270
    %v1107 = vunpack.c.h.b16 %v270
    %v1108 = vunpack.c.l.b16 %v271
    %v1109 = vunpack.c.h.b16 %v271
    %v1110 = vunpack.c.l.b16 %v272
    %v1111 = vunpack.c.h.b16 %v272
    %v1112 = vunpack.c.l.b16 %v273
    %v1113 = vunpack.c.h.b16 %v273
    %v1114 = vunpack.c.l.b16 %v274
    %v1115 = vunpack.c.h.b16 %v274
    %v1116 = vunpack.c.l.b16 %v275
    %v1117 = vunpack.c.h.b16 %v275
    %v1118 = vunpack.c.l.b16 %v276
    %v1119 = vunpack.c.h.b16 %v276
    %v1120 = vunpack.c.l.b16 %v277
    %v1121 = vunpack.c.h.b16 %v277
    %v1122 = vunpack.c.l.b16 %v278
    %v1123 = vunpack.c.h.b16 %v278
    %v1124 = vunpack.c.l.b16 %v279
    %v1125 = vunpack.c.h.b16 %v279
    %v1126 = vunpack.c.l.b16 %v280
    %v1127 = vunpack.c.h.b16 %v280
    %v1128 = vunpack.c.l.b16 %v281
    %v1129 = vunpack.c.h.b16 %v281
    %v1130 = vunpack.c.l.b16 %v282
    %v1131 = vunpack.c.h.b16 %v282
    %v1132 = vunpack.c.l.b16 %v283
    %v1133 = vunpack.c.h.b16 %v283
    %v1134 = vunpack.c.l.b16 %v284
    %v1135 = vunpack.c.h.b16 %v284
    %v1136 = vunpack.c.l.b16 %v285
    %v1137 = vunpack.c.h.b16 %v285
    %v1138 = vunpack.c.l.b16 %v286
    %v1139 = vunpack.c.h.b16 %v286
    %v1140 = vunpack.c.l.b16 %v287
    %v1141 = vunpack.c.h.b16 %v287
    %v1142 = vunpack.c.l.b16 %v288
    %v1143 = vunpack.c.h.b16 %v288
    %v1144 = vunpack.c.l.b16 %v289
    %v1145 = vunpack.c.h.b16 %v289
    %v1146 = vunpack.c.l.b16 %v290
    %v1147 = vunpack.c.h.b16 %v290
    %v1148 = vunpack.c.l.b16 %v291
    %v1149 = vunpack.c.h.b16 %v291
    %v1150 = vunpack.c.l.b16 %v292
    %v1151 = vunpack.c.h.b16 %v292
    %v1152 = vunpack.c.l.b16 %v293
    %v1153 = vunpack.c.h.b16 %v293
    %v1154 = vunpack.c.l.b16 %v294
    %v1155 = vunpack.c.h.b16 %v294
    %v1156 = vunpack.c.l.b16 %v295
    %v1157 = vunpack.c.h.b16 %v295
    %v1158 = vunpack.c.l.b16 %v296
    %v1159 = vunpack.c.h.b16 %v296
    %v1160 = vunpack.c.l.b16 %v297
    %v1161 = vunpack.c.h.b16 %v297
    %v1162 = vunpack.c.l.b16 %v298
    %v1163 = vunpack.c.h.b16 %v298
    %v1164 = vunpack.c.l.b16 %v299
    %v1165 = vunpack.c.h.b16 %v299
    %v1166 = vunpack.c.l.b16 %v300
    %v1167 = vunpack.c.h.b16 %v300
    %v1168 = vunpack.c.l.b16 %v301
    %v1169 = vunpack.c.h.b16 %v301
    %v1170 = vunpack.c.l.b16 %v302
    %v1171 = vunpack.c.h.b16 %v302
    %v1172 = vunpack.c.l.b16 %v303
    %v1173 = vunpack.c.h.b16 %v303
    %v1174 = vunpack.c.l.b16 %v304
    %v1175 = vunpack.c.h.b16 %v304
    %v1176 = vunpack.c.l.b16 %v305
    %v1177 = vunpack.c.h.b16 %v305
    %v1178 = vunpack.c.l.b16 %v306
    %v1179 = vunpack.c.h.b16 %v306
    %v1180 = vunpack.c.l.b16 %v307
    %v1181 = vunpack.c.h.b16 %v307
    %v1182 = vunpack.c.l.b16 %v308
    %v1183 = vunpack.c.h.b16 %v308
    %v1184 = vunpack.c.l.b16 %v309
    %v1185 = vunpack.c.h.b16 %v309
    %v1186 = vunpack.c.l.b16 %v310
    %v1187 = vunpack.c.h.b16 %v310
    %v1188 = vunpack.c.l.b16 %v311
    %v1189 = vunpack.c.h.b16 %v311
    %v1190 = vunpack.c.l.b16 %v312
    %v1191 = vunpack.c.h.b16 %v312
    %v1192 = vunpack.c.l.b16 %v313
    %v1193 = vunpack.c.h.b16 %v313
    %v1194 = vunpack.c.l.b16 %v314
    %v1195 = vunpack.c.h.b16 %v314
    %v1196 = vunpack.c.l.b16 %v315
    %v1197 = vunpack.c.h.b16 %v315
    %v1198 = vunpack.c.l.b16 %v316
    %v1199 = vunpack.c.h.b16 %v316
    %v1200 = vunpack.c.l.b16 %v317
    %v1201 = vunpack.c.h.b16 %v317
    %v1202 = vunpack.c.l.b16 %v318
    %v1203 = vunpack.c.h.b16 %v318
    %v1204 = vunpack.c.l.b16 %v319
    %v1205 = vunpack.c.h.b16 %v319
    %v1206 = vpack.c.b16 %v888, %v886
    %v1207 = vpack.c.b16 %v889, %v887
    %v1208 = vpack.c.b16 %v892, %v890
    %v1209 = vpack.c.b16 %v893, %v891
    %v1210 = vpack.c.b16 %v896, %v894
    %v1211 = vpack.c.b16 %v897, %v895
    %v1212 = vpack.c.b16 %v900, %v898
    %v1213 = vpack.c.b16 %v901, %v899
    %v1214 = vpack.c.b16 %v904, %v902
    %v1215 = vpack.c.b16 %v905, %v903
    %v1216 = vpack.c.b16 %v908, %v906
    %v1217 = vpack.c.b16 %v909, %v907
    %v1218 = vpack.c.b16 %v912, %v910
    %v1219 = vpack.c.b16 %v913, %v911
    %v1220 = vpack.c.b16 %v916, %v914
    %v1221 = vpack.c.b16 %v917, %v915
    %v1222 = vpack.c.b16 %v920, %v918
    %v1223 = vpack.c.b16 %v921, %v919
    %v1224 = vpack.c.b16 %v924, %v922
    %v1225 = vpack.c.b16 %v925, %v923
    %v1226 = vpack.c.b16 %v928, %v926
    %v1227 = vpack.c.b16 %v929, %v927
    %v1228 = vpack.c.b16 %v932, %v930
    %v1229 = vpack.c.b16 %v933, %v931
    %v1230 = vpack.c.b16 %v936, %v934
    %v1231 = vpack.c.b16 %v937, %v935
    %v1232 = vpack.c.b16 %v940, %v938
    %v1233 = vpack.c.b16 %v941, %v939
    %v1234 = vpack.c.b16 %v944, %v942
    %v1235 = vpack.c.b16 %v945, %v943
    %v1236 = vpack.c.b16 %v948, %v946
    %v1237 = vpack.c.b16 %v949, %v947
    %v1238 = vpack.c.b16 %v952, %v950
    %v1239 = vpack.c.b16 %v953, %v951
    %v1240 = vpack.c.b16 %v956, %v954
    %v1241 = vpack.c.b16 %v957, %v955
    %v1242 = vpack.c.b16 %v960, %v958
    %v1243 = vpack.c.b16 %v961, %v959
    %v1244 = vpack.c.b16 %v964, %v962
    %v1245 = vpack.c.b16 %v965, %v963
    %v1246 = vpack.c.b16 %v968, %v966
    %v1247 = vpack.c.b16 %v969, %v967
    %v1248 = vpack.c.b16 %v972, %v970
    %v1249 = vpack.c.b16 %v973, %v971
    %v1250 = vpack.c.b16 %v976, %v974
    %v1251 = vpack.c.b16 %v977, %v975
    %v1252 = vpack.c.b16 %v980, %v978
    %v1253 = vpack.c.b16 %v981, %v979
    %v1254 = vpack.c.b16 %v984, %v982
    %v1255 = vpack.c.b16 %v985, %v983
    %v1256 = vpack.c.b16 %v988, %v986
    %v1257 = vpack.c.b16 %v989, %v987
    %v1258 = vpack.c.b16 %v992, %v990
    %v1259 = vpack.c.b16 %v993, %v991
    %v1260 = vpack.c.b16 %v996, %v994
    %v1261 = vpack.c.b16 %v997, %v995
    %v1262 = vpack.c.b16 %v1000, %v998
    %v1263 = vpack.c.b16 %v1001, %v999
    %v1264 = vpack.c.b16 %v1004, %v1002
    %v1265 = vpack.c.b16 %v1005, %v1003
    %v1266 = vpack.c.b16 %v1008, %v1006
    %v1267 = vpack.c.b16 %v1009, %v1007
    %v1268 = vpack.c.b16 %v1012, %v1010
    %v1269 = vpack.c.b16 %v1013, %v1011
    %v1270 = vpack.c.b16 %v1016, %v1014
    %v1271 = vpack.c.b16 %v1017, %v1015
    %v1272 = vpack.c.b16 %v1020, %v1018
    %v1273 = vpack.c.b16 %v1021, %v1019
    %v1274 = vpack.c.b16 %v1024, %v1022
    %v1275 = vpack.c.b16 %v1025, %v1023
    %v1276 = vpack.c.b16 %v1028, %v1026
    %v1277 = vpack.c.b16 %v1029, %v1027
    %v1278 = vpack.c.b16 %v1032, %v1030
    %v1279 = vpack.c.b16 %v1033, %v1031
    %v1280 = vpack.c.b16 %v1036, %v1034
    %v1281 = vpack.c.b16 %v1037, %v1035
    %v1282 = vpack.c.b16 %v1040, %v1038
    %v1283 = vpack.c.b16 %v1041, %v1039
    %v1284 = vpack.c.b16 %v1044, %v1042
    %v1285 = vpack.c.b16 %v1045, %v1043
    %v1286 = vpack.c.b16 %v1048, %v1046
    %v1287 = vpack.c.b16 %v1049, %v1047
    %v1288 = vpack.c.b16 %v1052, %v1050
    %v1289 = vpack.c.b16 %v1053, %v1051
    %v1290 = vpack.c.b16 %v1056, %v1054
    %v1291 = vpack.c.b16 %v1057, %v1055
    %v1292 = vpack.c.b16 %v1060, %v1058
    %v1293 = vpack.c.b16 %v1061, %v1059
    %v1294 = vpack.c.b16 %v1064, %v1062
    %v1295 = vpack.c.b16 %v1065, %v1063
    %v1296 = vpack.c.b16 %v1068, %v1066
    %v1297 = vpack.c.b16 %v1069, %v1067
    %v1298 = vpack.c.b16 %v1072, %v1070
    %v1299 = vpack.c.b16 %v1073, %v1071
    %v1300 = vpack.c.b16 %v1076, %v1074
    %v1301 = vpack.c.b16 %v1077, %v1075
    %v1302 = vpack.c.b16 %v1080, %v1078
    %v1303 = vpack.c.b16 %v1081, %v1079
    %v1304 = vpack.c.b16 %v1084, %v1082
    %v1305 = vpack.c.b16 %v1085, %v1083
    %v1306 = vpack.c.b16 %v1088, %v1086
    %v1307 = vpack.c.b16 %v1089, %v1087
    %v1308 = vpack.c.b16 %v1092, %v1090
    %v1309 = vpack.c.b16 %v1093, %v1091
    %v1310 = vpack.c.b16 %v1096, %v1094
    %v1311 = vpack.c.b16 %v1097, %v1095
    %v1312 = vpack.c.b16 %v1100, %v1098
    %v1313 = vpack.c.b16 %v1101, %v1099
    %v1314 = vpack.c.b16 %v1104, %v1102
    %v1315 = vpack.c.b16 %v1105, %v1103
    %v1316 = vpack.c.b16 %v1108, %v1106
    %v1317 = vpack.c.b16 %v1109, %v1107
    %v1318 = vpack.c.b16 %v1112, %v1110
    %v1319 = vpack.c.b16 %v1113, %v1111
    %v1320 = vpack.c.b16 %v1116, %v1114
    %v1321 = vpack.c.b16 %v1117, %v1115
    %v1322 = vpack.c.b16 %v1120, %v1118
    %v1323 = vpack.c.b16 %v1121, %v1119
    %v1324 = vpack.c.b16 %v1124, %v1122
    %v1325 = vpack.c.b16 %v1125, %v1123
    %v1326 = vpack.c.b16 %v1128, %v1126
    %v1327 = vpack.c.b16 %v1129, %v1127
    %v1328 = vpack.c.b16 %v1132, %v1130
    %v1329 = vpack.c.b16 %v1133, %v1131
    %v1330 = vpack.c.b16 %v1136, %v1134
    %v1331 = vpack.c.b16 %v1137, %v1135
    %v1332 = vpack.c.b16 %v1140, %v1138
    %v1333 = vpack.c.b16 %v1141, %v1139
    %v1334 = vpack.c.b16 %v1144, %v1142
    %v1335 = vpack.c.b16 %v1145, %v1143
    %v1336 = vpack.c.b16 %v1148, %v1146
    %v1337 = vpack.c.b16 %v1149, %v1147
    %v1338 = vpack.c.b16 %v1152, %v1150
    %v1339 = vpack.c.b16 %v1153, %v1151
    %v1340 = vpack.c.b16 %v1156, %v1154
    %v1341 = vpack.c.b16 %v1157, %v1155
    %v1342 = vpack.c.b16 %v1160, %v1158
    %v1343 = vpack.c.b16 %v1161, %v1159
    %v1344 = vpack.c.b16 %v1164, %v1162
    %v1345 = vpack.c.b16 %v1165, %v1163
    %v1346 = vpack.c.b16 %v1168, %v1166
    %v1347 = vpack.c.b16 %v1169, %v1167
    %v1348 = vpack.c.b16 %v1172, %v1170
    %v1349 = vpack.c.b16 %v1173, %v1171
    %v1350 = vpack.c.b16 %v1176, %v1174
    %v1351 = vpack.c.b16 %v1177, %v1175
    %v1352 = vpack.c.b16 %v1180, %v1178
    %v1353 = vpack.c.b16 %v1181, %v1179
    %v1354 = vpack.c.b16 %v1184, %v1182
    %v1355 = vpack.c.b16 %v1185, %v1183
    %v1356 = vpack.c.b16 %v1188, %v1186
    %v1357 = vpack.c.b16 %v1189, %v1187
    %v1358 = vpack.c.b16 %v1192, %v1190
    %v1359 = vpack.c.b16 %v1193, %v1191
    %v1360 = vpack.c.b16 %v1196, %v1194
    %v1361 = vpack.c.b16 %v1197, %v1195
    %v1362 = vpack.c.b16 %v1200, %v1198
    %v1363 = vpack.c.b16 %v1201, %v1199
    %v1364 = vpack.c.b16 %v1204, %v1202
    %v1365 = vpack.c.b16 %v1205, %v1203
    %1526 = vmatpush.bf16.msra.mxu0 %v1220
    %1527 = vmatpush.bf16.msra.mxu0 %v1218
    %1528 = vmatpush.bf16.msra.mxu0 %v1216
    %1529 = vmatpush.bf16.msra.mxu0 %v1214
    %1530 = vmatpush.bf16.msra.mxu0 %v1212
    %1531 = vmatpush.bf16.msra.mxu0 %v1210
    %1532 = vmatpush.bf16.msra.mxu0 %v1208
    %1533 = vmatpush.bf16.msra.mxu0 %v1206
    %1534 = vmatmul.bf16.gmra.mxu0 %v566
    %v1535 = vpop.f32.mrf.mxu0
    %v1536 = vadd.f32 %v322, %v1535
    %v1537 = vpop.f32.mrf.mxu0
    %v1538 = vadd.f32 %v322, %v1537
    %1539 = vmatmul.bf16.gmra.mxu0 %v576
    %v1540 = vpop.f32.mrf.mxu0
    %v1541 = vadd.f32 %v322, %v1540
    %v1542 = vpop.f32.mrf.mxu0
    %v1543 = vadd.f32 %v322, %v1542
    %1544 = vmatmul.bf16.gmra.mxu0 %v586
    %v1545 = vpop.f32.mrf.mxu0
    %v1546 = vadd.f32 %v322, %v1545
    %v1547 = vpop.f32.mrf.mxu0
    %v1548 = vadd.f32 %v322, %v1547
    %1549 = vmatmul.bf16.gmra.mxu0 %v596
    %v1550 = vpop.f32.mrf.mxu0
    %v1551 = vadd.f32 %v322, %v1550
    %v1552 = vpop.f32.mrf.mxu0
    %v1553 = vadd.f32 %v322, %v1552
    %1554 = vmatmul.bf16.gmra.mxu0 %v606
    %v1555 = vpop.f32.mrf.mxu0
    %v1556 = vadd.f32 %v322, %v1555
    %v1557 = vpop.f32.mrf.mxu0
    %v1558 = vadd.f32 %v322, %v1557
    %1559 = vmatmul.bf16.gmra.mxu0 %v616
    %v1560 = vpop.f32.mrf.mxu0
    %v1561 = vadd.f32 %v322, %v1560
    %v1562 = vpop.f32.mrf.mxu0
    %v1563 = vadd.f32 %v322, %v1562
    %1564 = vmatmul.bf16.gmra.mxu0 %v626
    %v1565 = vpop.f32.mrf.mxu0
    %v1566 = vadd.f32 %v322, %v1565
    %v1567 = vpop.f32.mrf.mxu0
    %v1568 = vadd.f32 %v322, %v1567
    %1569 = vmatmul.bf16.gmra.mxu0 %v636
    %v1570 = vpop.f32.mrf.mxu0
    %v1571 = vadd.f32 %v322, %v1570
    %v1572 = vpop.f32.mrf.mxu0
    %v1573 = vadd.f32 %v322, %v1572
    %1574 = vdwg.mxu0
    %1575 = vmatpush.bf16.msra.mxu0 %v1236
    %1576 = vmatpush.bf16.msra.mxu0 %v1234
    %1577 = vmatpush.bf16.msra.mxu0 %v1232
    %1578 = vmatpush.bf16.msra.mxu0 %v1230
    %1579 = vmatpush.bf16.msra.mxu0 %v1228
    %1580 = vmatpush.bf16.msra.mxu0 %v1226
    %1581 = vmatpush.bf16.msra.mxu0 %v1224
    %1582 = vmatpush.bf16.msra.mxu0 %v1222
    %1583 = vmatmul.bf16.gmra.mxu0 %v567
    %v1584 = vpop.f32.mrf.mxu0
    %v1585 = vadd.f32 %v1536, %v1584
    %v1586 = vpop.f32.mrf.mxu0
    %v1587 = vadd.f32 %v1538, %v1586
    %1588 = vmatmul.bf16.gmra.mxu0 %v577
    %v1589 = vpop.f32.mrf.mxu0
    %v1590 = vadd.f32 %v1541, %v1589
    %v1591 = vpop.f32.mrf.mxu0
    %v1592 = vadd.f32 %v1543, %v1591
    %1593 = vmatmul.bf16.gmra.mxu0 %v587
    %v1594 = vpop.f32.mrf.mxu0
    %v1595 = vadd.f32 %v1546, %v1594
    %v1596 = vpop.f32.mrf.mxu0
    %v1597 = vadd.f32 %v1548, %v1596
    %1598 = vmatmul.bf16.gmra.mxu0 %v597
    %v1599 = vpop.f32.mrf.mxu0
    %v1600 = vadd.f32 %v1551, %v1599
    %v1601 = vpop.f32.mrf.mxu0
    %v1602 = vadd.f32 %v1553, %v1601
    %1603 = vmatmul.bf16.gmra.mxu0 %v607
    %v1604 = vpop.f32.mrf.mxu0
    %v1605 = vadd.f32 %v1556, %v1604
    %v1606 = vpop.f32.mrf.mxu0
    %v1607 = vadd.f32 %v1558, %v1606
    %1608 = vmatmul.bf16.gmra.mxu0 %v617
    %v1609 = vpop.f32.mrf.mxu0
    %v1610 = vadd.f32 %v1561, %v1609
    %v1611 = vpop.f32.mrf.mxu0
    %v1612 = vadd.f32 %v1563, %v1611
    %1613 = vmatmul.bf16.gmra.mxu0 %v627
    %v1614 = vpop.f32.mrf.mxu0
    %v1615 = vadd.f32 %v1566, %v1614
    %v1616 = vpop.f32.mrf.mxu0
    %v1617 = vadd.f32 %v1568, %v1616
    %1618 = vmatmul.bf16.gmra.mxu0 %v637
    %v1619 = vpop.f32.mrf.mxu0
    %v1620 = vadd.f32 %v1571, %v1619
    %v1621 = vpop.f32.mrf.mxu0
    %v1622 = vadd.f32 %v1573, %v1621
    %1623 = vdwg.mxu0
    %1624 = vmatpush.bf16.msra.mxu0 %v1252
    %1625 = vmatpush.bf16.msra.mxu0 %v1250
    %1626 = vmatpush.bf16.msra.mxu0 %v1248
    %1627 = vmatpush.bf16.msra.mxu0 %v1246
    %1628 = vmatpush.bf16.msra.mxu0 %v1244
    %1629 = vmatpush.bf16.msra.mxu0 %v1242
    %1630 = vmatpush.bf16.msra.mxu0 %v1240
    %1631 = vmatpush.bf16.msra.mxu0 %v1238
    %1632 = vmatmul.bf16.gmra.mxu0 %v568
    %v1633 = vpop.f32.mrf.mxu0
    %v1634 = vadd.f32 %v1585, %v1633
    %v1635 = vpop.f32.mrf.mxu0
    %v1636 = vadd.f32 %v1587, %v1635
    %1637 = vmatmul.bf16.gmra.mxu0 %v578
    %v1638 = vpop.f32.mrf.mxu0
    %v1639 = vadd.f32 %v1590, %v1638
    %v1640 = vpop.f32.mrf.mxu0
    %v1641 = vadd.f32 %v1592, %v1640
    %1642 = vmatmul.bf16.gmra.mxu0 %v588
    %v1643 = vpop.f32.mrf.mxu0
    %v1644 = vadd.f32 %v1595, %v1643
    %v1645 = vpop.f32.mrf.mxu0
    %v1646 = vadd.f32 %v1597, %v1645
    %1647 = vmatmul.bf16.gmra.mxu0 %v598
    %v1648 = vpop.f32.mrf.mxu0
    %v1649 = vadd.f32 %v1600, %v1648
    %v1650 = vpop.f32.mrf.mxu0
    %v1651 = vadd.f32 %v1602, %v1650
    %1652 = vmatmul.bf16.gmra.mxu0 %v608
    %v1653 = vpop.f32.mrf.mxu0
    %v1654 = vadd.f32 %v1605, %v1653
    %v1655 = vpop.f32.mrf.mxu0
    %v1656 = vadd.f32 %v1607, %v1655
    %1657 = vmatmul.bf16.gmra.mxu0 %v618
    %v1658 = vpop.f32.mrf.mxu0
    %v1659 = vadd.f32 %v1610, %v1658
    %v1660 = vpop.f32.mrf.mxu0
    %v1661 = vadd.f32 %v1612, %v1660
    %1662 = vmatmul.bf16.gmra.mxu0 %v628
    %v1663 = vpop.f32.mrf.mxu0
    %v1664 = vadd.f32 %v1615, %v1663
    %v1665 = vpop.f32.mrf.mxu0
    %v1666 = vadd.f32 %v1617, %v1665
    %1667 = vmatmul.bf16.gmra.mxu0 %v638
    %v1668 = vpop.f32.mrf.mxu0
    %v1669 = vadd.f32 %v1620, %v1668
    %v1670 = vpop.f32.mrf.mxu0
    %v1671 = vadd.f32 %v1622, %v1670
    %1672 = vdwg.mxu0
    %1673 = vmatpush.bf16.msra.mxu0 %v1268
    %1674 = vmatpush.bf16.msra.mxu0 %v1266
    %1675 = vmatpush.bf16.msra.mxu0 %v1264
    %1676 = vmatpush.bf16.msra.mxu0 %v1262
    %1677 = vmatpush.bf16.msra.mxu0 %v1260
    %1678 = vmatpush.bf16.msra.mxu0 %v1258
    %1679 = vmatpush.bf16.msra.mxu0 %v1256
    %1680 = vmatpush.bf16.msra.mxu0 %v1254
    %1681 = vmatmul.bf16.gmra.mxu0 %v569
    %v1682 = vpop.f32.mrf.mxu0
    %v1683 = vadd.f32 %v1634, %v1682
    %v1684 = vpop.f32.mrf.mxu0
    %v1685 = vadd.f32 %v1636, %v1684
    %1686 = vmatmul.bf16.gmra.mxu0 %v579
    %v1687 = vpop.f32.mrf.mxu0
    %v1688 = vadd.f32 %v1639, %v1687
    %v1689 = vpop.f32.mrf.mxu0
    %v1690 = vadd.f32 %v1641, %v1689
    %1691 = vmatmul.bf16.gmra.mxu0 %v589
    %v1692 = vpop.f32.mrf.mxu0
    %v1693 = vadd.f32 %v1644, %v1692
    %v1694 = vpop.f32.mrf.mxu0
    %v1695 = vadd.f32 %v1646, %v1694
    %1696 = vmatmul.bf16.gmra.mxu0 %v599
    %v1697 = vpop.f32.mrf.mxu0
    %v1698 = vadd.f32 %v1649, %v1697
    %v1699 = vpop.f32.mrf.mxu0
    %v1700 = vadd.f32 %v1651, %v1699
    %1701 = vmatmul.bf16.gmra.mxu0 %v609
    %v1702 = vpop.f32.mrf.mxu0
    %v1703 = vadd.f32 %v1654, %v1702
    %v1704 = vpop.f32.mrf.mxu0
    %v1705 = vadd.f32 %v1656, %v1704
    %1706 = vmatmul.bf16.gmra.mxu0 %v619
    %v1707 = vpop.f32.mrf.mxu0
    %v1708 = vadd.f32 %v1659, %v1707
    %v1709 = vpop.f32.mrf.mxu0
    %v1710 = vadd.f32 %v1661, %v1709
    %1711 = vmatmul.bf16.gmra.mxu0 %v629
    %v1712 = vpop.f32.mrf.mxu0
    %v1713 = vadd.f32 %v1664, %v1712
    %v1714 = vpop.f32.mrf.mxu0
    %v1715 = vadd.f32 %v1666, %v1714
    %1716 = vmatmul.bf16.gmra.mxu0 %v639
    %v1717 = vpop.f32.mrf.mxu0
    %v1718 = vadd.f32 %v1669, %v1717
    %v1719 = vpop.f32.mrf.mxu0
    %v1720 = vadd.f32 %v1671, %v1719
    %1721 = vdwg.mxu0
    %1722 = vmatpush.bf16.msra.mxu0 %v1284
    %1723 = vmatpush.bf16.msra.mxu0 %v1282
    %1724 = vmatpush.bf16.msra.mxu0 %v1280
    %1725 = vmatpush.bf16.msra.mxu0 %v1278
    %1726 = vmatpush.bf16.msra.mxu0 %v1276
    %1727 = vmatpush.bf16.msra.mxu0 %v1274
    %1728 = vmatpush.bf16.msra.mxu0 %v1272
    %1729 = vmatpush.bf16.msra.mxu0 %v1270
    %1730 = vmatmul.bf16.gmra.mxu0 %v570
    %v1731 = vpop.f32.mrf.mxu0
    %v1732 = vadd.f32 %v1683, %v1731
    %v1733 = vpop.f32.mrf.mxu0
    %v1734 = vadd.f32 %v1685, %v1733
    %1735 = vmatmul.bf16.gmra.mxu0 %v580
    %v1736 = vpop.f32.mrf.mxu0
    %v1737 = vadd.f32 %v1688, %v1736
    %v1738 = vpop.f32.mrf.mxu0
    %v1739 = vadd.f32 %v1690, %v1738
    %1740 = vmatmul.bf16.gmra.mxu0 %v590
    %v1741 = vpop.f32.mrf.mxu0
    %v1742 = vadd.f32 %v1693, %v1741
    %v1743 = vpop.f32.mrf.mxu0
    %v1744 = vadd.f32 %v1695, %v1743
    %1745 = vmatmul.bf16.gmra.mxu0 %v600
    %v1746 = vpop.f32.mrf.mxu0
    %v1747 = vadd.f32 %v1698, %v1746
    %v1748 = vpop.f32.mrf.mxu0
    %v1749 = vadd.f32 %v1700, %v1748
    %1750 = vmatmul.bf16.gmra.mxu0 %v610
    %v1751 = vpop.f32.mrf.mxu0
    %v1752 = vadd.f32 %v1703, %v1751
    %v1753 = vpop.f32.mrf.mxu0
    %v1754 = vadd.f32 %v1705, %v1753
    %1755 = vmatmul.bf16.gmra.mxu0 %v620
    %v1756 = vpop.f32.mrf.mxu0
    %v1757 = vadd.f32 %v1708, %v1756
    %v1758 = vpop.f32.mrf.mxu0
    %v1759 = vadd.f32 %v1710, %v1758
    %1760 = vmatmul.bf16.gmra.mxu0 %v630
    %v1761 = vpop.f32.mrf.mxu0
    %v1762 = vadd.f32 %v1713, %v1761
    %v1763 = vpop.f32.mrf.mxu0
    %v1764 = vadd.f32 %v1715, %v1763
    %1765 = vmatmul.bf16.gmra.mxu0 %v640
    %v1766 = vpop.f32.mrf.mxu0
    %v1767 = vadd.f32 %v1718, %v1766
    %v1768 = vpop.f32.mrf.mxu0
    %v1769 = vadd.f32 %v1720, %v1768
    %1770 = vdwg.mxu0
    %1771 = vmatpush.bf16.msra.mxu0 %v1300
    %1772 = vmatpush.bf16.msra.mxu0 %v1298
    %1773 = vmatpush.bf16.msra.mxu0 %v1296
    %1774 = vmatpush.bf16.msra.mxu0 %v1294
    %1775 = vmatpush.bf16.msra.mxu0 %v1292
    %1776 = vmatpush.bf16.msra.mxu0 %v1290
    %1777 = vmatpush.bf16.msra.mxu0 %v1288
    %1778 = vmatpush.bf16.msra.mxu0 %v1286
    %1779 = vmatmul.bf16.gmra.mxu0 %v571
    %v1780 = vpop.f32.mrf.mxu0
    %v1781 = vadd.f32 %v1732, %v1780
    %v1782 = vpop.f32.mrf.mxu0
    %v1783 = vadd.f32 %v1734, %v1782
    %1784 = vmatmul.bf16.gmra.mxu0 %v581
    %v1785 = vpop.f32.mrf.mxu0
    %v1786 = vadd.f32 %v1737, %v1785
    %v1787 = vpop.f32.mrf.mxu0
    %v1788 = vadd.f32 %v1739, %v1787
    %1789 = vmatmul.bf16.gmra.mxu0 %v591
    %v1790 = vpop.f32.mrf.mxu0
    %v1791 = vadd.f32 %v1742, %v1790
    %v1792 = vpop.f32.mrf.mxu0
    %v1793 = vadd.f32 %v1744, %v1792
    %1794 = vmatmul.bf16.gmra.mxu0 %v601
    %v1795 = vpop.f32.mrf.mxu0
    %v1796 = vadd.f32 %v1747, %v1795
    %v1797 = vpop.f32.mrf.mxu0
    %v1798 = vadd.f32 %v1749, %v1797
    %1799 = vmatmul.bf16.gmra.mxu0 %v611
    %v1800 = vpop.f32.mrf.mxu0
    %v1801 = vadd.f32 %v1752, %v1800
    %v1802 = vpop.f32.mrf.mxu0
    %v1803 = vadd.f32 %v1754, %v1802
    %1804 = vmatmul.bf16.gmra.mxu0 %v621
    %v1805 = vpop.f32.mrf.mxu0
    %v1806 = vadd.f32 %v1757, %v1805
    %v1807 = vpop.f32.mrf.mxu0
    %v1808 = vadd.f32 %v1759, %v1807
    %1809 = vmatmul.bf16.gmra.mxu0 %v631
    %v1810 = vpop.f32.mrf.mxu0
    %v1811 = vadd.f32 %v1762, %v1810
    %v1812 = vpop.f32.mrf.mxu0
    %v1813 = vadd.f32 %v1764, %v1812
    %1814 = vmatmul.bf16.gmra.mxu0 %v641
    %v1815 = vpop.f32.mrf.mxu0
    %v1816 = vadd.f32 %v1767, %v1815
    %v1817 = vpop.f32.mrf.mxu0
    %v1818 = vadd.f32 %v1769, %v1817
    %1819 = vdwg.mxu0
    %1820 = vmatpush.bf16.msra.mxu0 %v1316
    %1821 = vmatpush.bf16.msra.mxu0 %v1314
    %1822 = vmatpush.bf16.msra.mxu0 %v1312
    %1823 = vmatpush.bf16.msra.mxu0 %v1310
    %1824 = vmatpush.bf16.msra.mxu0 %v1308
    %1825 = vmatpush.bf16.msra.mxu0 %v1306
    %1826 = vmatpush.bf16.msra.mxu0 %v1304
    %1827 = vmatpush.bf16.msra.mxu0 %v1302
    %1828 = vmatmul.bf16.gmra.mxu0 %v572
    %v1829 = vpop.f32.mrf.mxu0
    %v1830 = vadd.f32 %v1781, %v1829
    %v1831 = vpop.f32.mrf.mxu0
    %v1832 = vadd.f32 %v1783, %v1831
    %1833 = vmatmul.bf16.gmra.mxu0 %v582
    %v1834 = vpop.f32.mrf.mxu0
    %v1835 = vadd.f32 %v1786, %v1834
    %v1836 = vpop.f32.mrf.mxu0
    %v1837 = vadd.f32 %v1788, %v1836
    %1838 = vmatmul.bf16.gmra.mxu0 %v592
    %v1839 = vpop.f32.mrf.mxu0
    %v1840 = vadd.f32 %v1791, %v1839
    %v1841 = vpop.f32.mrf.mxu0
    %v1842 = vadd.f32 %v1793, %v1841
    %1843 = vmatmul.bf16.gmra.mxu0 %v602
    %v1844 = vpop.f32.mrf.mxu0
    %v1845 = vadd.f32 %v1796, %v1844
    %v1846 = vpop.f32.mrf.mxu0
    %v1847 = vadd.f32 %v1798, %v1846
    %1848 = vmatmul.bf16.gmra.mxu0 %v612
    %v1849 = vpop.f32.mrf.mxu0
    %v1850 = vadd.f32 %v1801, %v1849
    %v1851 = vpop.f32.mrf.mxu0
    %v1852 = vadd.f32 %v1803, %v1851
    %1853 = vmatmul.bf16.gmra.mxu0 %v622
    %v1854 = vpop.f32.mrf.mxu0
    %v1855 = vadd.f32 %v1806, %v1854
    %v1856 = vpop.f32.mrf.mxu0
    %v1857 = vadd.f32 %v1808, %v1856
    %1858 = vmatmul.bf16.gmra.mxu0 %v632
    %v1859 = vpop.f32.mrf.mxu0
    %v1860 = vadd.f32 %v1811, %v1859
    %v1861 = vpop.f32.mrf.mxu0
    %v1862 = vadd.f32 %v1813, %v1861
    %1863 = vmatmul.bf16.gmra.mxu0 %v642
    %v1864 = vpop.f32.mrf.mxu0
    %v1865 = vadd.f32 %v1816, %v1864
    %v1866 = vpop.f32.mrf.mxu0
    %v1867 = vadd.f32 %v1818, %v1866
    %1868 = vdwg.mxu0
    %1869 = vmatpush.bf16.msra.mxu0 %v1332
    %1870 = vmatpush.bf16.msra.mxu0 %v1330
    %1871 = vmatpush.bf16.msra.mxu0 %v1328
    %1872 = vmatpush.bf16.msra.mxu0 %v1326
    %1873 = vmatpush.bf16.msra.mxu0 %v1324
    %1874 = vmatpush.bf16.msra.mxu0 %v1322
    %1875 = vmatpush.bf16.msra.mxu0 %v1320
    %1876 = vmatpush.bf16.msra.mxu0 %v1318
    %1877 = vmatmul.bf16.gmra.mxu0 %v573
    %v1878 = vpop.f32.mrf.mxu0
    %v1879 = vadd.f32 %v1830, %v1878
    %v1880 = vpop.f32.mrf.mxu0
    %v1881 = vadd.f32 %v1832, %v1880
    %1882 = vmatmul.bf16.gmra.mxu0 %v583
    %v1883 = vpop.f32.mrf.mxu0
    %v1884 = vadd.f32 %v1835, %v1883
    %v1885 = vpop.f32.mrf.mxu0
    %v1886 = vadd.f32 %v1837, %v1885
    %1887 = vmatmul.bf16.gmra.mxu0 %v593
    %v1888 = vpop.f32.mrf.mxu0
    %v1889 = vadd.f32 %v1840, %v1888
    %v1890 = vpop.f32.mrf.mxu0
    %v1891 = vadd.f32 %v1842, %v1890
    %1892 = vmatmul.bf16.gmra.mxu0 %v603
    %v1893 = vpop.f32.mrf.mxu0
    %v1894 = vadd.f32 %v1845, %v1893
    %v1895 = vpop.f32.mrf.mxu0
    %v1896 = vadd.f32 %v1847, %v1895
    %1897 = vmatmul.bf16.gmra.mxu0 %v613
    %v1898 = vpop.f32.mrf.mxu0
    %v1899 = vadd.f32 %v1850, %v1898
    %v1900 = vpop.f32.mrf.mxu0
    %v1901 = vadd.f32 %v1852, %v1900
    %1902 = vmatmul.bf16.gmra.mxu0 %v623
    %v1903 = vpop.f32.mrf.mxu0
    %v1904 = vadd.f32 %v1855, %v1903
    %v1905 = vpop.f32.mrf.mxu0
    %v1906 = vadd.f32 %v1857, %v1905
    %1907 = vmatmul.bf16.gmra.mxu0 %v633
    %v1908 = vpop.f32.mrf.mxu0
    %v1909 = vadd.f32 %v1860, %v1908
    %v1910 = vpop.f32.mrf.mxu0
    %v1911 = vadd.f32 %v1862, %v1910
    %1912 = vmatmul.bf16.gmra.mxu0 %v643
    %v1913 = vpop.f32.mrf.mxu0
    %v1914 = vadd.f32 %v1865, %v1913
    %v1915 = vpop.f32.mrf.mxu0
    %v1916 = vadd.f32 %v1867, %v1915
    %1917 = vdwg.mxu0
    %1918 = vmatpush.bf16.msra.mxu0 %v1348
    %1919 = vmatpush.bf16.msra.mxu0 %v1346
    %1920 = vmatpush.bf16.msra.mxu0 %v1344
    %1921 = vmatpush.bf16.msra.mxu0 %v1342
    %1922 = vmatpush.bf16.msra.mxu0 %v1340
    %1923 = vmatpush.bf16.msra.mxu0 %v1338
    %1924 = vmatpush.bf16.msra.mxu0 %v1336
    %1925 = vmatpush.bf16.msra.mxu0 %v1334
    %1926 = vmatmul.bf16.gmra.mxu0 %v574
    %v1927 = vpop.f32.mrf.mxu0
    %v1928 = vadd.f32 %v1879, %v1927
    %v1929 = vpop.f32.mrf.mxu0
    %v1930 = vadd.f32 %v1881, %v1929
    %1931 = vmatmul.bf16.gmra.mxu0 %v584
    %v1932 = vpop.f32.mrf.mxu0
    %v1933 = vadd.f32 %v1884, %v1932
    %v1934 = vpop.f32.mrf.mxu0
    %v1935 = vadd.f32 %v1886, %v1934
    %1936 = vmatmul.bf16.gmra.mxu0 %v594
    %v1937 = vpop.f32.mrf.mxu0
    %v1938 = vadd.f32 %v1889, %v1937
    %v1939 = vpop.f32.mrf.mxu0
    %v1940 = vadd.f32 %v1891, %v1939
    %1941 = vmatmul.bf16.gmra.mxu0 %v604
    %v1942 = vpop.f32.mrf.mxu0
    %v1943 = vadd.f32 %v1894, %v1942
    %v1944 = vpop.f32.mrf.mxu0
    %v1945 = vadd.f32 %v1896, %v1944
    %1946 = vmatmul.bf16.gmra.mxu0 %v614
    %v1947 = vpop.f32.mrf.mxu0
    %v1948 = vadd.f32 %v1899, %v1947
    %v1949 = vpop.f32.mrf.mxu0
    %v1950 = vadd.f32 %v1901, %v1949
    %1951 = vmatmul.bf16.gmra.mxu0 %v624
    %v1952 = vpop.f32.mrf.mxu0
    %v1953 = vadd.f32 %v1904, %v1952
    %v1954 = vpop.f32.mrf.mxu0
    %v1955 = vadd.f32 %v1906, %v1954
    %1956 = vmatmul.bf16.gmra.mxu0 %v634
    %v1957 = vpop.f32.mrf.mxu0
    %v1958 = vadd.f32 %v1909, %v1957
    %v1959 = vpop.f32.mrf.mxu0
    %v1960 = vadd.f32 %v1911, %v1959
    %1961 = vmatmul.bf16.gmra.mxu0 %v644
    %v1962 = vpop.f32.mrf.mxu0
    %v1963 = vadd.f32 %v1914, %v1962
    %v1964 = vpop.f32.mrf.mxu0
    %v1965 = vadd.f32 %v1916, %v1964
    %1966 = vdwg.mxu0
    %1967 = vmatpush.bf16.msra.mxu0 %v1364
    %1968 = vmatpush.bf16.msra.mxu0 %v1362
    %1969 = vmatpush.bf16.msra.mxu0 %v1360
    %1970 = vmatpush.bf16.msra.mxu0 %v1358
    %1971 = vmatpush.bf16.msra.mxu0 %v1356
    %1972 = vmatpush.bf16.msra.mxu0 %v1354
    %1973 = vmatpush.bf16.msra.mxu0 %v1352
    %1974 = vmatpush.bf16.msra.mxu0 %v1350
    %1975 = vmatmul.bf16.gmra.mxu0 %v575
    %v1976 = vpop.f32.mrf.mxu0
    %v1977 = vadd.f32 %v1928, %v1976
    %v1978 = vpop.f32.mrf.mxu0
    %v1979 = vadd.f32 %v1930, %v1978
    %1980 = vmatmul.bf16.gmra.mxu0 %v585
    %v1981 = vpop.f32.mrf.mxu0
    %v1982 = vadd.f32 %v1933, %v1981
    %v1983 = vpop.f32.mrf.mxu0
    %v1984 = vadd.f32 %v1935, %v1983
    %1985 = vmatmul.bf16.gmra.mxu0 %v595
    %v1986 = vpop.f32.mrf.mxu0
    %v1987 = vadd.f32 %v1938, %v1986
    %v1988 = vpop.f32.mrf.mxu0
    %v1989 = vadd.f32 %v1940, %v1988
    %1990 = vmatmul.bf16.gmra.mxu0 %v605
    %v1991 = vpop.f32.mrf.mxu0
    %v1992 = vadd.f32 %v1943, %v1991
    %v1993 = vpop.f32.mrf.mxu0
    %v1994 = vadd.f32 %v1945, %v1993
    %1995 = vmatmul.bf16.gmra.mxu0 %v615
    %v1996 = vpop.f32.mrf.mxu0
    %v1997 = vadd.f32 %v1948, %v1996
    %v1998 = vpop.f32.mrf.mxu0
    %v1999 = vadd.f32 %v1950, %v1998
    %2000 = vmatmul.bf16.gmra.mxu0 %v625
    %v2001 = vpop.f32.mrf.mxu0
    %v2002 = vadd.f32 %v1953, %v2001
    %v2003 = vpop.f32.mrf.mxu0
    %v2004 = vadd.f32 %v1955, %v2003
    %2005 = vmatmul.bf16.gmra.mxu0 %v635
    %v2006 = vpop.f32.mrf.mxu0
    %v2007 = vadd.f32 %v1958, %v2006
    %v2008 = vpop.f32.mrf.mxu0
    %v2009 = vadd.f32 %v1960, %v2008
    %2010 = vmatmul.bf16.gmra.mxu0 %v645
    %v2011 = vpop.f32.mrf.mxu0
    %v2012 = vadd.f32 %v1963, %v2011
    %v2013 = vpop.f32.mrf.mxu0
    %v2014 = vadd.f32 %v1965, %v2013
    %2015 = vdwg.mxu0
    %2016 = vmatpush.bf16.msra.mxu0 %v1221
    %2017 = vmatpush.bf16.msra.mxu0 %v1219
    %2018 = vmatpush.bf16.msra.mxu0 %v1217
    %2019 = vmatpush.bf16.msra.mxu0 %v1215
    %2020 = vmatpush.bf16.msra.mxu0 %v1213
    %2021 = vmatpush.bf16.msra.mxu0 %v1211
    %2022 = vmatpush.bf16.msra.mxu0 %v1209
    %2023 = vmatpush.bf16.msra.mxu0 %v1207
    %2024 = vmatmul.bf16.gmra.mxu0 %v566
    %v2025 = vpop.f32.mrf.mxu0
    %v2026 = vadd.f32 %v323, %v2025
    %v2027 = vpop.f32.mrf.mxu0
    %v2028 = vadd.f32 %v323, %v2027
    %2029 = vmatmul.bf16.gmra.mxu0 %v576
    %v2030 = vpop.f32.mrf.mxu0
    %v2031 = vadd.f32 %v323, %v2030
    %v2032 = vpop.f32.mrf.mxu0
    %v2033 = vadd.f32 %v323, %v2032
    %2034 = vmatmul.bf16.gmra.mxu0 %v586
    %v2035 = vpop.f32.mrf.mxu0
    %v2036 = vadd.f32 %v323, %v2035
    %v2037 = vpop.f32.mrf.mxu0
    %v2038 = vadd.f32 %v323, %v2037
    %2039 = vmatmul.bf16.gmra.mxu0 %v596
    %v2040 = vpop.f32.mrf.mxu0
    %v2041 = vadd.f32 %v323, %v2040
    %v2042 = vpop.f32.mrf.mxu0
    %v2043 = vadd.f32 %v323, %v2042
    %2044 = vmatmul.bf16.gmra.mxu0 %v606
    %v2045 = vpop.f32.mrf.mxu0
    %v2046 = vadd.f32 %v323, %v2045
    %v2047 = vpop.f32.mrf.mxu0
    %v2048 = vadd.f32 %v323, %v2047
    %2049 = vmatmul.bf16.gmra.mxu0 %v616
    %v2050 = vpop.f32.mrf.mxu0
    %v2051 = vadd.f32 %v323, %v2050
    %v2052 = vpop.f32.mrf.mxu0
    %v2053 = vadd.f32 %v323, %v2052
    %2054 = vmatmul.bf16.gmra.mxu0 %v626
    %v2055 = vpop.f32.mrf.mxu0
    %v2056 = vadd.f32 %v323, %v2055
    %v2057 = vpop.f32.mrf.mxu0
    %v2058 = vadd.f32 %v323, %v2057
    %2059 = vmatmul.bf16.gmra.mxu0 %v636
    %v2060 = vpop.f32.mrf.mxu0
    %v2061 = vadd.f32 %v323, %v2060
    %v2062 = vpop.f32.mrf.mxu0
    %v2063 = vadd.f32 %v323, %v2062
    %2064 = vdwg.mxu0
    %2065 = vmatpush.bf16.msra.mxu0 %v1237
    %2066 = vmatpush.bf16.msra.mxu0 %v1235
    %2067 = vmatpush.bf16.msra.mxu0 %v1233
    %2068 = vmatpush.bf16.msra.mxu0 %v1231
    %2069 = vmatpush.bf16.msra.mxu0 %v1229
    %2070 = vmatpush.bf16.msra.mxu0 %v1227
    %2071 = vmatpush.bf16.msra.mxu0 %v1225
    %2072 = vmatpush.bf16.msra.mxu0 %v1223
    %2073 = vmatmul.bf16.gmra.mxu0 %v567
    %v2074 = vpop.f32.mrf.mxu0
    %v2075 = vadd.f32 %v2026, %v2074
    %v2076 = vpop.f32.mrf.mxu0
    %v2077 = vadd.f32 %v2028, %v2076
    %2078 = vmatmul.bf16.gmra.mxu0 %v577
    %v2079 = vpop.f32.mrf.mxu0
    %v2080 = vadd.f32 %v2031, %v2079
    %v2081 = vpop.f32.mrf.mxu0
    %v2082 = vadd.f32 %v2033, %v2081
    %2083 = vmatmul.bf16.gmra.mxu0 %v587
    %v2084 = vpop.f32.mrf.mxu0
    %v2085 = vadd.f32 %v2036, %v2084
    %v2086 = vpop.f32.mrf.mxu0
    %v2087 = vadd.f32 %v2038, %v2086
    %2088 = vmatmul.bf16.gmra.mxu0 %v597
    %v2089 = vpop.f32.mrf.mxu0
    %v2090 = vadd.f32 %v2041, %v2089
    %v2091 = vpop.f32.mrf.mxu0
    %v2092 = vadd.f32 %v2043, %v2091
    %2093 = vmatmul.bf16.gmra.mxu0 %v607
    %v2094 = vpop.f32.mrf.mxu0
    %v2095 = vadd.f32 %v2046, %v2094
    %v2096 = vpop.f32.mrf.mxu0
    %v2097 = vadd.f32 %v2048, %v2096
    %2098 = vmatmul.bf16.gmra.mxu0 %v617
    %v2099 = vpop.f32.mrf.mxu0
    %v2100 = vadd.f32 %v2051, %v2099
    %v2101 = vpop.f32.mrf.mxu0
    %v2102 = vadd.f32 %v2053, %v2101
    %2103 = vmatmul.bf16.gmra.mxu0 %v627
    %v2104 = vpop.f32.mrf.mxu0
    %v2105 = vadd.f32 %v2056, %v2104
    %v2106 = vpop.f32.mrf.mxu0
    %v2107 = vadd.f32 %v2058, %v2106
    %2108 = vmatmul.bf16.gmra.mxu0 %v637
    %v2109 = vpop.f32.mrf.mxu0
    %v2110 = vadd.f32 %v2061, %v2109
    %v2111 = vpop.f32.mrf.mxu0
    %v2112 = vadd.f32 %v2063, %v2111
    %2113 = vdwg.mxu0
    %2114 = vmatpush.bf16.msra.mxu0 %v1253
    %2115 = vmatpush.bf16.msra.mxu0 %v1251
    %2116 = vmatpush.bf16.msra.mxu0 %v1249
    %2117 = vmatpush.bf16.msra.mxu0 %v1247
    %2118 = vmatpush.bf16.msra.mxu0 %v1245
    %2119 = vmatpush.bf16.msra.mxu0 %v1243
    %2120 = vmatpush.bf16.msra.mxu0 %v1241
    %2121 = vmatpush.bf16.msra.mxu0 %v1239
    %2122 = vmatmul.bf16.gmra.mxu0 %v568
    %v2123 = vpop.f32.mrf.mxu0
    %v2124 = vadd.f32 %v2075, %v2123
    %v2125 = vpop.f32.mrf.mxu0
    %v2126 = vadd.f32 %v2077, %v2125
    %2127 = vmatmul.bf16.gmra.mxu0 %v578
    %v2128 = vpop.f32.mrf.mxu0
    %v2129 = vadd.f32 %v2080, %v2128
    %v2130 = vpop.f32.mrf.mxu0
    %v2131 = vadd.f32 %v2082, %v2130
    %2132 = vmatmul.bf16.gmra.mxu0 %v588
    %v2133 = vpop.f32.mrf.mxu0
    %v2134 = vadd.f32 %v2085, %v2133
    %v2135 = vpop.f32.mrf.mxu0
    %v2136 = vadd.f32 %v2087, %v2135
    %2137 = vmatmul.bf16.gmra.mxu0 %v598
    %v2138 = vpop.f32.mrf.mxu0
    %v2139 = vadd.f32 %v2090, %v2138
    %v2140 = vpop.f32.mrf.mxu0
    %v2141 = vadd.f32 %v2092, %v2140
    %2142 = vmatmul.bf16.gmra.mxu0 %v608
    %v2143 = vpop.f32.mrf.mxu0
    %v2144 = vadd.f32 %v2095, %v2143
    %v2145 = vpop.f32.mrf.mxu0
    %v2146 = vadd.f32 %v2097, %v2145
    %2147 = vmatmul.bf16.gmra.mxu0 %v618
    %v2148 = vpop.f32.mrf.mxu0
    %v2149 = vadd.f32 %v2100, %v2148
    %v2150 = vpop.f32.mrf.mxu0
    %v2151 = vadd.f32 %v2102, %v2150
    %2152 = vmatmul.bf16.gmra.mxu0 %v628
    %v2153 = vpop.f32.mrf.mxu0
    %v2154 = vadd.f32 %v2105, %v2153
    %v2155 = vpop.f32.mrf.mxu0
    %v2156 = vadd.f32 %v2107, %v2155
    %2157 = vmatmul.bf16.gmra.mxu0 %v638
    %v2158 = vpop.f32.mrf.mxu0
    %v2159 = vadd.f32 %v2110, %v2158
    %v2160 = vpop.f32.mrf.mxu0
    %v2161 = vadd.f32 %v2112, %v2160
    %2162 = vdwg.mxu0
    %2163 = vmatpush.bf16.msra.mxu0 %v1269
    %2164 = vmatpush.bf16.msra.mxu0 %v1267
    %2165 = vmatpush.bf16.msra.mxu0 %v1265
    %2166 = vmatpush.bf16.msra.mxu0 %v1263
    %2167 = vmatpush.bf16.msra.mxu0 %v1261
    %2168 = vmatpush.bf16.msra.mxu0 %v1259
    %2169 = vmatpush.bf16.msra.mxu0 %v1257
    %2170 = vmatpush.bf16.msra.mxu0 %v1255
    %2171 = vmatmul.bf16.gmra.mxu0 %v569
    %v2172 = vpop.f32.mrf.mxu0
    %v2173 = vadd.f32 %v2124, %v2172
    %v2174 = vpop.f32.mrf.mxu0
    %v2175 = vadd.f32 %v2126, %v2174
    %2176 = vmatmul.bf16.gmra.mxu0 %v579
    %v2177 = vpop.f32.mrf.mxu0
    %v2178 = vadd.f32 %v2129, %v2177
    %v2179 = vpop.f32.mrf.mxu0
    %v2180 = vadd.f32 %v2131, %v2179
    %2181 = vmatmul.bf16.gmra.mxu0 %v589
    %v2182 = vpop.f32.mrf.mxu0
    %v2183 = vadd.f32 %v2134, %v2182
    %v2184 = vpop.f32.mrf.mxu0
    %v2185 = vadd.f32 %v2136, %v2184
    %2186 = vmatmul.bf16.gmra.mxu0 %v599
    %v2187 = vpop.f32.mrf.mxu0
    %v2188 = vadd.f32 %v2139, %v2187
    %v2189 = vpop.f32.mrf.mxu0
    %v2190 = vadd.f32 %v2141, %v2189
    %2191 = vmatmul.bf16.gmra.mxu0 %v609
    %v2192 = vpop.f32.mrf.mxu0
    %v2193 = vadd.f32 %v2144, %v2192
    %v2194 = vpop.f32.mrf.mxu0
    %v2195 = vadd.f32 %v2146, %v2194
    %2196 = vmatmul.bf16.gmra.mxu0 %v619
    %v2197 = vpop.f32.mrf.mxu0
    %v2198 = vadd.f32 %v2149, %v2197
    %v2199 = vpop.f32.mrf.mxu0
    %v2200 = vadd.f32 %v2151, %v2199
    %2201 = vmatmul.bf16.gmra.mxu0 %v629
    %v2202 = vpop.f32.mrf.mxu0
    %v2203 = vadd.f32 %v2154, %v2202
    %v2204 = vpop.f32.mrf.mxu0
    %v2205 = vadd.f32 %v2156, %v2204
    %2206 = vmatmul.bf16.gmra.mxu0 %v639
    %v2207 = vpop.f32.mrf.mxu0
    %v2208 = vadd.f32 %v2159, %v2207
    %v2209 = vpop.f32.mrf.mxu0
    %v2210 = vadd.f32 %v2161, %v2209
    %2211 = vdwg.mxu0
    %2212 = vmatpush.bf16.msra.mxu0 %v1285
    %2213 = vmatpush.bf16.msra.mxu0 %v1283
    %2214 = vmatpush.bf16.msra.mxu0 %v1281
    %2215 = vmatpush.bf16.msra.mxu0 %v1279
    %2216 = vmatpush.bf16.msra.mxu0 %v1277
    %2217 = vmatpush.bf16.msra.mxu0 %v1275
    %2218 = vmatpush.bf16.msra.mxu0 %v1273
    %2219 = vmatpush.bf16.msra.mxu0 %v1271
    %2220 = vmatmul.bf16.gmra.mxu0 %v570
    %v2221 = vpop.f32.mrf.mxu0
    %v2222 = vadd.f32 %v2173, %v2221
    %v2223 = vpop.f32.mrf.mxu0
    %v2224 = vadd.f32 %v2175, %v2223
    %2225 = vmatmul.bf16.gmra.mxu0 %v580
    %v2226 = vpop.f32.mrf.mxu0
    %v2227 = vadd.f32 %v2178, %v2226
    %v2228 = vpop.f32.mrf.mxu0
    %v2229 = vadd.f32 %v2180, %v2228
    %2230 = vmatmul.bf16.gmra.mxu0 %v590
    %v2231 = vpop.f32.mrf.mxu0
    %v2232 = vadd.f32 %v2183, %v2231
    %v2233 = vpop.f32.mrf.mxu0
    %v2234 = vadd.f32 %v2185, %v2233
    %2235 = vmatmul.bf16.gmra.mxu0 %v600
    %v2236 = vpop.f32.mrf.mxu0
    %v2237 = vadd.f32 %v2188, %v2236
    %v2238 = vpop.f32.mrf.mxu0
    %v2239 = vadd.f32 %v2190, %v2238
    %2240 = vmatmul.bf16.gmra.mxu0 %v610
    %v2241 = vpop.f32.mrf.mxu0
    %v2242 = vadd.f32 %v2193, %v2241
    %v2243 = vpop.f32.mrf.mxu0
    %v2244 = vadd.f32 %v2195, %v2243
    %2245 = vmatmul.bf16.gmra.mxu0 %v620
    %v2246 = vpop.f32.mrf.mxu0
    %v2247 = vadd.f32 %v2198, %v2246
    %v2248 = vpop.f32.mrf.mxu0
    %v2249 = vadd.f32 %v2200, %v2248
    %2250 = vmatmul.bf16.gmra.mxu0 %v630
    %v2251 = vpop.f32.mrf.mxu0
    %v2252 = vadd.f32 %v2203, %v2251
    %v2253 = vpop.f32.mrf.mxu0
    %v2254 = vadd.f32 %v2205, %v2253
    %2255 = vmatmul.bf16.gmra.mxu0 %v640
    %v2256 = vpop.f32.mrf.mxu0
    %v2257 = vadd.f32 %v2208, %v2256
    %v2258 = vpop.f32.mrf.mxu0
    %v2259 = vadd.f32 %v2210, %v2258
    %2260 = vdwg.mxu0
    %2261 = vmatpush.bf16.msra.mxu0 %v1301
    %2262 = vmatpush.bf16.msra.mxu0 %v1299
    %2263 = vmatpush.bf16.msra.mxu0 %v1297
    %2264 = vmatpush.bf16.msra.mxu0 %v1295
    %2265 = vmatpush.bf16.msra.mxu0 %v1293
    %2266 = vmatpush.bf16.msra.mxu0 %v1291
    %2267 = vmatpush.bf16.msra.mxu0 %v1289
    %2268 = vmatpush.bf16.msra.mxu0 %v1287
    %2269 = vmatmul.bf16.gmra.mxu0 %v571
    %v2270 = vpop.f32.mrf.mxu0
    %v2271 = vadd.f32 %v2222, %v2270
    %v2272 = vpop.f32.mrf.mxu0
    %v2273 = vadd.f32 %v2224, %v2272
    %2274 = vmatmul.bf16.gmra.mxu0 %v581
    %v2275 = vpop.f32.mrf.mxu0
    %v2276 = vadd.f32 %v2227, %v2275
    %v2277 = vpop.f32.mrf.mxu0
    %v2278 = vadd.f32 %v2229, %v2277
    %2279 = vmatmul.bf16.gmra.mxu0 %v591
    %v2280 = vpop.f32.mrf.mxu0
    %v2281 = vadd.f32 %v2232, %v2280
    %v2282 = vpop.f32.mrf.mxu0
    %v2283 = vadd.f32 %v2234, %v2282
    %2284 = vmatmul.bf16.gmra.mxu0 %v601
    %v2285 = vpop.f32.mrf.mxu0
    %v2286 = vadd.f32 %v2237, %v2285
    %v2287 = vpop.f32.mrf.mxu0
    %v2288 = vadd.f32 %v2239, %v2287
    %2289 = vmatmul.bf16.gmra.mxu0 %v611
    %v2290 = vpop.f32.mrf.mxu0
    %v2291 = vadd.f32 %v2242, %v2290
    %v2292 = vpop.f32.mrf.mxu0
    %v2293 = vadd.f32 %v2244, %v2292
    %2294 = vmatmul.bf16.gmra.mxu0 %v621
    %v2295 = vpop.f32.mrf.mxu0
    %v2296 = vadd.f32 %v2247, %v2295
    %v2297 = vpop.f32.mrf.mxu0
    %v2298 = vadd.f32 %v2249, %v2297
    %2299 = vmatmul.bf16.gmra.mxu0 %v631
    %v2300 = vpop.f32.mrf.mxu0
    %v2301 = vadd.f32 %v2252, %v2300
    %v2302 = vpop.f32.mrf.mxu0
    %v2303 = vadd.f32 %v2254, %v2302
    %2304 = vmatmul.bf16.gmra.mxu0 %v641
    %v2305 = vpop.f32.mrf.mxu0
    %v2306 = vadd.f32 %v2257, %v2305
    %v2307 = vpop.f32.mrf.mxu0
    %v2308 = vadd.f32 %v2259, %v2307
    %2309 = vdwg.mxu0
    %2310 = vmatpush.bf16.msra.mxu0 %v1317
    %2311 = vmatpush.bf16.msra.mxu0 %v1315
    %2312 = vmatpush.bf16.msra.mxu0 %v1313
    %2313 = vmatpush.bf16.msra.mxu0 %v1311
    %2314 = vmatpush.bf16.msra.mxu0 %v1309
    %2315 = vmatpush.bf16.msra.mxu0 %v1307
    %2316 = vmatpush.bf16.msra.mxu0 %v1305
    %2317 = vmatpush.bf16.msra.mxu0 %v1303
    %2318 = vmatmul.bf16.gmra.mxu0 %v572
    %v2319 = vpop.f32.mrf.mxu0
    %v2320 = vadd.f32 %v2271, %v2319
    %v2321 = vpop.f32.mrf.mxu0
    %v2322 = vadd.f32 %v2273, %v2321
    %2323 = vmatmul.bf16.gmra.mxu0 %v582
    %v2324 = vpop.f32.mrf.mxu0
    %v2325 = vadd.f32 %v2276, %v2324
    %v2326 = vpop.f32.mrf.mxu0
    %v2327 = vadd.f32 %v2278, %v2326
    %2328 = vmatmul.bf16.gmra.mxu0 %v592
    %v2329 = vpop.f32.mrf.mxu0
    %v2330 = vadd.f32 %v2281, %v2329
    %v2331 = vpop.f32.mrf.mxu0
    %v2332 = vadd.f32 %v2283, %v2331
    %2333 = vmatmul.bf16.gmra.mxu0 %v602
    %v2334 = vpop.f32.mrf.mxu0
    %v2335 = vadd.f32 %v2286, %v2334
    %v2336 = vpop.f32.mrf.mxu0
    %v2337 = vadd.f32 %v2288, %v2336
    %2338 = vmatmul.bf16.gmra.mxu0 %v612
    %v2339 = vpop.f32.mrf.mxu0
    %v2340 = vadd.f32 %v2291, %v2339
    %v2341 = vpop.f32.mrf.mxu0
    %v2342 = vadd.f32 %v2293, %v2341
    %2343 = vmatmul.bf16.gmra.mxu0 %v622
    %v2344 = vpop.f32.mrf.mxu0
    %v2345 = vadd.f32 %v2296, %v2344
    %v2346 = vpop.f32.mrf.mxu0
    %v2347 = vadd.f32 %v2298, %v2346
    %2348 = vmatmul.bf16.gmra.mxu0 %v632
    %v2349 = vpop.f32.mrf.mxu0
    %v2350 = vadd.f32 %v2301, %v2349
    %v2351 = vpop.f32.mrf.mxu0
    %v2352 = vadd.f32 %v2303, %v2351
    %2353 = vmatmul.bf16.gmra.mxu0 %v642
    %v2354 = vpop.f32.mrf.mxu0
    %v2355 = vadd.f32 %v2306, %v2354
    %v2356 = vpop.f32.mrf.mxu0
    %v2357 = vadd.f32 %v2308, %v2356
    %2358 = vdwg.mxu0
    %2359 = vmatpush.bf16.msra.mxu0 %v1333
    %2360 = vmatpush.bf16.msra.mxu0 %v1331
    %2361 = vmatpush.bf16.msra.mxu0 %v1329
    %2362 = vmatpush.bf16.msra.mxu0 %v1327
    %2363 = vmatpush.bf16.msra.mxu0 %v1325
    %2364 = vmatpush.bf16.msra.mxu0 %v1323
    %2365 = vmatpush.bf16.msra.mxu0 %v1321
    %2366 = vmatpush.bf16.msra.mxu0 %v1319
    %2367 = vmatmul.bf16.gmra.mxu0 %v573
    %v2368 = vpop.f32.mrf.mxu0
    %v2369 = vadd.f32 %v2320, %v2368
    %v2370 = vpop.f32.mrf.mxu0
    %v2371 = vadd.f32 %v2322, %v2370
    %2372 = vmatmul.bf16.gmra.mxu0 %v583
    %v2373 = vpop.f32.mrf.mxu0
    %v2374 = vadd.f32 %v2325, %v2373
    %v2375 = vpop.f32.mrf.mxu0
    %v2376 = vadd.f32 %v2327, %v2375
    %2377 = vmatmul.bf16.gmra.mxu0 %v593
    %v2378 = vpop.f32.mrf.mxu0
    %v2379 = vadd.f32 %v2330, %v2378
    %v2380 = vpop.f32.mrf.mxu0
    %v2381 = vadd.f32 %v2332, %v2380
    %2382 = vmatmul.bf16.gmra.mxu0 %v603
    %v2383 = vpop.f32.mrf.mxu0
    %v2384 = vadd.f32 %v2335, %v2383
    %v2385 = vpop.f32.mrf.mxu0
    %v2386 = vadd.f32 %v2337, %v2385
    %2387 = vmatmul.bf16.gmra.mxu0 %v613
    %v2388 = vpop.f32.mrf.mxu0
    %v2389 = vadd.f32 %v2340, %v2388
    %v2390 = vpop.f32.mrf.mxu0
    %v2391 = vadd.f32 %v2342, %v2390
    %2392 = vmatmul.bf16.gmra.mxu0 %v623
    %v2393 = vpop.f32.mrf.mxu0
    %v2394 = vadd.f32 %v2345, %v2393
    %v2395 = vpop.f32.mrf.mxu0
    %v2396 = vadd.f32 %v2347, %v2395
    %2397 = vmatmul.bf16.gmra.mxu0 %v633
    %v2398 = vpop.f32.mrf.mxu0
    %v2399 = vadd.f32 %v2350, %v2398
    %v2400 = vpop.f32.mrf.mxu0
    %v2401 = vadd.f32 %v2352, %v2400
    %2402 = vmatmul.bf16.gmra.mxu0 %v643
    %v2403 = vpop.f32.mrf.mxu0
    %v2404 = vadd.f32 %v2355, %v2403
    %v2405 = vpop.f32.mrf.mxu0
    %v2406 = vadd.f32 %v2357, %v2405
    %2407 = vdwg.mxu0
    %2408 = vmatpush.bf16.msra.mxu0 %v1349
    %2409 = vmatpush.bf16.msra.mxu0 %v1347
    %2410 = vmatpush.bf16.msra.mxu0 %v1345
    %2411 = vmatpush.bf16.msra.mxu0 %v1343
    %2412 = vmatpush.bf16.msra.mxu0 %v1341
    %2413 = vmatpush.bf16.msra.mxu0 %v1339
    %2414 = vmatpush.bf16.msra.mxu0 %v1337
    %2415 = vmatpush.bf16.msra.mxu0 %v1335
    %2416 = vmatmul.bf16.gmra.mxu0 %v574
    %v2417 = vpop.f32.mrf.mxu0
    %v2418 = vadd.f32 %v2369, %v2417
    %v2419 = vpop.f32.mrf.mxu0
    %v2420 = vadd.f32 %v2371, %v2419
    %2421 = vmatmul.bf16.gmra.mxu0 %v584
    %v2422 = vpop.f32.mrf.mxu0
    %v2423 = vadd.f32 %v2374, %v2422
    %v2424 = vpop.f32.mrf.mxu0
    %v2425 = vadd.f32 %v2376, %v2424
    %2426 = vmatmul.bf16.gmra.mxu0 %v594
    %v2427 = vpop.f32.mrf.mxu0
    %v2428 = vadd.f32 %v2379, %v2427
    %v2429 = vpop.f32.mrf.mxu0
    %v2430 = vadd.f32 %v2381, %v2429
    %2431 = vmatmul.bf16.gmra.mxu0 %v604
    %v2432 = vpop.f32.mrf.mxu0
    %v2433 = vadd.f32 %v2384, %v2432
    %v2434 = vpop.f32.mrf.mxu0
    %v2435 = vadd.f32 %v2386, %v2434
    %2436 = vmatmul.bf16.gmra.mxu0 %v614
    %v2437 = vpop.f32.mrf.mxu0
    %v2438 = vadd.f32 %v2389, %v2437
    %v2439 = vpop.f32.mrf.mxu0
    %v2440 = vadd.f32 %v2391, %v2439
    %2441 = vmatmul.bf16.gmra.mxu0 %v624
    %v2442 = vpop.f32.mrf.mxu0
    %v2443 = vadd.f32 %v2394, %v2442
    %v2444 = vpop.f32.mrf.mxu0
    %v2445 = vadd.f32 %v2396, %v2444
    %2446 = vmatmul.bf16.gmra.mxu0 %v634
    %v2447 = vpop.f32.mrf.mxu0
    %v2448 = vadd.f32 %v2399, %v2447
    %v2449 = vpop.f32.mrf.mxu0
    %v2450 = vadd.f32 %v2401, %v2449
    %2451 = vmatmul.bf16.gmra.mxu0 %v644
    %v2452 = vpop.f32.mrf.mxu0
    %v2453 = vadd.f32 %v2404, %v2452
    %v2454 = vpop.f32.mrf.mxu0
    %v2455 = vadd.f32 %v2406, %v2454
    %2456 = vdwg.mxu0
    %2457 = vmatpush.bf16.msra.mxu0 %v1365
    %2458 = vmatpush.bf16.msra.mxu0 %v1363
    %2459 = vmatpush.bf16.msra.mxu0 %v1361
    %2460 = vmatpush.bf16.msra.mxu0 %v1359
    %2461 = vmatpush.bf16.msra.mxu0 %v1357
    %2462 = vmatpush.bf16.msra.mxu0 %v1355
    %2463 = vmatpush.bf16.msra.mxu0 %v1353
    %2464 = vmatpush.bf16.msra.mxu0 %v1351
    %2465 = vmatmul.bf16.gmra.mxu0 %v575
    %v2466 = vpop.f32.mrf.mxu0
    %v2467 = vadd.f32 %v2418, %v2466
    %v2468 = vpop.f32.mrf.mxu0
    %v2469 = vadd.f32 %v2420, %v2468
    %2470 = vmatmul.bf16.gmra.mxu0 %v585
    %v2471 = vpop.f32.mrf.mxu0
    %v2472 = vadd.f32 %v2423, %v2471
    %v2473 = vpop.f32.mrf.mxu0
    %v2474 = vadd.f32 %v2425, %v2473
    %2475 = vmatmul.bf16.gmra.mxu0 %v595
    %v2476 = vpop.f32.mrf.mxu0
    %v2477 = vadd.f32 %v2428, %v2476
    %v2478 = vpop.f32.mrf.mxu0
    %v2479 = vadd.f32 %v2430, %v2478
    %2480 = vmatmul.bf16.gmra.mxu0 %v605
    %v2481 = vpop.f32.mrf.mxu0
    %v2482 = vadd.f32 %v2433, %v2481
    %v2483 = vpop.f32.mrf.mxu0
    %v2484 = vadd.f32 %v2435, %v2483
    %2485 = vmatmul.bf16.gmra.mxu0 %v615
    %v2486 = vpop.f32.mrf.mxu0
    %v2487 = vadd.f32 %v2438, %v2486
    %v2488 = vpop.f32.mrf.mxu0
    %v2489 = vadd.f32 %v2440, %v2488
    %2490 = vmatmul.bf16.gmra.mxu0 %v625
    %v2491 = vpop.f32.mrf.mxu0
    %v2492 = vadd.f32 %v2443, %v2491
    %v2493 = vpop.f32.mrf.mxu0
    %v2494 = vadd.f32 %v2445, %v2493
    %2495 = vmatmul.bf16.gmra.mxu0 %v635
    %v2496 = vpop.f32.mrf.mxu0
    %v2497 = vadd.f32 %v2448, %v2496
    %v2498 = vpop.f32.mrf.mxu0
    %v2499 = vadd.f32 %v2450, %v2498
    %2500 = vmatmul.bf16.gmra.mxu0 %v645
    %v2501 = vpop.f32.mrf.mxu0
    %v2502 = vadd.f32 %v2453, %v2501
    %v2503 = vpop.f32.mrf.mxu0
    %v2504 = vadd.f32 %v2455, %v2503
    %2505 = vdwg.mxu0
    %v2506 = vld [vmem:[%s2] sm:$0xff]
    %v2507 = vld [vmem:[%s2 + $0x8] sm:$0xff]
    %v2508 = vld [vmem:[%s2 + $0x10] sm:$0xff]
    %v2509 = vld [vmem:[%s2 + $0x18] sm:$0xff]
    %v2510 = vld [vmem:[%s2 + $0x20] sm:$0xff]
    %v2511 = vld [vmem:[%s2 + $0x28] sm:$0xff]
    %v2512 = vld [vmem:[%s2 + $0x30] sm:$0xff]
    %v2513 = vld [vmem:[%s2 + $0x38] sm:$0xff]
    %v2514 = vld [vmem:[%s2 + $0x40] sm:$0xff]
    %v2515 = vld [vmem:[%s2 + $0x48] sm:$0xff]
    %v2516 = vld [vmem:[%s2 + $0x50] sm:$0xff]
    %v2517 = vld [vmem:[%s2 + $0x58] sm:$0xff]
    %v2518 = vld [vmem:[%s2 + $0x60] sm:$0xff]
    %v2519 = vld [vmem:[%s2 + $0x68] sm:$0xff]
    %v2520 = vld [vmem:[%s2 + $0x70] sm:$0xff]
    %v2521 = vld [vmem:[%s2 + $0x78] sm:$0xff]
    %v2522 = vld [vmem:[%s4] sm:$0x3]
    %v2524 = vperm.slane %v2522, 0
    %v2525 = vperm.slane %v2522, 1
    %v2544 = vunpack.c.l.b16 %v69
    %v2545 = vunpack.c.l.b16 %v75
    %v2546 = vunpack.c.l.b16 %v81
    %v2547 = vunpack.c.l.b16 %v87
    %v2548 = vunpack.c.l.b16 %v93
    %v2549 = vunpack.c.l.b16 %v99
    %v2550 = vunpack.c.l.b16 %v105
    %v2551 = vunpack.c.l.b16 %v111
    %v2552 = vunpack.c.l.b16 %v117
    %v2553 = vunpack.c.l.b16 %v123
    %v2554 = vunpack.c.l.b16 %v129
    %v2555 = vunpack.c.l.b16 %v135
    %v2556 = vunpack.c.l.b16 %v141
    %v2557 = vunpack.c.l.b16 %v147
    %v2558 = vunpack.c.l.b16 %v153
    %v2559 = vunpack.c.l.b16 %v159
    %v2560 = vpack.c.b16 %v2545, %v2544
    %v2561 = vpack.c.b16 %v2547, %v2546
    %v2562 = vpack.c.b16 %v2549, %v2548
    %v2563 = vpack.c.b16 %v2551, %v2550
    %v2564 = vpack.c.b16 %v2553, %v2552
    %v2565 = vpack.c.b16 %v2555, %v2554
    %v2566 = vpack.c.b16 %v2557, %v2556
    %v2567 = vpack.c.b16 %v2559, %v2558
    %v2592 = vunpack.c.l.b16 %v2506
    %v2593 = vunpack.c.h.b16 %v2506
    %v2594 = vunpack.c.l.b16 %v2507
    %v2595 = vunpack.c.h.b16 %v2507
    %v2596 = vunpack.c.l.b16 %v2508
    %v2597 = vunpack.c.h.b16 %v2508
    %v2598 = vunpack.c.l.b16 %v2509
    %v2599 = vunpack.c.h.b16 %v2509
    %v2600 = vunpack.c.l.b16 %v2510
    %v2601 = vunpack.c.h.b16 %v2510
    %v2602 = vunpack.c.l.b16 %v2511
    %v2603 = vunpack.c.h.b16 %v2511
    %v2604 = vunpack.c.l.b16 %v2512
    %v2605 = vunpack.c.h.b16 %v2512
    %v2606 = vunpack.c.l.b16 %v2513
    %v2607 = vunpack.c.h.b16 %v2513
    %v2608 = vunpack.c.l.b16 %v2514
    %v2609 = vunpack.c.h.b16 %v2514
    %v2610 = vunpack.c.l.b16 %v2515
    %v2611 = vunpack.c.h.b16 %v2515
    %v2612 = vunpack.c.l.b16 %v2516
    %v2613 = vunpack.c.h.b16 %v2516
    %v2614 = vunpack.c.l.b16 %v2517
    %v2615 = vunpack.c.h.b16 %v2517
    %v2616 = vunpack.c.l.b16 %v2518
    %v2617 = vunpack.c.h.b16 %v2518
    %v2618 = vunpack.c.l.b16 %v2519
    %v2619 = vunpack.c.h.b16 %v2519
    %v2620 = vunpack.c.l.b16 %v2520
    %v2621 = vunpack.c.h.b16 %v2520
    %v2622 = vunpack.c.l.b16 %v2521
    %v2623 = vunpack.c.h.b16 %v2521
    %v2624 = vpack.c.b16 %v2594, %v2592
    %v2625 = vpack.c.b16 %v2595, %v2593
    %v2626 = vpack.c.b16 %v2598, %v2596
    %v2627 = vpack.c.b16 %v2599, %v2597
    %v2628 = vpack.c.b16 %v2602, %v2600
    %v2629 = vpack.c.b16 %v2603, %v2601
    %v2630 = vpack.c.b16 %v2606, %v2604
    %v2631 = vpack.c.b16 %v2607, %v2605
    %v2632 = vpack.c.b16 %v2610, %v2608
    %v2633 = vpack.c.b16 %v2611, %v2609
    %v2634 = vpack.c.b16 %v2614, %v2612
    %v2635 = vpack.c.b16 %v2615, %v2613
    %v2636 = vpack.c.b16 %v2618, %v2616
    %v2637 = vpack.c.b16 %v2619, %v2617
    %v2638 = vpack.c.b16 %v2622, %v2620
    %v2639 = vpack.c.b16 %v2623, %v2621
    %2656 = vmatpush.bf16.msra.mxu0 %v2638
    %2657 = vmatpush.bf16.msra.mxu0 %v2636
    %2658 = vmatpush.bf16.msra.mxu0 %v2634
    %2659 = vmatpush.bf16.msra.mxu0 %v2632
    %2660 = vmatpush.bf16.msra.mxu0 %v2630
    %2661 = vmatpush.bf16.msra.mxu0 %v2628
    %2662 = vmatpush.bf16.msra.mxu0 %v2626
    %2663 = vmatpush.bf16.msra.mxu0 %v2624
    %2664 = vmatmul.bf16.gmra.mxu0 %v2560
    %v2665 = vpop.f32.mrf.mxu0
    %v2666 = vadd.f32 %v2524, %v2665
    %v2667 = vpop.f32.mrf.mxu0
    %v2668 = vadd.f32 %v2524, %v2667
    %2669 = vmatmul.bf16.gmra.mxu0 %v2561
    %v2670 = vpop.f32.mrf.mxu0
    %v2671 = vadd.f32 %v2524, %v2670
    %v2672 = vpop.f32.mrf.mxu0
    %v2673 = vadd.f32 %v2524, %v2672
    %2674 = vmatmul.bf16.gmra.mxu0 %v2562
    %v2675 = vpop.f32.mrf.mxu0
    %v2676 = vadd.f32 %v2524, %v2675
    %v2677 = vpop.f32.mrf.mxu0
    %v2678 = vadd.f32 %v2524, %v2677
    %2679 = vmatmul.bf16.gmra.mxu0 %v2563
    %v2680 = vpop.f32.mrf.mxu0
    %v2681 = vadd.f32 %v2524, %v2680
    %v2682 = vpop.f32.mrf.mxu0
    %v2683 = vadd.f32 %v2524, %v2682
    %2684 = vmatmul.bf16.gmra.mxu0 %v2564
    %v2685 = vpop.f32.mrf.mxu0
    %v2686 = vadd.f32 %v2524, %v2685
    %v2687 = vpop.f32.mrf.mxu0
    %v2688 = vadd.f32 %v2524, %v2687
    %2689 = vmatmul.bf16.gmra.mxu0 %v2565
    %v2690 = vpop.f32.mrf.mxu0
    %v2691 = vadd.f32 %v2524, %v2690
    %v2692 = vpop.f32.mrf.mxu0
    %v2693 = vadd.f32 %v2524, %v2692
    %2694 = vmatmul.bf16.gmra.mxu0 %v2566
    %v2695 = vpop.f32.mrf.mxu0
    %v2696 = vadd.f32 %v2524, %v2695
    %v2697 = vpop.f32.mrf.mxu0
    %v2698 = vadd.f32 %v2524, %v2697
    %2699 = vmatmul.bf16.gmra.mxu0 %v2567
    %v2700 = vpop.f32.mrf.mxu0
    %v2701 = vadd.f32 %v2524, %v2700
    %v2702 = vpop.f32.mrf.mxu0
    %v2703 = vadd.f32 %v2524, %v2702
    %2704 = vdwg.mxu0
    %2705 = vmatpush.bf16.msra.mxu0 %v2639
    %2706 = vmatpush.bf16.msra.mxu0 %v2637
    %2707 = vmatpush.bf16.msra.mxu0 %v2635
    %2708 = vmatpush.bf16.msra.mxu0 %v2633
    %2709 = vmatpush.bf16.msra.mxu0 %v2631
    %2710 = vmatpush.bf16.msra.mxu0 %v2629
    %2711 = vmatpush.bf16.msra.mxu0 %v2627
    %2712 = vmatpush.bf16.msra.mxu0 %v2625
    %2713 = vmatmul.bf16.gmra.mxu0 %v2560
    %v2714 = vpop.f32.mrf.mxu0
    %v2715 = vadd.f32 %v2525, %v2714
    %v2716 = vpop.f32.mrf.mxu0
    %v2717 = vadd.f32 %v2525, %v2716
    %2718 = vmatmul.bf16.gmra.mxu0 %v2561
    %v2719 = vpop.f32.mrf.mxu0
    %v2720 = vadd.f32 %v2525, %v2719
    %v2721 = vpop.f32.mrf.mxu0
    %v2722 = vadd.f32 %v2525, %v2721
    %2723 = vmatmul.bf16.gmra.mxu0 %v2562
    %v2724 = vpop.f32.mrf.mxu0
    %v2725 = vadd.f32 %v2525, %v2724
    %v2726 = vpop.f32.mrf.mxu0
    %v2727 = vadd.f32 %v2525, %v2726
    %2728 = vmatmul.bf16.gmra.mxu0 %v2563
    %v2729 = vpop.f32.mrf.mxu0
    %v2730 = vadd.f32 %v2525, %v2729
    %v2731 = vpop.f32.mrf.mxu0
    %v2732 = vadd.f32 %v2525, %v2731
    %2733 = vmatmul.bf16.gmra.mxu0 %v2564
    %v2734 = vpop.f32.mrf.mxu0
    %v2735 = vadd.f32 %v2525, %v2734
    %v2736 = vpop.f32.mrf.mxu0
    %v2737 = vadd.f32 %v2525, %v2736
    %2738 = vmatmul.bf16.gmra.mxu0 %v2565
    %v2739 = vpop.f32.mrf.mxu0
    %v2740 = vadd.f32 %v2525, %v2739
    %v2741 = vpop.f32.mrf.mxu0
    %v2742 = vadd.f32 %v2525, %v2741
    %2743 = vmatmul.bf16.gmra.mxu0 %v2566
    %v2744 = vpop.f32.mrf.mxu0
    %v2745 = vadd.f32 %v2525, %v2744
    %v2746 = vpop.f32.mrf.mxu0
    %v2747 = vadd.f32 %v2525, %v2746
    %2748 = vmatmul.bf16.gmra.mxu0 %v2567
    %v2749 = vpop.f32.mrf.mxu0
    %v2750 = vadd.f32 %v2525, %v2749
    %v2751 = vpop.f32.mrf.mxu0
    %v2752 = vadd.f32 %v2525, %v2751
    %2753 = vdwg.mxu0
    %v2754 = vlaneseq
    %v2755 = vand.u32 %v2754, 127
    %v2756 = vadd.s32 %v2755, 128
    %vm2757 = vcmp.lt.s32.totalorder %v2755, 0
    %v2758 = vsub.s32 0, %v2755
    %v2759 = vsel %vm2757, %v2758, %v2755
    %v2760 = vshrl.u32 %v2759, 6
    %v2761 = vand.u32 %v2759, 63
    %v2762 = vsub.s32 0, %v2761
    %v2763 = vsel %vm2757, %v2762, %v2761
    %vm2764 = vcmp.lt.s32.totalorder %v2756, 0
    %v2765 = vsub.s32 0, %v2756
    %v2766 = vsel %vm2764, %v2765, %v2756
    %v2767 = vshrl.u32 %v2766, 6
    %v2768 = vand.u32 %v2766, 63
    %v2769 = vsub.s32 0, %v2768
    %v2770 = vsel %vm2764, %v2769, %v2768
    %vm2771 = vcmp.ne.s32.totalorder %v2763, 0
    %vm2772 = vcmp.ne.s32.totalorder %v2770, 0
    %vm2773 = vcmp.lt.s32.totalorder %v2763, 0
    %vm2774 = vcmp.lt.s32.totalorder %v2770, 0
    %vm2775 = vmand %vm2773, %vm2771
    %vm2776 = vmand %vm2774, %vm2772
    %v2777 = vadd.s32 %v2763, 64
    %v2778 = vadd.s32 %v2770, 64
    %v2779 = vsel %vm2775, %v2777, %v2763
    %v2780 = vsel %vm2776, %v2778, %v2770
    %vm2781 = vcmp.lt.s32.totalorder %v2779, 32
    %vm2782 = vcmp.lt.s32.totalorder %v2780, 32
    %v2783 = vsel %vm2781, %v1977, %v2012
    %v2784 = vsel %vm2782, %v2467, %v2502
    %v2785 = vsel %vm2781, %v1979, %v2014
    %v2786 = vsel %vm2782, %v2469, %v2504
    %v2787 = vsel %vm2781, %v1982, %v2007
    %v2788 = vsel %vm2782, %v2472, %v2497
    %v2789 = vsel %vm2781, %v1984, %v2009
    %v2790 = vsel %vm2782, %v2474, %v2499
    %v2791 = vsel %vm2781, %v1987, %v2002
    %v2792 = vsel %vm2782, %v2477, %v2492
    %v2793 = vsel %vm2781, %v1989, %v2004
    %v2794 = vsel %vm2782, %v2479, %v2494
    %v2795 = vsel %vm2781, %v1992, %v1997
    %v2796 = vsel %vm2782, %v2482, %v2487
    %v2797 = vsel %vm2781, %v1994, %v1999
    %v2798 = vsel %vm2782, %v2484, %v2489
    %v2799 = vsel %vm2781, %v1997, %v1992
    %v2800 = vsel %vm2782, %v2487, %v2482
    %v2801 = vsel %vm2781, %v1999, %v1994
    %v2802 = vsel %vm2782, %v2489, %v2484
    %v2803 = vsel %vm2781, %v2002, %v1987
    %v2804 = vsel %vm2782, %v2492, %v2477
    %v2805 = vsel %vm2781, %v2004, %v1989
    %v2806 = vsel %vm2782, %v2494, %v2479
    %v2807 = vsel %vm2781, %v2007, %v1982
    %v2808 = vsel %vm2782, %v2497, %v2472
    %v2809 = vsel %vm2781, %v2009, %v1984
    %v2810 = vsel %vm2782, %v2499, %v2474
    %v2811 = vsel %vm2781, %v2012, %v1977
    %v2812 = vsel %vm2782, %v2502, %v2467
    %v2813 = vsel %vm2781, %v2014, %v1979
    %v2814 = vsel %vm2782, %v2504, %v2469
    %v2815 = vsel %vm2781, %v2666, %v2701
    %v2816 = vsel %vm2782, %v2715, %v2750
    %v2817 = vsel %vm2781, %v2668, %v2703
    %v2818 = vsel %vm2782, %v2717, %v2752
    %v2819 = vsel %vm2781, %v2671, %v2696
    %v2820 = vsel %vm2782, %v2720, %v2745
    %v2821 = vsel %vm2781, %v2673, %v2698
    %v2822 = vsel %vm2782, %v2722, %v2747
    %v2823 = vsel %vm2781, %v2676, %v2691
    %v2824 = vsel %vm2782, %v2725, %v2740
    %v2825 = vsel %vm2781, %v2678, %v2693
    %v2826 = vsel %vm2782, %v2727, %v2742
    %v2827 = vsel %vm2781, %v2681, %v2686
    %v2828 = vsel %vm2782, %v2730, %v2735
    %v2829 = vsel %vm2781, %v2683, %v2688
    %v2830 = vsel %vm2782, %v2732, %v2737
    %v2831 = vsel %vm2781, %v2686, %v2681
    %v2832 = vsel %vm2782, %v2735, %v2730
    %v2833 = vsel %vm2781, %v2688, %v2683
    %v2834 = vsel %vm2782, %v2737, %v2732
    %v2835 = vsel %vm2781, %v2691, %v2676
    %v2836 = vsel %vm2782, %v2740, %v2725
    %v2837 = vsel %vm2781, %v2693, %v2678
    %v2838 = vsel %vm2782, %v2742, %v2727
    %v2839 = vsel %vm2781, %v2696, %v2671
    %v2840 = vsel %vm2782, %v2745, %v2720
    %v2841 = vsel %vm2781, %v2698, %v2673
    %v2842 = vsel %vm2782, %v2747, %v2722
    %v2843 = vsel %vm2781, %v2701, %v2666
    %v2844 = vsel %vm2782, %v2750, %v2715
    %v2845 = vsel %vm2781, %v2703, %v2668
    %v2846 = vsel %vm2782, %v2752, %v2717
    %v2847 = vld [vmem:[%s5] sm:$0xff]
    %v2848 = vld [vmem:[%s5 + $0x8] sm:$0xff]
    %v2849 = vld [vmem:[%s5 + $0x10] sm:$0xff]
    %v2850 = vld [vmem:[%s5 + $0x18] sm:$0xff]
    %v2851 = vld [vmem:[%s5 + $0x20] sm:$0xff]
    %v2852 = vld [vmem:[%s5 + $0x28] sm:$0xff]
    %v2853 = vld [vmem:[%s5 + $0x30] sm:$0xff]
    %v2854 = vld [vmem:[%s5 + $0x38] sm:$0xff]
    %v2855 = vld [vmem:[%s6] sm:$0xff]
    %v2856 = vld [vmem:[%s6 + $0x8] sm:$0xff]
    %v2857 = vld [vmem:[%s6 + $0x10] sm:$0xff]
    %v2858 = vld [vmem:[%s6 + $0x18] sm:$0xff]
    %v2859 = vld [vmem:[%s6 + $0x20] sm:$0xff]
    %v2860 = vld [vmem:[%s6 + $0x28] sm:$0xff]
    %v2861 = vld [vmem:[%s6 + $0x30] sm:$0xff]
    %v2862 = vld [vmem:[%s6 + $0x38] sm:$0xff]
    %v2871 = vunpack.c.l.b16 %v2847
    %v2872 = vunpack.c.h.b16 %v2847
    %v2873 = vunpack.c.l.b16 %v2848
    %v2874 = vunpack.c.h.b16 %v2848
    %v2875 = vunpack.c.l.b16 %v2849
    %v2876 = vunpack.c.h.b16 %v2849
    %v2877 = vunpack.c.l.b16 %v2850
    %v2878 = vunpack.c.h.b16 %v2850
    %v2879 = vunpack.c.l.b16 %v2851
    %v2880 = vunpack.c.h.b16 %v2851
    %v2881 = vunpack.c.l.b16 %v2852
    %v2882 = vunpack.c.h.b16 %v2852
    %v2883 = vunpack.c.l.b16 %v2853
    %v2884 = vunpack.c.h.b16 %v2853
    %v2885 = vunpack.c.l.b16 %v2854
    %v2886 = vunpack.c.h.b16 %v2854
    %v2887 = vpack.c.b16 %v2873, %v2871
    %v2888 = vpack.c.b16 %v2874, %v2872
    %v2889 = vpack.c.b16 %v2877, %v2875
    %v2890 = vpack.c.b16 %v2878, %v2876
    %v2891 = vpack.c.b16 %v2881, %v2879
    %v2892 = vpack.c.b16 %v2882, %v2880
    %v2893 = vpack.c.b16 %v2885, %v2883
    %v2894 = vpack.c.b16 %v2886, %v2884
    %vm2903 = vcmask 523264
    %v2905 = vsel %vm2903, 0, 0
    %2907 = vmatpush.bf16.msra.mxu0 0
    %2908 = vmatpush.bf16.msra.mxu0 0
    %2909 = vmatpush.bf16.msra.mxu0 0
    %2910 = vmatpush.bf16.msra.mxu0 0
    %2911 = vmatpush.bf16.msra.mxu0 %v2893
    %2912 = vmatpush.bf16.msra.mxu0 %v2891
    %2913 = vmatpush.bf16.msra.mxu0 %v2889
    %2914 = vmatpush.bf16.msra.mxu0 %v2887
    %2915 = vmatmul.bf16.gmra.mxu0 %v2905
    %v2916 = vpop.f32.mrf.mxu0
    %v2917 = vadd.f32 0.0, %v2916
    %v2918 = vpop.f32.mrf.mxu0
    %v2919 = vadd.f32 0.0, %v2918
    %2920 = vdwg.mxu0
    %2921 = vmatpush.bf16.msra.mxu0 0
    %2922 = vmatpush.bf16.msra.mxu0 0
    %2923 = vmatpush.bf16.msra.mxu0 0
    %2924 = vmatpush.bf16.msra.mxu0 0
    %2925 = vmatpush.bf16.msra.mxu0 %v2894
    %2926 = vmatpush.bf16.msra.mxu0 %v2892
    %2927 = vmatpush.bf16.msra.mxu0 %v2890
    %2928 = vmatpush.bf16.msra.mxu0 %v2888
    %2929 = vmatmul.bf16.gmra.mxu0 %v2905
    %v2930 = vpop.f32.mrf.mxu0
    %v2931 = vadd.f32 0.0, %v2930
    %v2932 = vpop.f32.mrf.mxu0
    %v2933 = vadd.f32 0.0, %v2932
    %2934 = vdwg.mxu0
    %v2935 = vadd.f32 %v2783, %v2917
    %v2936 = vadd.f32 %v2784, %v2931
    %v2937 = vadd.f32 %v2785, %v2919
    %v2938 = vadd.f32 %v2786, %v2933
    %v2939 = vxor.u32 %v2935, 2147483648
    %v2940 = vxor.u32 %v2937, 2147483648
    %v2941 = vmul.f32 %v2939, 1.442695
    %v2942 = vpow.pop %v2941
    %v2943 = vmul.f32 %v2940, 1.442695
    %v2944 = vpow.pop %v2943
    %v2945 = vadd.f32 %v2942, 1.0
    %v2946 = vadd.f32 %v2944, 1.0
    %v2947 = vrcp.pop %v2945
    %v2948 = vmul.f32 %v2945, %v2947
    %v2949 = vsub.f32 1.0, %v2948
    %v2950 = vmul.f32 %v2947, %v2949
    %v2951 = vadd.f32 %v2947, %v2950
    %vm2952 = vweird.f32 %v2945
    %vm2953 = vweird.f32 %v2947
    %vm2954 = vmor %vm2952, %vm2953
    %v2955 = vsel %vm2954, %v2947, %v2951
    %v2956 = vand.u32 2147483647, %v2945
    %vm2957 = vcmp.eq.f32.partialorder %v2956, 8.507059e+37
    %v2958 = vand.u32 %v2945, 2147483648
    %v2959 = vor.u32 1.1754944e-38, %v2958
    %v2960 = vsel %vm2957, %v2959, %v2955
    %v2961 = vmul.f32 1.0, %v2960
    %v2962 = vrcp.pop %v2946
    %v2963 = vmul.f32 %v2946, %v2962
    %v2964 = vsub.f32 1.0, %v2963
    %v2965 = vmul.f32 %v2962, %v2964
    %v2966 = vadd.f32 %v2962, %v2965
    %vm2967 = vweird.f32 %v2946
    %vm2968 = vweird.f32 %v2962
    %vm2969 = vmor %vm2967, %vm2968
    %v2970 = vsel %vm2969, %v2962, %v2966
    %v2971 = vand.u32 2147483647, %v2946
    %vm2972 = vcmp.eq.f32.partialorder %v2971, 8.507059e+37
    %v2973 = vand.u32 %v2946, 2147483648
    %v2974 = vor.u32 1.1754944e-38, %v2973
    %v2975 = vsel %vm2972, %v2974, %v2970
    %v2976 = vmul.f32 1.0, %v2975
    %v2977 = vtanh.pop %v2936
    %v2978 = vtanh.pop %v2938
    %v2979 = vxor.u32 %v2936, 2147483648
    %v2980 = vxor.u32 %v2938, 2147483648
    %v2981 = vmul.f32 %v2979, 1.442695
    %v2982 = vpow.pop %v2981
    %v2983 = vmul.f32 %v2980, 1.442695
    %v2984 = vpow.pop %v2983
    %v2985 = vadd.f32 %v2982, 1.0
    %v2986 = vadd.f32 %v2984, 1.0
    %v2987 = vrcp.pop %v2985
    %v2988 = vmul.f32 %v2985, %v2987
    %v2989 = vsub.f32 1.0, %v2988
    %v2990 = vmul.f32 %v2987, %v2989
    %v2991 = vadd.f32 %v2987, %v2990
    %vm2992 = vweird.f32 %v2985
    %vm2993 = vweird.f32 %v2987
    %vm2994 = vmor %vm2992, %vm2993
    %v2995 = vsel %vm2994, %v2987, %v2991
    %v2996 = vand.u32 2147483647, %v2985
    %vm2997 = vcmp.eq.f32.partialorder %v2996, 8.507059e+37
    %v2998 = vand.u32 %v2985, 2147483648
    %v2999 = vor.u32 1.1754944e-38, %v2998
    %v3000 = vsel %vm2997, %v2999, %v2995
    %v3001 = vmul.f32 1.0, %v3000
    %v3002 = vrcp.pop %v2986
    %v3003 = vmul.f32 %v2986, %v3002
    %v3004 = vsub.f32 1.0, %v3003
    %v3005 = vmul.f32 %v3002, %v3004
    %v3006 = vadd.f32 %v3002, %v3005
    %vm3007 = vweird.f32 %v2986
    %vm3008 = vweird.f32 %v3002
    %vm3009 = vmor %vm3007, %vm3008
    %v3010 = vsel %vm3009, %v3002, %v3006
    %v3011 = vand.u32 2147483647, %v2986
    %vm3012 = vcmp.eq.f32.partialorder %v3011, 8.507059e+37
    %v3013 = vand.u32 %v2986, 2147483648
    %v3014 = vor.u32 1.1754944e-38, %v3013
    %v3015 = vsel %vm3012, %v3014, %v3010
    %v3016 = vmul.f32 1.0, %v3015
    %v3017 = vmul.f32 %v2961, 0.0
    %v3018 = vmul.f32 %v2976, 0.0
    %v3019 = vmul.f32 %v2961, %v2977
    %v3020 = vmul.f32 %v2976, %v2978
    %3023 = vrot.lane.b32.xlu0 %v3019, 64
    %v3024 = vpop.permute.xlu0 %3023
    %3025 = vrot.lane.b32.xlu0 %v3020, 64
    %v3026 = vpop.permute.xlu0 %3025
    %v3029 = vadd.f32 %v3017, %v3024
    %v3030 = vadd.f32 %v3018, %v3026
    %v3031 = vtanh.pop %v3029
    %v3032 = vtanh.pop %v3030
    %v3033 = vmul.f32 %v3001, %v3031
    %v3034 = vmul.f32 %v3016, %v3032
    %v3043 = vunpack.c.l.b16 %v2855
    %v3044 = vunpack.c.h.b16 %v2855
    %v3045 = vunpack.c.l.b16 %v2856
    %v3046 = vunpack.c.h.b16 %v2856
    %v3047 = vunpack.c.l.b16 %v2857
    %v3048 = vunpack.c.h.b16 %v2857
    %v3049 = vunpack.c.l.b16 %v2858
    %v3050 = vunpack.c.h.b16 %v2858
    %v3051 = vunpack.c.l.b16 %v2859
    %v3052 = vunpack.c.h.b16 %v2859
    %v3053 = vunpack.c.l.b16 %v2860
    %v3054 = vunpack.c.h.b16 %v2860
    %v3055 = vunpack.c.l.b16 %v2861
    %v3056 = vunpack.c.h.b16 %v2861
    %v3057 = vunpack.c.l.b16 %v2862
    %v3058 = vunpack.c.h.b16 %v2862
    %v3059 = vpack.c.b16 %v3045, %v3043
    %v3060 = vpack.c.b16 %v3046, %v3044
    %v3061 = vpack.c.b16 %v3049, %v3047
    %v3062 = vpack.c.b16 %v3050, %v3048
    %v3063 = vpack.c.b16 %v3053, %v3051
    %v3064 = vpack.c.b16 %v3054, %v3052
    %v3065 = vpack.c.b16 %v3057, %v3055
    %v3066 = vpack.c.b16 %v3058, %v3056
    %3075 = vmatpush.bf16.msra.mxu0 0
    %3076 = vmatpush.bf16.msra.mxu0 0
    %3077 = vmatpush.bf16.msra.mxu0 0
    %3078 = vmatpush.bf16.msra.mxu0 0
    %3079 = vmatpush.bf16.msra.mxu0 %v3065
    %3080 = vmatpush.bf16.msra.mxu0 %v3063
    %3081 = vmatpush.bf16.msra.mxu0 %v3061
    %3082 = vmatpush.bf16.msra.mxu0 %v3059
    %3083 = vmatmul.bf16.gmra.mxu0 %v2905
    %v3084 = vpop.f32.mrf.mxu0
    %v3085 = vadd.f32 0.0, %v3084
    %v3086 = vpop.f32.mrf.mxu0
    %v3087 = vadd.f32 0.0, %v3086
    %3088 = vdwg.mxu0
    %3089 = vmatpush.bf16.msra.mxu0 0
    %3090 = vmatpush.bf16.msra.mxu0 0
    %3091 = vmatpush.bf16.msra.mxu0 0
    %3092 = vmatpush.bf16.msra.mxu0 0
    %3093 = vmatpush.bf16.msra.mxu0 %v3066
    %3094 = vmatpush.bf16.msra.mxu0 %v3064
    %3095 = vmatpush.bf16.msra.mxu0 %v3062
    %3096 = vmatpush.bf16.msra.mxu0 %v3060
    %3097 = vmatmul.bf16.gmra.mxu0 %v2905
    %v3098 = vpop.f32.mrf.mxu0
    %v3099 = vadd.f32 0.0, %v3098
    %v3100 = vpop.f32.mrf.mxu0
    %v3101 = vadd.f32 0.0, %v3100
    %3102 = vdwg.mxu0
    %v3103 = vadd.f32 %v2815, %v3085
    %v3104 = vadd.f32 %v2816, %v3099
    %v3105 = vadd.f32 %v2817, %v3087
    %v3106 = vadd.f32 %v2818, %v3101
    %v3107 = vxor.u32 %v3103, 2147483648
    %v3108 = vxor.u32 %v3105, 2147483648
    %v3109 = vmul.f32 %v3107, 1.442695
    %v3110 = vpow.pop %v3109
    %v3111 = vmul.f32 %v3108, 1.442695
    %v3112 = vpow.pop %v3111
    %v3113 = vadd.f32 %v3110, 1.0
    %v3114 = vadd.f32 %v3112, 1.0
    %v3115 = vrcp.pop %v3113
    %v3116 = vmul.f32 %v3113, %v3115
    %v3117 = vsub.f32 1.0, %v3116
    %v3118 = vmul.f32 %v3115, %v3117
    %v3119 = vadd.f32 %v3115, %v3118
    %vm3120 = vweird.f32 %v3113
    %vm3121 = vweird.f32 %v3115
    %vm3122 = vmor %vm3120, %vm3121
    %v3123 = vsel %vm3122, %v3115, %v3119
    %v3124 = vand.u32 2147483647, %v3113
    %vm3125 = vcmp.eq.f32.partialorder %v3124, 8.507059e+37
    %v3126 = vand.u32 %v3113, 2147483648
    %v3127 = vor.u32 1.1754944e-38, %v3126
    %v3128 = vsel %vm3125, %v3127, %v3123
    %v3129 = vmul.f32 1.0, %v3128
    %v3130 = vrcp.pop %v3114
    %v3131 = vmul.f32 %v3114, %v3130
    %v3132 = vsub.f32 1.0, %v3131
    %v3133 = vmul.f32 %v3130, %v3132
    %v3134 = vadd.f32 %v3130, %v3133
    %vm3135 = vweird.f32 %v3114
    %vm3136 = vweird.f32 %v3130
    %vm3137 = vmor %vm3135, %vm3136
    %v3138 = vsel %vm3137, %v3130, %v3134
    %v3139 = vand.u32 2147483647, %v3114
    %vm3140 = vcmp.eq.f32.partialorder %v3139, 8.507059e+37
    %v3141 = vand.u32 %v3114, 2147483648
    %v3142 = vor.u32 1.1754944e-38, %v3141
    %v3143 = vsel %vm3140, %v3142, %v3138
    %v3144 = vmul.f32 1.0, %v3143
    %v3145 = vtanh.pop %v3104
    %v3146 = vtanh.pop %v3106
    %v3147 = vxor.u32 %v3104, 2147483648
    %v3148 = vxor.u32 %v3106, 2147483648
    %v3149 = vmul.f32 %v3147, 1.442695
    %v3150 = vpow.pop %v3149
    %v3151 = vmul.f32 %v3148, 1.442695
    %v3152 = vpow.pop %v3151
    %v3153 = vadd.f32 %v3150, 1.0
    %v3154 = vadd.f32 %v3152, 1.0
    %v3155 = vrcp.pop %v3153
    %v3156 = vmul.f32 %v3153, %v3155
    %v3157 = vsub.f32 1.0, %v3156
    %v3158 = vmul.f32 %v3155, %v3157
    %v3159 = vadd.f32 %v3155, %v3158
    %vm3160 = vweird.f32 %v3153
    %vm3161 = vweird.f32 %v3155
    %vm3162 = vmor %vm3160, %vm3161
    %v3163 = vsel %vm3162, %v3155, %v3159
    %v3164 = vand.u32 2147483647, %v3153
    %vm3165 = vcmp.eq.f32.partialorder %v3164, 8.507059e+37
    %v3166 = vand.u32 %v3153, 2147483648
    %v3167 = vor.u32 1.1754944e-38, %v3166
    %v3168 = vsel %vm3165, %v3167, %v3163
    %v3169 = vmul.f32 1.0, %v3168
    %v3170 = vrcp.pop %v3154
    %v3171 = vmul.f32 %v3154, %v3170
    %v3172 = vsub.f32 1.0, %v3171
    %v3173 = vmul.f32 %v3170, %v3172
    %v3174 = vadd.f32 %v3170, %v3173
    %vm3175 = vweird.f32 %v3154
    %vm3176 = vweird.f32 %v3170
    %vm3177 = vmor %vm3175, %vm3176
    %v3178 = vsel %vm3177, %v3170, %v3174
    %v3179 = vand.u32 2147483647, %v3154
    %vm3180 = vcmp.eq.f32.partialorder %v3179, 8.507059e+37
    %v3181 = vand.u32 %v3154, 2147483648
    %v3182 = vor.u32 1.1754944e-38, %v3181
    %v3183 = vsel %vm3180, %v3182, %v3178
    %v3184 = vmul.f32 1.0, %v3183
    %v3185 = vmul.f32 %v3129, 0.0
    %v3186 = vmul.f32 %v3144, 0.0
    %v3187 = vmul.f32 %v3129, %v3145
    %v3188 = vmul.f32 %v3144, %v3146
    %3191 = vrot.lane.b32.xlu0 %v3187, 64
    %v3192 = vpop.permute.xlu0 %3191
    %3193 = vrot.lane.b32.xlu0 %v3188, 64
    %v3194 = vpop.permute.xlu0 %3193
    %v3197 = vadd.f32 %v3185, %v3192
    %v3198 = vadd.f32 %v3186, %v3194
    %v3199 = vtanh.pop %v3197
    %v3200 = vtanh.pop %v3198
    %v3201 = vmul.f32 %v3169, %v3199
    %v3202 = vmul.f32 %v3184, %v3200
    %v3203 = vpack.c.bf16 %v3034, %v3033
    %3205 = vrot.lane.b32.xlu0 %v3203, 64
    %v3206 = vpop.permute.xlu0 %3205
    %v3208 = vsel %vm2903, %v3206, 0
    %3210 = vmatpush.bf16.msra.mxu0 0
    %3211 = vmatpush.bf16.msra.mxu0 0
    %3212 = vmatpush.bf16.msra.mxu0 0
    %3213 = vmatpush.bf16.msra.mxu0 0
    %3214 = vmatpush.bf16.msra.mxu0 %v2893
    %3215 = vmatpush.bf16.msra.mxu0 %v2891
    %3216 = vmatpush.bf16.msra.mxu0 %v2889
    %3217 = vmatpush.bf16.msra.mxu0 %v2887
    %3218 = vmatmul.bf16.gmra.mxu0 %v3208
    %v3219 = vpop.f32.mrf.mxu0
    %v3220 = vadd.f32 0.0, %v3219
    %v3221 = vpop.f32.mrf.mxu0
    %v3222 = vadd.f32 0.0, %v3221
    %3223 = vdwg.mxu0
    %3224 = vmatpush.bf16.msra.mxu0 0
    %3225 = vmatpush.bf16.msra.mxu0 0
    %3226 = vmatpush.bf16.msra.mxu0 0
    %3227 = vmatpush.bf16.msra.mxu0 0
    %3228 = vmatpush.bf16.msra.mxu0 %v2894
    %3229 = vmatpush.bf16.msra.mxu0 %v2892
    %3230 = vmatpush.bf16.msra.mxu0 %v2890
    %3231 = vmatpush.bf16.msra.mxu0 %v2888
    %3232 = vmatmul.bf16.gmra.mxu0 %v3208
    %v3233 = vpop.f32.mrf.mxu0
    %v3234 = vadd.f32 0.0, %v3233
    %v3235 = vpop.f32.mrf.mxu0
    %v3236 = vadd.f32 0.0, %v3235
    %3237 = vdwg.mxu0
    %v3238 = vadd.f32 %v2787, %v3220
    %v3239 = vadd.f32 %v2788, %v3234
    %v3240 = vadd.f32 %v2789, %v3222
    %v3241 = vadd.f32 %v2790, %v3236
    %v3242 = vxor.u32 %v3238, 2147483648
    %v3243 = vxor.u32 %v3240, 2147483648
    %v3244 = vmul.f32 %v3242, 1.442695
    %v3245 = vpow.pop %v3244
    %v3246 = vmul.f32 %v3243, 1.442695
    %v3247 = vpow.pop %v3246
    %v3248 = vadd.f32 %v3245, 1.0
    %v3249 = vadd.f32 %v3247, 1.0
    %v3250 = vrcp.pop %v3248
    %v3251 = vmul.f32 %v3248, %v3250
    %v3252 = vsub.f32 1.0, %v3251
    %v3253 = vmul.f32 %v3250, %v3252
    %v3254 = vadd.f32 %v3250, %v3253
    %vm3255 = vweird.f32 %v3248
    %vm3256 = vweird.f32 %v3250
    %vm3257 = vmor %vm3255, %vm3256
    %v3258 = vsel %vm3257, %v3250, %v3254
    %v3259 = vand.u32 2147483647, %v3248
    %vm3260 = vcmp.eq.f32.partialorder %v3259, 8.507059e+37
    %v3261 = vand.u32 %v3248, 2147483648
    %v3262 = vor.u32 1.1754944e-38, %v3261
    %v3263 = vsel %vm3260, %v3262, %v3258
    %v3264 = vmul.f32 1.0, %v3263
    %v3265 = vrcp.pop %v3249
    %v3266 = vmul.f32 %v3249, %v3265
    %v3267 = vsub.f32 1.0, %v3266
    %v3268 = vmul.f32 %v3265, %v3267
    %v3269 = vadd.f32 %v3265, %v3268
    %vm3270 = vweird.f32 %v3249
    %vm3271 = vweird.f32 %v3265
    %vm3272 = vmor %vm3270, %vm3271
    %v3273 = vsel %vm3272, %v3265, %v3269
    %v3274 = vand.u32 2147483647, %v3249
    %vm3275 = vcmp.eq.f32.partialorder %v3274, 8.507059e+37
    %v3276 = vand.u32 %v3249, 2147483648
    %v3277 = vor.u32 1.1754944e-38, %v3276
    %v3278 = vsel %vm3275, %v3277, %v3273
    %v3279 = vmul.f32 1.0, %v3278
    %v3280 = vtanh.pop %v3239
    %v3281 = vtanh.pop %v3241
    %v3282 = vxor.u32 %v3239, 2147483648
    %v3283 = vxor.u32 %v3241, 2147483648
    %v3284 = vmul.f32 %v3282, 1.442695
    %v3285 = vpow.pop %v3284
    %v3286 = vmul.f32 %v3283, 1.442695
    %v3287 = vpow.pop %v3286
    %v3288 = vadd.f32 %v3285, 1.0
    %v3289 = vadd.f32 %v3287, 1.0
    %v3290 = vrcp.pop %v3288
    %v3291 = vmul.f32 %v3288, %v3290
    %v3292 = vsub.f32 1.0, %v3291
    %v3293 = vmul.f32 %v3290, %v3292
    %v3294 = vadd.f32 %v3290, %v3293
    %vm3295 = vweird.f32 %v3288
    %vm3296 = vweird.f32 %v3290
    %vm3297 = vmor %vm3295, %vm3296
    %v3298 = vsel %vm3297, %v3290, %v3294
    %v3299 = vand.u32 2147483647, %v3288
    %vm3300 = vcmp.eq.f32.partialorder %v3299, 8.507059e+37
    %v3301 = vand.u32 %v3288, 2147483648
    %v3302 = vor.u32 1.1754944e-38, %v3301
    %v3303 = vsel %vm3300, %v3302, %v3298
    %v3304 = vmul.f32 1.0, %v3303
    %v3305 = vrcp.pop %v3289
    %v3306 = vmul.f32 %v3289, %v3305
    %v3307 = vsub.f32 1.0, %v3306
    %v3308 = vmul.f32 %v3305, %v3307
    %v3309 = vadd.f32 %v3305, %v3308
    %vm3310 = vweird.f32 %v3289
    %vm3311 = vweird.f32 %v3305
    %vm3312 = vmor %vm3310, %vm3311
    %v3313 = vsel %vm3312, %v3305, %v3309
    %v3314 = vand.u32 2147483647, %v3289
    %vm3315 = vcmp.eq.f32.partialorder %v3314, 8.507059e+37
    %v3316 = vand.u32 %v3289, 2147483648
    %v3317 = vor.u32 1.1754944e-38, %v3316
    %v3318 = vsel %vm3315, %v3317, %v3313
    %v3319 = vmul.f32 1.0, %v3318
    %v3320 = vmul.f32 %v3264, %v3029
    %v3321 = vmul.f32 %v3279, %v3030
    %v3322 = vmul.f32 %v3264, %v3280
    %v3323 = vmul.f32 %v3279, %v3281
    %3326 = vrot.lane.b32.xlu0 %v3322, 64
    %v3327 = vpop.permute.xlu0 %3326
    %3328 = vrot.lane.b32.xlu0 %v3323, 64
    %v3329 = vpop.permute.xlu0 %3328
    %v3332 = vadd.f32 %v3320, %v3327
    %v3333 = vadd.f32 %v3321, %v3329
    %v3334 = vtanh.pop %v3332
    %v3335 = vtanh.pop %v3333
    %v3336 = vmul.f32 %v3304, %v3334
    %v3337 = vmul.f32 %v3319, %v3335
    %v3338 = vpack.c.bf16 %v3202, %v3201
    %3340 = vrot.lane.b32.xlu0 %v3338, 64
    %v3341 = vpop.permute.xlu0 %3340
    %v3343 = vsel %vm2903, %v3341, 0
    %3345 = vmatpush.bf16.msra.mxu0 0
    %3346 = vmatpush.bf16.msra.mxu0 0
    %3347 = vmatpush.bf16.msra.mxu0 0
    %3348 = vmatpush.bf16.msra.mxu0 0
    %3349 = vmatpush.bf16.msra.mxu0 %v3065
    %3350 = vmatpush.bf16.msra.mxu0 %v3063
    %3351 = vmatpush.bf16.msra.mxu0 %v3061
    %3352 = vmatpush.bf16.msra.mxu0 %v3059
    %3353 = vmatmul.bf16.gmra.mxu0 %v3343
    %v3354 = vpop.f32.mrf.mxu0
    %v3355 = vadd.f32 0.0, %v3354
    %v3356 = vpop.f32.mrf.mxu0
    %v3357 = vadd.f32 0.0, %v3356
    %3358 = vdwg.mxu0
    %3359 = vmatpush.bf16.msra.mxu0 0
    %3360 = vmatpush.bf16.msra.mxu0 0
    %3361 = vmatpush.bf16.msra.mxu0 0
    %3362 = vmatpush.bf16.msra.mxu0 0
    %3363 = vmatpush.bf16.msra.mxu0 %v3066
    %3364 = vmatpush.bf16.msra.mxu0 %v3064
    %3365 = vmatpush.bf16.msra.mxu0 %v3062
    %3366 = vmatpush.bf16.msra.mxu0 %v3060
    %3367 = vmatmul.bf16.gmra.mxu0 %v3343
    %v3368 = vpop.f32.mrf.mxu0
    %v3369 = vadd.f32 0.0, %v3368
    %v3370 = vpop.f32.mrf.mxu0
    %v3371 = vadd.f32 0.0, %v3370
    %3372 = vdwg.mxu0
    %v3373 = vadd.f32 %v2819, %v3355
    %v3374 = vadd.f32 %v2820, %v3369
    %v3375 = vadd.f32 %v2821, %v3357
    %v3376 = vadd.f32 %v2822, %v3371
    %v3377 = vxor.u32 %v3373, 2147483648
    %v3378 = vxor.u32 %v3375, 2147483648
    %v3379 = vmul.f32 %v3377, 1.442695
    %v3380 = vpow.pop %v3379
    %v3381 = vmul.f32 %v3378, 1.442695
    %v3382 = vpow.pop %v3381
    %v3383 = vadd.f32 %v3380, 1.0
    %v3384 = vadd.f32 %v3382, 1.0
    %v3385 = vrcp.pop %v3383
    %v3386 = vmul.f32 %v3383, %v3385
    %v3387 = vsub.f32 1.0, %v3386
    %v3388 = vmul.f32 %v3385, %v3387
    %v3389 = vadd.f32 %v3385, %v3388
    %vm3390 = vweird.f32 %v3383
    %vm3391 = vweird.f32 %v3385
    %vm3392 = vmor %vm3390, %vm3391
    %v3393 = vsel %vm3392, %v3385, %v3389
    %v3394 = vand.u32 2147483647, %v3383
    %vm3395 = vcmp.eq.f32.partialorder %v3394, 8.507059e+37
    %v3396 = vand.u32 %v3383, 2147483648
    %v3397 = vor.u32 1.1754944e-38, %v3396
    %v3398 = vsel %vm3395, %v3397, %v3393
    %v3399 = vmul.f32 1.0, %v3398
    %v3400 = vrcp.pop %v3384
    %v3401 = vmul.f32 %v3384, %v3400
    %v3402 = vsub.f32 1.0, %v3401
    %v3403 = vmul.f32 %v3400, %v3402
    %v3404 = vadd.f32 %v3400, %v3403
    %vm3405 = vweird.f32 %v3384
    %vm3406 = vweird.f32 %v3400
    %vm3407 = vmor %vm3405, %vm3406
    %v3408 = vsel %vm3407, %v3400, %v3404
    %v3409 = vand.u32 2147483647, %v3384
    %vm3410 = vcmp.eq.f32.partialorder %v3409, 8.507059e+37
    %v3411 = vand.u32 %v3384, 2147483648
    %v3412 = vor.u32 1.1754944e-38, %v3411
    %v3413 = vsel %vm3410, %v3412, %v3408
    %v3414 = vmul.f32 1.0, %v3413
    %v3415 = vtanh.pop %v3374
    %v3416 = vtanh.pop %v3376
    %v3417 = vxor.u32 %v3374, 2147483648
    %v3418 = vxor.u32 %v3376, 2147483648
    %v3419 = vmul.f32 %v3417, 1.442695
    %v3420 = vpow.pop %v3419
    %v3421 = vmul.f32 %v3418, 1.442695
    %v3422 = vpow.pop %v3421
    %v3423 = vadd.f32 %v3420, 1.0
    %v3424 = vadd.f32 %v3422, 1.0
    %v3425 = vrcp.pop %v3423
    %v3426 = vmul.f32 %v3423, %v3425
    %v3427 = vsub.f32 1.0, %v3426
    %v3428 = vmul.f32 %v3425, %v3427
    %v3429 = vadd.f32 %v3425, %v3428
    %vm3430 = vweird.f32 %v3423
    %vm3431 = vweird.f32 %v3425
    %vm3432 = vmor %vm3430, %vm3431
    %v3433 = vsel %vm3432, %v3425, %v3429
    %v3434 = vand.u32 2147483647, %v3423
    %vm3435 = vcmp.eq.f32.partialorder %v3434, 8.507059e+37
    %v3436 = vand.u32 %v3423, 2147483648
    %v3437 = vor.u32 1.1754944e-38, %v3436
    %v3438 = vsel %vm3435, %v3437, %v3433
    %v3439 = vmul.f32 1.0, %v3438
    %v3440 = vrcp.pop %v3424
    %v3441 = vmul.f32 %v3424, %v3440
    %v3442 = vsub.f32 1.0, %v3441
    %v3443 = vmul.f32 %v3440, %v3442
    %v3444 = vadd.f32 %v3440, %v3443
    %vm3445 = vweird.f32 %v3424
    %vm3446 = vweird.f32 %v3440
    %vm3447 = vmor %vm3445, %vm3446
    %v3448 = vsel %vm3447, %v3440, %v3444
    %v3449 = vand.u32 2147483647, %v3424
    %vm3450 = vcmp.eq.f32.partialorder %v3449, 8.507059e+37
    %v3451 = vand.u32 %v3424, 2147483648
    %v3452 = vor.u32 1.1754944e-38, %v3451
    %v3453 = vsel %vm3450, %v3452, %v3448
    %v3454 = vmul.f32 1.0, %v3453
    %v3455 = vmul.f32 %v3399, %v3197
    %v3456 = vmul.f32 %v3414, %v3198
    %v3457 = vmul.f32 %v3399, %v3415
    %v3458 = vmul.f32 %v3414, %v3416
    %3461 = vrot.lane.b32.xlu0 %v3457, 64
    %v3462 = vpop.permute.xlu0 %3461
    %3463 = vrot.lane.b32.xlu0 %v3458, 64
    %v3464 = vpop.permute.xlu0 %3463
    %v3467 = vadd.f32 %v3455, %v3462
    %v3468 = vadd.f32 %v3456, %v3464
    %v3469 = vtanh.pop %v3467
    %v3470 = vtanh.pop %v3468
    %v3471 = vmul.f32 %v3439, %v3469
    %v3472 = vmul.f32 %v3454, %v3470
    %v3473 = vpack.c.bf16 %v3337, %v3336
    %3475 = vrot.lane.b32.xlu0 %v3473, 64
    %v3476 = vpop.permute.xlu0 %3475
    %v3478 = vsel %vm2903, %v3476, 0
    %3480 = vmatpush.bf16.msra.mxu0 0
    %3481 = vmatpush.bf16.msra.mxu0 0
    %3482 = vmatpush.bf16.msra.mxu0 0
    %3483 = vmatpush.bf16.msra.mxu0 0
    %3484 = vmatpush.bf16.msra.mxu0 %v2893
    %3485 = vmatpush.bf16.msra.mxu0 %v2891
    %3486 = vmatpush.bf16.msra.mxu0 %v2889
    %3487 = vmatpush.bf16.msra.mxu0 %v2887
    %3488 = vmatmul.bf16.gmra.mxu0 %v3478
    %v3489 = vpop.f32.mrf.mxu0
    %v3490 = vadd.f32 0.0, %v3489
    %v3491 = vpop.f32.mrf.mxu0
    %v3492 = vadd.f32 0.0, %v3491
    %3493 = vdwg.mxu0
    %3494 = vmatpush.bf16.msra.mxu0 0
    %3495 = vmatpush.bf16.msra.mxu0 0
    %3496 = vmatpush.bf16.msra.mxu0 0
    %3497 = vmatpush.bf16.msra.mxu0 0
    %3498 = vmatpush.bf16.msra.mxu0 %v2894
    %3499 = vmatpush.bf16.msra.mxu0 %v2892
    %3500 = vmatpush.bf16.msra.mxu0 %v2890
    %3501 = vmatpush.bf16.msra.mxu0 %v2888
    %3502 = vmatmul.bf16.gmra.mxu0 %v3478
    %v3503 = vpop.f32.mrf.mxu0
    %v3504 = vadd.f32 0.0, %v3503
    %v3505 = vpop.f32.mrf.mxu0
    %v3506 = vadd.f32 0.0, %v3505
    %3507 = vdwg.mxu0
    %v3508 = vadd.f32 %v2791, %v3490
    %v3509 = vadd.f32 %v2792, %v3504
    %v3510 = vadd.f32 %v2793, %v3492
    %v3511 = vadd.f32 %v2794, %v3506
    %v3512 = vxor.u32 %v3508, 2147483648
    %v3513 = vxor.u32 %v3510, 2147483648
    %v3514 = vmul.f32 %v3512, 1.442695
    %v3515 = vpow.pop %v3514
    %v3516 = vmul.f32 %v3513, 1.442695
    %v3517 = vpow.pop %v3516
    %v3518 = vadd.f32 %v3515, 1.0
    %v3519 = vadd.f32 %v3517, 1.0
    %v3520 = vrcp.pop %v3518
    %v3521 = vmul.f32 %v3518, %v3520
    %v3522 = vsub.f32 1.0, %v3521
    %v3523 = vmul.f32 %v3520, %v3522
    %v3524 = vadd.f32 %v3520, %v3523
    %vm3525 = vweird.f32 %v3518
    %vm3526 = vweird.f32 %v3520
    %vm3527 = vmor %vm3525, %vm3526
    %v3528 = vsel %vm3527, %v3520, %v3524
    %v3529 = vand.u32 2147483647, %v3518
    %vm3530 = vcmp.eq.f32.partialorder %v3529, 8.507059e+37
    %v3531 = vand.u32 %v3518, 2147483648
    %v3532 = vor.u32 1.1754944e-38, %v3531
    %v3533 = vsel %vm3530, %v3532, %v3528
    %v3534 = vmul.f32 1.0, %v3533
    %v3535 = vrcp.pop %v3519
    %v3536 = vmul.f32 %v3519, %v3535
    %v3537 = vsub.f32 1.0, %v3536
    %v3538 = vmul.f32 %v3535, %v3537
    %v3539 = vadd.f32 %v3535, %v3538
    %vm3540 = vweird.f32 %v3519
    %vm3541 = vweird.f32 %v3535
    %vm3542 = vmor %vm3540, %vm3541
    %v3543 = vsel %vm3542, %v3535, %v3539
    %v3544 = vand.u32 2147483647, %v3519
    %vm3545 = vcmp.eq.f32.partialorder %v3544, 8.507059e+37
    %v3546 = vand.u32 %v3519, 2147483648
    %v3547 = vor.u32 1.1754944e-38, %v3546
    %v3548 = vsel %vm3545, %v3547, %v3543
    %v3549 = vmul.f32 1.0, %v3548
    %v3550 = vtanh.pop %v3509
    %v3551 = vtanh.pop %v3511
    %v3552 = vxor.u32 %v3509, 2147483648
    %v3553 = vxor.u32 %v3511, 2147483648
    %v3554 = vmul.f32 %v3552, 1.442695
    %v3555 = vpow.pop %v3554
    %v3556 = vmul.f32 %v3553, 1.442695
    %v3557 = vpow.pop %v3556
    %v3558 = vadd.f32 %v3555, 1.0
    %v3559 = vadd.f32 %v3557, 1.0
    %v3560 = vrcp.pop %v3558
    %v3561 = vmul.f32 %v3558, %v3560
    %v3562 = vsub.f32 1.0, %v3561
    %v3563 = vmul.f32 %v3560, %v3562
    %v3564 = vadd.f32 %v3560, %v3563
    %vm3565 = vweird.f32 %v3558
    %vm3566 = vweird.f32 %v3560
    %vm3567 = vmor %vm3565, %vm3566
    %v3568 = vsel %vm3567, %v3560, %v3564
    %v3569 = vand.u32 2147483647, %v3558
    %vm3570 = vcmp.eq.f32.partialorder %v3569, 8.507059e+37
    %v3571 = vand.u32 %v3558, 2147483648
    %v3572 = vor.u32 1.1754944e-38, %v3571
    %v3573 = vsel %vm3570, %v3572, %v3568
    %v3574 = vmul.f32 1.0, %v3573
    %v3575 = vrcp.pop %v3559
    %v3576 = vmul.f32 %v3559, %v3575
    %v3577 = vsub.f32 1.0, %v3576
    %v3578 = vmul.f32 %v3575, %v3577
    %v3579 = vadd.f32 %v3575, %v3578
    %vm3580 = vweird.f32 %v3559
    %vm3581 = vweird.f32 %v3575
    %vm3582 = vmor %vm3580, %vm3581
    %v3583 = vsel %vm3582, %v3575, %v3579
    %v3584 = vand.u32 2147483647, %v3559
    %vm3585 = vcmp.eq.f32.partialorder %v3584, 8.507059e+37
    %v3586 = vand.u32 %v3559, 2147483648
    %v3587 = vor.u32 1.1754944e-38, %v3586
    %v3588 = vsel %vm3585, %v3587, %v3583
    %v3589 = vmul.f32 1.0, %v3588
    %v3590 = vmul.f32 %v3534, %v3332
    %v3591 = vmul.f32 %v3549, %v3333
    %v3592 = vmul.f32 %v3534, %v3550
    %v3593 = vmul.f32 %v3549, %v3551
    %3596 = vrot.lane.b32.xlu0 %v3592, 64
    %v3597 = vpop.permute.xlu0 %3596
    %3598 = vrot.lane.b32.xlu0 %v3593, 64
    %v3599 = vpop.permute.xlu0 %3598
    %v3602 = vadd.f32 %v3590, %v3597
    %v3603 = vadd.f32 %v3591, %v3599
    %v3604 = vtanh.pop %v3602
    %v3605 = vtanh.pop %v3603
    %v3606 = vmul.f32 %v3574, %v3604
    %v3607 = vmul.f32 %v3589, %v3605
    %v3608 = vpack.c.bf16 %v3472, %v3471
    %3610 = vrot.lane.b32.xlu0 %v3608, 64
    %v3611 = vpop.permute.xlu0 %3610
    %v3613 = vsel %vm2903, %v3611, 0
    %3615 = vmatpush.bf16.msra.mxu0 0
    %3616 = vmatpush.bf16.msra.mxu0 0
    %3617 = vmatpush.bf16.msra.mxu0 0
    %3618 = vmatpush.bf16.msra.mxu0 0
    %3619 = vmatpush.bf16.msra.mxu0 %v3065
    %3620 = vmatpush.bf16.msra.mxu0 %v3063
    %3621 = vmatpush.bf16.msra.mxu0 %v3061
    %3622 = vmatpush.bf16.msra.mxu0 %v3059
    %3623 = vmatmul.bf16.gmra.mxu0 %v3613
    %v3624 = vpop.f32.mrf.mxu0
    %v3625 = vadd.f32 0.0, %v3624
    %v3626 = vpop.f32.mrf.mxu0
    %v3627 = vadd.f32 0.0, %v3626
    %3628 = vdwg.mxu0
    %3629 = vmatpush.bf16.msra.mxu0 0
    %3630 = vmatpush.bf16.msra.mxu0 0
    %3631 = vmatpush.bf16.msra.mxu0 0
    %3632 = vmatpush.bf16.msra.mxu0 0
    %3633 = vmatpush.bf16.msra.mxu0 %v3066
    %3634 = vmatpush.bf16.msra.mxu0 %v3064
    %3635 = vmatpush.bf16.msra.mxu0 %v3062
    %3636 = vmatpush.bf16.msra.mxu0 %v3060
    %3637 = vmatmul.bf16.gmra.mxu0 %v3613
    %v3638 = vpop.f32.mrf.mxu0
    %v3639 = vadd.f32 0.0, %v3638
    %v3640 = vpop.f32.mrf.mxu0
    %v3641 = vadd.f32 0.0, %v3640
    %3642 = vdwg.mxu0
    %v3643 = vadd.f32 %v2823, %v3625
    %v3644 = vadd.f32 %v2824, %v3639
    %v3645 = vadd.f32 %v2825, %v3627
    %v3646 = vadd.f32 %v2826, %v3641
    %v3647 = vxor.u32 %v3643, 2147483648
    %v3648 = vxor.u32 %v3645, 2147483648
    %v3649 = vmul.f32 %v3647, 1.442695
    %v3650 = vpow.pop %v3649
    %v3651 = vmul.f32 %v3648, 1.442695
    %v3652 = vpow.pop %v3651
    %v3653 = vadd.f32 %v3650, 1.0
    %v3654 = vadd.f32 %v3652, 1.0
    %v3655 = vrcp.pop %v3653
    %v3656 = vmul.f32 %v3653, %v3655
    %v3657 = vsub.f32 1.0, %v3656
    %v3658 = vmul.f32 %v3655, %v3657
    %v3659 = vadd.f32 %v3655, %v3658
    %vm3660 = vweird.f32 %v3653
    %vm3661 = vweird.f32 %v3655
    %vm3662 = vmor %vm3660, %vm3661
    %v3663 = vsel %vm3662, %v3655, %v3659
    %v3664 = vand.u32 2147483647, %v3653
    %vm3665 = vcmp.eq.f32.partialorder %v3664, 8.507059e+37
    %v3666 = vand.u32 %v3653, 2147483648
    %v3667 = vor.u32 1.1754944e-38, %v3666
    %v3668 = vsel %vm3665, %v3667, %v3663
    %v3669 = vmul.f32 1.0, %v3668
    %v3670 = vrcp.pop %v3654
    %v3671 = vmul.f32 %v3654, %v3670
    %v3672 = vsub.f32 1.0, %v3671
    %v3673 = vmul.f32 %v3670, %v3672
    %v3674 = vadd.f32 %v3670, %v3673
    %vm3675 = vweird.f32 %v3654
    %vm3676 = vweird.f32 %v3670
    %vm3677 = vmor %vm3675, %vm3676
    %v3678 = vsel %vm3677, %v3670, %v3674
    %v3679 = vand.u32 2147483647, %v3654
    %vm3680 = vcmp.eq.f32.partialorder %v3679, 8.507059e+37
    %v3681 = vand.u32 %v3654, 2147483648
    %v3682 = vor.u32 1.1754944e-38, %v3681
    %v3683 = vsel %vm3680, %v3682, %v3678
    %v3684 = vmul.f32 1.0, %v3683
    %v3685 = vtanh.pop %v3644
    %v3686 = vtanh.pop %v3646
    %v3687 = vxor.u32 %v3644, 2147483648
    %v3688 = vxor.u32 %v3646, 2147483648
    %v3689 = vmul.f32 %v3687, 1.442695
    %v3690 = vpow.pop %v3689
    %v3691 = vmul.f32 %v3688, 1.442695
    %v3692 = vpow.pop %v3691
    %v3693 = vadd.f32 %v3690, 1.0
    %v3694 = vadd.f32 %v3692, 1.0
    %v3695 = vrcp.pop %v3693
    %v3696 = vmul.f32 %v3693, %v3695
    %v3697 = vsub.f32 1.0, %v3696
    %v3698 = vmul.f32 %v3695, %v3697
    %v3699 = vadd.f32 %v3695, %v3698
    %vm3700 = vweird.f32 %v3693
    %vm3701 = vweird.f32 %v3695
    %vm3702 = vmor %vm3700, %vm3701
    %v3703 = vsel %vm3702, %v3695, %v3699
    %v3704 = vand.u32 2147483647, %v3693
    %vm3705 = vcmp.eq.f32.partialorder %v3704, 8.507059e+37
    %v3706 = vand.u32 %v3693, 2147483648
    %v3707 = vor.u32 1.1754944e-38, %v3706
    %v3708 = vsel %vm3705, %v3707, %v3703
    %v3709 = vmul.f32 1.0, %v3708
    %v3710 = vrcp.pop %v3694
    %v3711 = vmul.f32 %v3694, %v3710
    %v3712 = vsub.f32 1.0, %v3711
    %v3713 = vmul.f32 %v3710, %v3712
    %v3714 = vadd.f32 %v3710, %v3713
    %vm3715 = vweird.f32 %v3694
    %vm3716 = vweird.f32 %v3710
    %vm3717 = vmor %vm3715, %vm3716
    %v3718 = vsel %vm3717, %v3710, %v3714
    %v3719 = vand.u32 2147483647, %v3694
    %vm3720 = vcmp.eq.f32.partialorder %v3719, 8.507059e+37
    %v3721 = vand.u32 %v3694, 2147483648
    %v3722 = vor.u32 1.1754944e-38, %v3721
    %v3723 = vsel %vm3720, %v3722, %v3718
    %v3724 = vmul.f32 1.0, %v3723
    %v3725 = vmul.f32 %v3669, %v3467
    %v3726 = vmul.f32 %v3684, %v3468
    %v3727 = vmul.f32 %v3669, %v3685
    %v3728 = vmul.f32 %v3684, %v3686
    %3731 = vrot.lane.b32.xlu0 %v3727, 64
    %v3732 = vpop.permute.xlu0 %3731
    %3733 = vrot.lane.b32.xlu0 %v3728, 64
    %v3734 = vpop.permute.xlu0 %3733
    %v3737 = vadd.f32 %v3725, %v3732
    %v3738 = vadd.f32 %v3726, %v3734
    %v3739 = vtanh.pop %v3737
    %v3740 = vtanh.pop %v3738
    %v3741 = vmul.f32 %v3709, %v3739
    %v3742 = vmul.f32 %v3724, %v3740
    %v3743 = vpack.c.bf16 %v3607, %v3606
    %3745 = vrot.lane.b32.xlu0 %v3743, 64
    %v3746 = vpop.permute.xlu0 %3745
    %v3748 = vsel %vm2903, %v3746, 0
    %3750 = vmatpush.bf16.msra.mxu0 0
    %3751 = vmatpush.bf16.msra.mxu0 0
    %3752 = vmatpush.bf16.msra.mxu0 0
    %3753 = vmatpush.bf16.msra.mxu0 0
    %3754 = vmatpush.bf16.msra.mxu0 %v2893
    %3755 = vmatpush.bf16.msra.mxu0 %v2891
    %3756 = vmatpush.bf16.msra.mxu0 %v2889
    %3757 = vmatpush.bf16.msra.mxu0 %v2887
    %3758 = vmatmul.bf16.gmra.mxu0 %v3748
    %v3759 = vpop.f32.mrf.mxu0
    %v3760 = vadd.f32 0.0, %v3759
    %v3761 = vpop.f32.mrf.mxu0
    %v3762 = vadd.f32 0.0, %v3761
    %3763 = vdwg.mxu0
    %3764 = vmatpush.bf16.msra.mxu0 0
    %3765 = vmatpush.bf16.msra.mxu0 0
    %3766 = vmatpush.bf16.msra.mxu0 0
    %3767 = vmatpush.bf16.msra.mxu0 0
    %3768 = vmatpush.bf16.msra.mxu0 %v2894
    %3769 = vmatpush.bf16.msra.mxu0 %v2892
    %3770 = vmatpush.bf16.msra.mxu0 %v2890
    %3771 = vmatpush.bf16.msra.mxu0 %v2888
    %3772 = vmatmul.bf16.gmra.mxu0 %v3748
    %v3773 = vpop.f32.mrf.mxu0
    %v3774 = vadd.f32 0.0, %v3773
    %v3775 = vpop.f32.mrf.mxu0
    %v3776 = vadd.f32 0.0, %v3775
    %3777 = vdwg.mxu0
    %v3778 = vadd.f32 %v2795, %v3760
    %v3779 = vadd.f32 %v2796, %v3774
    %v3780 = vadd.f32 %v2797, %v3762
    %v3781 = vadd.f32 %v2798, %v3776
    %v3782 = vxor.u32 %v3778, 2147483648
    %v3783 = vxor.u32 %v3780, 2147483648
    %v3784 = vmul.f32 %v3782, 1.442695
    %v3785 = vpow.pop %v3784
    %v3786 = vmul.f32 %v3783, 1.442695
    %v3787 = vpow.pop %v3786
    %v3788 = vadd.f32 %v3785, 1.0
    %v3789 = vadd.f32 %v3787, 1.0
    %v3790 = vrcp.pop %v3788
    %v3791 = vmul.f32 %v3788, %v3790
    %v3792 = vsub.f32 1.0, %v3791
    %v3793 = vmul.f32 %v3790, %v3792
    %v3794 = vadd.f32 %v3790, %v3793
    %vm3795 = vweird.f32 %v3788
    %vm3796 = vweird.f32 %v3790
    %vm3797 = vmor %vm3795, %vm3796
    %v3798 = vsel %vm3797, %v3790, %v3794
    %v3799 = vand.u32 2147483647, %v3788
    %vm3800 = vcmp.eq.f32.partialorder %v3799, 8.507059e+37
    %v3801 = vand.u32 %v3788, 2147483648
    %v3802 = vor.u32 1.1754944e-38, %v3801
    %v3803 = vsel %vm3800, %v3802, %v3798
    %v3804 = vmul.f32 1.0, %v3803
    %v3805 = vrcp.pop %v3789
    %v3806 = vmul.f32 %v3789, %v3805
    %v3807 = vsub.f32 1.0, %v3806
    %v3808 = vmul.f32 %v3805, %v3807
    %v3809 = vadd.f32 %v3805, %v3808
    %vm3810 = vweird.f32 %v3789
    %vm3811 = vweird.f32 %v3805
    %vm3812 = vmor %vm3810, %vm3811
    %v3813 = vsel %vm3812, %v3805, %v3809
    %v3814 = vand.u32 2147483647, %v3789
    %vm3815 = vcmp.eq.f32.partialorder %v3814, 8.507059e+37
    %v3816 = vand.u32 %v3789, 2147483648
    %v3817 = vor.u32 1.1754944e-38, %v3816
    %v3818 = vsel %vm3815, %v3817, %v3813
    %v3819 = vmul.f32 1.0, %v3818
    %v3820 = vtanh.pop %v3779
    %v3821 = vtanh.pop %v3781
    %v3822 = vxor.u32 %v3779, 2147483648
    %v3823 = vxor.u32 %v3781, 2147483648
    %v3824 = vmul.f32 %v3822, 1.442695
    %v3825 = vpow.pop %v3824
    %v3826 = vmul.f32 %v3823, 1.442695
    %v3827 = vpow.pop %v3826
    %v3828 = vadd.f32 %v3825, 1.0
    %v3829 = vadd.f32 %v3827, 1.0
    %v3830 = vrcp.pop %v3828
    %v3831 = vmul.f32 %v3828, %v3830
    %v3832 = vsub.f32 1.0, %v3831
    %v3833 = vmul.f32 %v3830, %v3832
    %v3834 = vadd.f32 %v3830, %v3833
    %vm3835 = vweird.f32 %v3828
    %vm3836 = vweird.f32 %v3830
    %vm3837 = vmor %vm3835, %vm3836
    %v3838 = vsel %vm3837, %v3830, %v3834
    %v3839 = vand.u32 2147483647, %v3828
    %vm3840 = vcmp.eq.f32.partialorder %v3839, 8.507059e+37
    %v3841 = vand.u32 %v3828, 2147483648
    %v3842 = vor.u32 1.1754944e-38, %v3841
    %v3843 = vsel %vm3840, %v3842, %v3838
    %v3844 = vmul.f32 1.0, %v3843
    %v3845 = vrcp.pop %v3829
    %v3846 = vmul.f32 %v3829, %v3845
    %v3847 = vsub.f32 1.0, %v3846
    %v3848 = vmul.f32 %v3845, %v3847
    %v3849 = vadd.f32 %v3845, %v3848
    %vm3850 = vweird.f32 %v3829
    %vm3851 = vweird.f32 %v3845
    %vm3852 = vmor %vm3850, %vm3851
    %v3853 = vsel %vm3852, %v3845, %v3849
    %v3854 = vand.u32 2147483647, %v3829
    %vm3855 = vcmp.eq.f32.partialorder %v3854, 8.507059e+37
    %v3856 = vand.u32 %v3829, 2147483648
    %v3857 = vor.u32 1.1754944e-38, %v3856
    %v3858 = vsel %vm3855, %v3857, %v3853
    %v3859 = vmul.f32 1.0, %v3858
    %v3860 = vmul.f32 %v3804, %v3602
    %v3861 = vmul.f32 %v3819, %v3603
    %v3862 = vmul.f32 %v3804, %v3820
    %v3863 = vmul.f32 %v3819, %v3821
    %3866 = vrot.lane.b32.xlu0 %v3862, 64
    %v3867 = vpop.permute.xlu0 %3866
    %3868 = vrot.lane.b32.xlu0 %v3863, 64
    %v3869 = vpop.permute.xlu0 %3868
    %v3872 = vadd.f32 %v3860, %v3867
    %v3873 = vadd.f32 %v3861, %v3869
    %v3874 = vtanh.pop %v3872
    %v3875 = vtanh.pop %v3873
    %v3876 = vmul.f32 %v3844, %v3874
    %v3877 = vmul.f32 %v3859, %v3875
    %v3878 = vpack.c.bf16 %v3742, %v3741
    %3880 = vrot.lane.b32.xlu0 %v3878, 64
    %v3881 = vpop.permute.xlu0 %3880
    %v3883 = vsel %vm2903, %v3881, 0
    %3885 = vmatpush.bf16.msra.mxu0 0
    %3886 = vmatpush.bf16.msra.mxu0 0
    %3887 = vmatpush.bf16.msra.mxu0 0
    %3888 = vmatpush.bf16.msra.mxu0 0
    %3889 = vmatpush.bf16.msra.mxu0 %v3065
    %3890 = vmatpush.bf16.msra.mxu0 %v3063
    %3891 = vmatpush.bf16.msra.mxu0 %v3061
    %3892 = vmatpush.bf16.msra.mxu0 %v3059
    %3893 = vmatmul.bf16.gmra.mxu0 %v3883
    %v3894 = vpop.f32.mrf.mxu0
    %v3895 = vadd.f32 0.0, %v3894
    %v3896 = vpop.f32.mrf.mxu0
    %v3897 = vadd.f32 0.0, %v3896
    %3898 = vdwg.mxu0
    %3899 = vmatpush.bf16.msra.mxu0 0
    %3900 = vmatpush.bf16.msra.mxu0 0
    %3901 = vmatpush.bf16.msra.mxu0 0
    %3902 = vmatpush.bf16.msra.mxu0 0
    %3903 = vmatpush.bf16.msra.mxu0 %v3066
    %3904 = vmatpush.bf16.msra.mxu0 %v3064
    %3905 = vmatpush.bf16.msra.mxu0 %v3062
    %3906 = vmatpush.bf16.msra.mxu0 %v3060
    %3907 = vmatmul.bf16.gmra.mxu0 %v3883
    %v3908 = vpop.f32.mrf.mxu0
    %v3909 = vadd.f32 0.0, %v3908
    %v3910 = vpop.f32.mrf.mxu0
    %v3911 = vadd.f32 0.0, %v3910
    %3912 = vdwg.mxu0
    %v3913 = vadd.f32 %v2827, %v3895
    %v3914 = vadd.f32 %v2828, %v3909
    %v3915 = vadd.f32 %v2829, %v3897
    %v3916 = vadd.f32 %v2830, %v3911
    %v3917 = vxor.u32 %v3913, 2147483648
    %v3918 = vxor.u32 %v3915, 2147483648
    %v3919 = vmul.f32 %v3917, 1.442695
    %v3920 = vpow.pop %v3919
    %v3921 = vmul.f32 %v3918, 1.442695
    %v3922 = vpow.pop %v3921
    %v3923 = vadd.f32 %v3920, 1.0
    %v3924 = vadd.f32 %v3922, 1.0
    %v3925 = vrcp.pop %v3923
    %v3926 = vmul.f32 %v3923, %v3925
    %v3927 = vsub.f32 1.0, %v3926
    %v3928 = vmul.f32 %v3925, %v3927
    %v3929 = vadd.f32 %v3925, %v3928
    %vm3930 = vweird.f32 %v3923
    %vm3931 = vweird.f32 %v3925
    %vm3932 = vmor %vm3930, %vm3931
    %v3933 = vsel %vm3932, %v3925, %v3929
    %v3934 = vand.u32 2147483647, %v3923
    %vm3935 = vcmp.eq.f32.partialorder %v3934, 8.507059e+37
    %v3936 = vand.u32 %v3923, 2147483648
    %v3937 = vor.u32 1.1754944e-38, %v3936
    %v3938 = vsel %vm3935, %v3937, %v3933
    %v3939 = vmul.f32 1.0, %v3938
    %v3940 = vrcp.pop %v3924
    %v3941 = vmul.f32 %v3924, %v3940
    %v3942 = vsub.f32 1.0, %v3941
    %v3943 = vmul.f32 %v3940, %v3942
    %v3944 = vadd.f32 %v3940, %v3943
    %vm3945 = vweird.f32 %v3924
    %vm3946 = vweird.f32 %v3940
    %vm3947 = vmor %vm3945, %vm3946
    %v3948 = vsel %vm3947, %v3940, %v3944
    %v3949 = vand.u32 2147483647, %v3924
    %vm3950 = vcmp.eq.f32.partialorder %v3949, 8.507059e+37
    %v3951 = vand.u32 %v3924, 2147483648
    %v3952 = vor.u32 1.1754944e-38, %v3951
    %v3953 = vsel %vm3950, %v3952, %v3948
    %v3954 = vmul.f32 1.0, %v3953
    %v3955 = vtanh.pop %v3914
    %v3956 = vtanh.pop %v3916
    %v3957 = vxor.u32 %v3914, 2147483648
    %v3958 = vxor.u32 %v3916, 2147483648
    %v3959 = vmul.f32 %v3957, 1.442695
    %v3960 = vpow.pop %v3959
    %v3961 = vmul.f32 %v3958, 1.442695
    %v3962 = vpow.pop %v3961
    %v3963 = vadd.f32 %v3960, 1.0
    %v3964 = vadd.f32 %v3962, 1.0
    %v3965 = vrcp.pop %v3963
    %v3966 = vmul.f32 %v3963, %v3965
    %v3967 = vsub.f32 1.0, %v3966
    %v3968 = vmul.f32 %v3965, %v3967
    %v3969 = vadd.f32 %v3965, %v3968
    %vm3970 = vweird.f32 %v3963
    %vm3971 = vweird.f32 %v3965
    %vm3972 = vmor %vm3970, %vm3971
    %v3973 = vsel %vm3972, %v3965, %v3969
    %v3974 = vand.u32 2147483647, %v3963
    %vm3975 = vcmp.eq.f32.partialorder %v3974, 8.507059e+37
    %v3976 = vand.u32 %v3963, 2147483648
    %v3977 = vor.u32 1.1754944e-38, %v3976
    %v3978 = vsel %vm3975, %v3977, %v3973
    %v3979 = vmul.f32 1.0, %v3978
    %v3980 = vrcp.pop %v3964
    %v3981 = vmul.f32 %v3964, %v3980
    %v3982 = vsub.f32 1.0, %v3981
    %v3983 = vmul.f32 %v3980, %v3982
    %v3984 = vadd.f32 %v3980, %v3983
    %vm3985 = vweird.f32 %v3964
    %vm3986 = vweird.f32 %v3980
    %vm3987 = vmor %vm3985, %vm3986
    %v3988 = vsel %vm3987, %v3980, %v3984
    %v3989 = vand.u32 2147483647, %v3964
    %vm3990 = vcmp.eq.f32.partialorder %v3989, 8.507059e+37
    %v3991 = vand.u32 %v3964, 2147483648
    %v3992 = vor.u32 1.1754944e-38, %v3991
    %v3993 = vsel %vm3990, %v3992, %v3988
    %v3994 = vmul.f32 1.0, %v3993
    %v3995 = vmul.f32 %v3939, %v3737
    %v3996 = vmul.f32 %v3954, %v3738
    %v3997 = vmul.f32 %v3939, %v3955
    %v3998 = vmul.f32 %v3954, %v3956
    %4001 = vrot.lane.b32.xlu0 %v3997, 64
    %v4002 = vpop.permute.xlu0 %4001
    %4003 = vrot.lane.b32.xlu0 %v3998, 64
    %v4004 = vpop.permute.xlu0 %4003
    %v4007 = vadd.f32 %v3995, %v4002
    %v4008 = vadd.f32 %v3996, %v4004
    %v4009 = vtanh.pop %v4007
    %v4010 = vtanh.pop %v4008
    %v4011 = vmul.f32 %v3979, %v4009
    %v4012 = vmul.f32 %v3994, %v4010
    %v4013 = vpack.c.bf16 %v3877, %v3876
    %4015 = vrot.lane.b32.xlu0 %v4013, 64
    %v4016 = vpop.permute.xlu0 %4015
    %v4018 = vsel %vm2903, %v4016, 0
    %4020 = vmatpush.bf16.msra.mxu0 0
    %4021 = vmatpush.bf16.msra.mxu0 0
    %4022 = vmatpush.bf16.msra.mxu0 0
    %4023 = vmatpush.bf16.msra.mxu0 0
    %4024 = vmatpush.bf16.msra.mxu0 %v2893
    %4025 = vmatpush.bf16.msra.mxu0 %v2891
    %4026 = vmatpush.bf16.msra.mxu0 %v2889
    %4027 = vmatpush.bf16.msra.mxu0 %v2887
    %4028 = vmatmul.bf16.gmra.mxu0 %v4018
    %v4029 = vpop.f32.mrf.mxu0
    %v4030 = vadd.f32 0.0, %v4029
    %v4031 = vpop.f32.mrf.mxu0
    %v4032 = vadd.f32 0.0, %v4031
    %4033 = vdwg.mxu0
    %4034 = vmatpush.bf16.msra.mxu0 0
    %4035 = vmatpush.bf16.msra.mxu0 0
    %4036 = vmatpush.bf16.msra.mxu0 0
    %4037 = vmatpush.bf16.msra.mxu0 0
    %4038 = vmatpush.bf16.msra.mxu0 %v2894
    %4039 = vmatpush.bf16.msra.mxu0 %v2892
    %4040 = vmatpush.bf16.msra.mxu0 %v2890
    %4041 = vmatpush.bf16.msra.mxu0 %v2888
    %4042 = vmatmul.bf16.gmra.mxu0 %v4018
    %v4043 = vpop.f32.mrf.mxu0
    %v4044 = vadd.f32 0.0, %v4043
    %v4045 = vpop.f32.mrf.mxu0
    %v4046 = vadd.f32 0.0, %v4045
    %4047 = vdwg.mxu0
    %v4048 = vadd.f32 %v2799, %v4030
    %v4049 = vadd.f32 %v2800, %v4044
    %v4050 = vadd.f32 %v2801, %v4032
    %v4051 = vadd.f32 %v2802, %v4046
    %v4052 = vxor.u32 %v4048, 2147483648
    %v4053 = vxor.u32 %v4050, 2147483648
    %v4054 = vmul.f32 %v4052, 1.442695
    %v4055 = vpow.pop %v4054
    %v4056 = vmul.f32 %v4053, 1.442695
    %v4057 = vpow.pop %v4056
    %v4058 = vadd.f32 %v4055, 1.0
    %v4059 = vadd.f32 %v4057, 1.0
    %v4060 = vrcp.pop %v4058
    %v4061 = vmul.f32 %v4058, %v4060
    %v4062 = vsub.f32 1.0, %v4061
    %v4063 = vmul.f32 %v4060, %v4062
    %v4064 = vadd.f32 %v4060, %v4063
    %vm4065 = vweird.f32 %v4058
    %vm4066 = vweird.f32 %v4060
    %vm4067 = vmor %vm4065, %vm4066
    %v4068 = vsel %vm4067, %v4060, %v4064
    %v4069 = vand.u32 2147483647, %v4058
    %vm4070 = vcmp.eq.f32.partialorder %v4069, 8.507059e+37
    %v4071 = vand.u32 %v4058, 2147483648
    %v4072 = vor.u32 1.1754944e-38, %v4071
    %v4073 = vsel %vm4070, %v4072, %v4068
    %v4074 = vmul.f32 1.0, %v4073
    %v4075 = vrcp.pop %v4059
    %v4076 = vmul.f32 %v4059, %v4075
    %v4077 = vsub.f32 1.0, %v4076
    %v4078 = vmul.f32 %v4075, %v4077
    %v4079 = vadd.f32 %v4075, %v4078
    %vm4080 = vweird.f32 %v4059
    %vm4081 = vweird.f32 %v4075
    %vm4082 = vmor %vm4080, %vm4081
    %v4083 = vsel %vm4082, %v4075, %v4079
    %v4084 = vand.u32 2147483647, %v4059
    %vm4085 = vcmp.eq.f32.partialorder %v4084, 8.507059e+37
    %v4086 = vand.u32 %v4059, 2147483648
    %v4087 = vor.u32 1.1754944e-38, %v4086
    %v4088 = vsel %vm4085, %v4087, %v4083
    %v4089 = vmul.f32 1.0, %v4088
    %v4090 = vtanh.pop %v4049
    %v4091 = vtanh.pop %v4051
    %v4092 = vxor.u32 %v4049, 2147483648
    %v4093 = vxor.u32 %v4051, 2147483648
    %v4094 = vmul.f32 %v4092, 1.442695
    %v4095 = vpow.pop %v4094
    %v4096 = vmul.f32 %v4093, 1.442695
    %v4097 = vpow.pop %v4096
    %v4098 = vadd.f32 %v4095, 1.0
    %v4099 = vadd.f32 %v4097, 1.0
    %v4100 = vrcp.pop %v4098
    %v4101 = vmul.f32 %v4098, %v4100
    %v4102 = vsub.f32 1.0, %v4101
    %v4103 = vmul.f32 %v4100, %v4102
    %v4104 = vadd.f32 %v4100, %v4103
    %vm4105 = vweird.f32 %v4098
    %vm4106 = vweird.f32 %v4100
    %vm4107 = vmor %vm4105, %vm4106
    %v4108 = vsel %vm4107, %v4100, %v4104
    %v4109 = vand.u32 2147483647, %v4098
    %vm4110 = vcmp.eq.f32.partialorder %v4109, 8.507059e+37
    %v4111 = vand.u32 %v4098, 2147483648
    %v4112 = vor.u32 1.1754944e-38, %v4111
    %v4113 = vsel %vm4110, %v4112, %v4108
    %v4114 = vmul.f32 1.0, %v4113
    %v4115 = vrcp.pop %v4099
    %v4116 = vmul.f32 %v4099, %v4115
    %v4117 = vsub.f32 1.0, %v4116
    %v4118 = vmul.f32 %v4115, %v4117
    %v4119 = vadd.f32 %v4115, %v4118
    %vm4120 = vweird.f32 %v4099
    %vm4121 = vweird.f32 %v4115
    %vm4122 = vmor %vm4120, %vm4121
    %v4123 = vsel %vm4122, %v4115, %v4119
    %v4124 = vand.u32 2147483647, %v4099
    %vm4125 = vcmp.eq.f32.partialorder %v4124, 8.507059e+37
    %v4126 = vand.u32 %v4099, 2147483648
    %v4127 = vor.u32 1.1754944e-38, %v4126
    %v4128 = vsel %vm4125, %v4127, %v4123
    %v4129 = vmul.f32 1.0, %v4128
    %v4130 = vmul.f32 %v4074, %v3872
    %v4131 = vmul.f32 %v4089, %v3873
    %v4132 = vmul.f32 %v4074, %v4090
    %v4133 = vmul.f32 %v4089, %v4091
    %4136 = vrot.lane.b32.xlu0 %v4132, 64
    %v4137 = vpop.permute.xlu0 %4136
    %4138 = vrot.lane.b32.xlu0 %v4133, 64
    %v4139 = vpop.permute.xlu0 %4138
    %v4142 = vadd.f32 %v4130, %v4137
    %v4143 = vadd.f32 %v4131, %v4139
    %v4144 = vtanh.pop %v4142
    %v4145 = vtanh.pop %v4143
    %v4146 = vmul.f32 %v4114, %v4144
    %v4147 = vmul.f32 %v4129, %v4145
    %v4148 = vpack.c.bf16 %v4012, %v4011
    %4150 = vrot.lane.b32.xlu0 %v4148, 64
    %v4151 = vpop.permute.xlu0 %4150
    %v4153 = vsel %vm2903, %v4151, 0
    %4155 = vmatpush.bf16.msra.mxu0 0
    %4156 = vmatpush.bf16.msra.mxu0 0
    %4157 = vmatpush.bf16.msra.mxu0 0
    %4158 = vmatpush.bf16.msra.mxu0 0
    %4159 = vmatpush.bf16.msra.mxu0 %v3065
    %4160 = vmatpush.bf16.msra.mxu0 %v3063
    %4161 = vmatpush.bf16.msra.mxu0 %v3061
    %4162 = vmatpush.bf16.msra.mxu0 %v3059
    %4163 = vmatmul.bf16.gmra.mxu0 %v4153
    %v4164 = vpop.f32.mrf.mxu0
    %v4165 = vadd.f32 0.0, %v4164
    %v4166 = vpop.f32.mrf.mxu0
    %v4167 = vadd.f32 0.0, %v4166
    %4168 = vdwg.mxu0
    %4169 = vmatpush.bf16.msra.mxu0 0
    %4170 = vmatpush.bf16.msra.mxu0 0
    %4171 = vmatpush.bf16.msra.mxu0 0
    %4172 = vmatpush.bf16.msra.mxu0 0
    %4173 = vmatpush.bf16.msra.mxu0 %v3066
    %4174 = vmatpush.bf16.msra.mxu0 %v3064
    %4175 = vmatpush.bf16.msra.mxu0 %v3062
    %4176 = vmatpush.bf16.msra.mxu0 %v3060
    %4177 = vmatmul.bf16.gmra.mxu0 %v4153
    %v4178 = vpop.f32.mrf.mxu0
    %v4179 = vadd.f32 0.0, %v4178
    %v4180 = vpop.f32.mrf.mxu0
    %v4181 = vadd.f32 0.0, %v4180
    %4182 = vdwg.mxu0
    %v4183 = vadd.f32 %v2831, %v4165
    %v4184 = vadd.f32 %v2832, %v4179
    %v4185 = vadd.f32 %v2833, %v4167
    %v4186 = vadd.f32 %v2834, %v4181
    %v4187 = vxor.u32 %v4183, 2147483648
    %v4188 = vxor.u32 %v4185, 2147483648
    %v4189 = vmul.f32 %v4187, 1.442695
    %v4190 = vpow.pop %v4189
    %v4191 = vmul.f32 %v4188, 1.442695
    %v4192 = vpow.pop %v4191
    %v4193 = vadd.f32 %v4190, 1.0
    %v4194 = vadd.f32 %v4192, 1.0
    %v4195 = vrcp.pop %v4193
    %v4196 = vmul.f32 %v4193, %v4195
    %v4197 = vsub.f32 1.0, %v4196
    %v4198 = vmul.f32 %v4195, %v4197
    %v4199 = vadd.f32 %v4195, %v4198
    %vm4200 = vweird.f32 %v4193
    %vm4201 = vweird.f32 %v4195
    %vm4202 = vmor %vm4200, %vm4201
    %v4203 = vsel %vm4202, %v4195, %v4199
    %v4204 = vand.u32 2147483647, %v4193
    %vm4205 = vcmp.eq.f32.partialorder %v4204, 8.507059e+37
    %v4206 = vand.u32 %v4193, 2147483648
    %v4207 = vor.u32 1.1754944e-38, %v4206
    %v4208 = vsel %vm4205, %v4207, %v4203
    %v4209 = vmul.f32 1.0, %v4208
    %v4210 = vrcp.pop %v4194
    %v4211 = vmul.f32 %v4194, %v4210
    %v4212 = vsub.f32 1.0, %v4211
    %v4213 = vmul.f32 %v4210, %v4212
    %v4214 = vadd.f32 %v4210, %v4213
    %vm4215 = vweird.f32 %v4194
    %vm4216 = vweird.f32 %v4210
    %vm4217 = vmor %vm4215, %vm4216
    %v4218 = vsel %vm4217, %v4210, %v4214
    %v4219 = vand.u32 2147483647, %v4194
    %vm4220 = vcmp.eq.f32.partialorder %v4219, 8.507059e+37
    %v4221 = vand.u32 %v4194, 2147483648
    %v4222 = vor.u32 1.1754944e-38, %v4221
    %v4223 = vsel %vm4220, %v4222, %v4218
    %v4224 = vmul.f32 1.0, %v4223
    %v4225 = vtanh.pop %v4184
    %v4226 = vtanh.pop %v4186
    %v4227 = vxor.u32 %v4184, 2147483648
    %v4228 = vxor.u32 %v4186, 2147483648
    %v4229 = vmul.f32 %v4227, 1.442695
    %v4230 = vpow.pop %v4229
    %v4231 = vmul.f32 %v4228, 1.442695
    %v4232 = vpow.pop %v4231
    %v4233 = vadd.f32 %v4230, 1.0
    %v4234 = vadd.f32 %v4232, 1.0
    %v4235 = vrcp.pop %v4233
    %v4236 = vmul.f32 %v4233, %v4235
    %v4237 = vsub.f32 1.0, %v4236
    %v4238 = vmul.f32 %v4235, %v4237
    %v4239 = vadd.f32 %v4235, %v4238
    %vm4240 = vweird.f32 %v4233
    %vm4241 = vweird.f32 %v4235
    %vm4242 = vmor %vm4240, %vm4241
    %v4243 = vsel %vm4242, %v4235, %v4239
    %v4244 = vand.u32 2147483647, %v4233
    %vm4245 = vcmp.eq.f32.partialorder %v4244, 8.507059e+37
    %v4246 = vand.u32 %v4233, 2147483648
    %v4247 = vor.u32 1.1754944e-38, %v4246
    %v4248 = vsel %vm4245, %v4247, %v4243
    %v4249 = vmul.f32 1.0, %v4248
    %v4250 = vrcp.pop %v4234
    %v4251 = vmul.f32 %v4234, %v4250
    %v4252 = vsub.f32 1.0, %v4251
    %v4253 = vmul.f32 %v4250, %v4252
    %v4254 = vadd.f32 %v4250, %v4253
    %vm4255 = vweird.f32 %v4234
    %vm4256 = vweird.f32 %v4250
    %vm4257 = vmor %vm4255, %vm4256
    %v4258 = vsel %vm4257, %v4250, %v4254
    %v4259 = vand.u32 2147483647, %v4234
    %vm4260 = vcmp.eq.f32.partialorder %v4259, 8.507059e+37
    %v4261 = vand.u32 %v4234, 2147483648
    %v4262 = vor.u32 1.1754944e-38, %v4261
    %v4263 = vsel %vm4260, %v4262, %v4258
    %v4264 = vmul.f32 1.0, %v4263
    %v4265 = vmul.f32 %v4209, %v4007
    %v4266 = vmul.f32 %v4224, %v4008
    %v4267 = vmul.f32 %v4209, %v4225
    %v4268 = vmul.f32 %v4224, %v4226
    %4271 = vrot.lane.b32.xlu0 %v4267, 64
    %v4272 = vpop.permute.xlu0 %4271
    %4273 = vrot.lane.b32.xlu0 %v4268, 64
    %v4274 = vpop.permute.xlu0 %4273
    %v4277 = vadd.f32 %v4265, %v4272
    %v4278 = vadd.f32 %v4266, %v4274
    %v4279 = vtanh.pop %v4277
    %v4280 = vtanh.pop %v4278
    %v4281 = vmul.f32 %v4249, %v4279
    %v4282 = vmul.f32 %v4264, %v4280
    %v4283 = vpack.c.bf16 %v4147, %v4146
    %4285 = vrot.lane.b32.xlu0 %v4283, 64
    %v4286 = vpop.permute.xlu0 %4285
    %v4288 = vsel %vm2903, %v4286, 0
    %4290 = vmatpush.bf16.msra.mxu0 0
    %4291 = vmatpush.bf16.msra.mxu0 0
    %4292 = vmatpush.bf16.msra.mxu0 0
    %4293 = vmatpush.bf16.msra.mxu0 0
    %4294 = vmatpush.bf16.msra.mxu0 %v2893
    %4295 = vmatpush.bf16.msra.mxu0 %v2891
    %4296 = vmatpush.bf16.msra.mxu0 %v2889
    %4297 = vmatpush.bf16.msra.mxu0 %v2887
    %4298 = vmatmul.bf16.gmra.mxu0 %v4288
    %v4299 = vpop.f32.mrf.mxu0
    %v4300 = vadd.f32 0.0, %v4299
    %v4301 = vpop.f32.mrf.mxu0
    %v4302 = vadd.f32 0.0, %v4301
    %4303 = vdwg.mxu0
    %4304 = vmatpush.bf16.msra.mxu0 0
    %4305 = vmatpush.bf16.msra.mxu0 0
    %4306 = vmatpush.bf16.msra.mxu0 0
    %4307 = vmatpush.bf16.msra.mxu0 0
    %4308 = vmatpush.bf16.msra.mxu0 %v2894
    %4309 = vmatpush.bf16.msra.mxu0 %v2892
    %4310 = vmatpush.bf16.msra.mxu0 %v2890
    %4311 = vmatpush.bf16.msra.mxu0 %v2888
    %4312 = vmatmul.bf16.gmra.mxu0 %v4288
    %v4313 = vpop.f32.mrf.mxu0
    %v4314 = vadd.f32 0.0, %v4313
    %v4315 = vpop.f32.mrf.mxu0
    %v4316 = vadd.f32 0.0, %v4315
    %4317 = vdwg.mxu0
    %v4318 = vadd.f32 %v2803, %v4300
    %v4319 = vadd.f32 %v2804, %v4314
    %v4320 = vadd.f32 %v2805, %v4302
    %v4321 = vadd.f32 %v2806, %v4316
    %v4322 = vxor.u32 %v4318, 2147483648
    %v4323 = vxor.u32 %v4320, 2147483648
    %v4324 = vmul.f32 %v4322, 1.442695
    %v4325 = vpow.pop %v4324
    %v4326 = vmul.f32 %v4323, 1.442695
    %v4327 = vpow.pop %v4326
    %v4328 = vadd.f32 %v4325, 1.0
    %v4329 = vadd.f32 %v4327, 1.0
    %v4330 = vrcp.pop %v4328
    %v4331 = vmul.f32 %v4328, %v4330
    %v4332 = vsub.f32 1.0, %v4331
    %v4333 = vmul.f32 %v4330, %v4332
    %v4334 = vadd.f32 %v4330, %v4333
    %vm4335 = vweird.f32 %v4328
    %vm4336 = vweird.f32 %v4330
    %vm4337 = vmor %vm4335, %vm4336
    %v4338 = vsel %vm4337, %v4330, %v4334
    %v4339 = vand.u32 2147483647, %v4328
    %vm4340 = vcmp.eq.f32.partialorder %v4339, 8.507059e+37
    %v4341 = vand.u32 %v4328, 2147483648
    %v4342 = vor.u32 1.1754944e-38, %v4341
    %v4343 = vsel %vm4340, %v4342, %v4338
    %v4344 = vmul.f32 1.0, %v4343
    %v4345 = vrcp.pop %v4329
    %v4346 = vmul.f32 %v4329, %v4345
    %v4347 = vsub.f32 1.0, %v4346
    %v4348 = vmul.f32 %v4345, %v4347
    %v4349 = vadd.f32 %v4345, %v4348
    %vm4350 = vweird.f32 %v4329
    %vm4351 = vweird.f32 %v4345
    %vm4352 = vmor %vm4350, %vm4351
    %v4353 = vsel %vm4352, %v4345, %v4349
    %v4354 = vand.u32 2147483647, %v4329
    %vm4355 = vcmp.eq.f32.partialorder %v4354, 8.507059e+37
    %v4356 = vand.u32 %v4329, 2147483648
    %v4357 = vor.u32 1.1754944e-38, %v4356
    %v4358 = vsel %vm4355, %v4357, %v4353
    %v4359 = vmul.f32 1.0, %v4358
    %v4360 = vtanh.pop %v4319
    %v4361 = vtanh.pop %v4321
    %v4362 = vxor.u32 %v4319, 2147483648
    %v4363 = vxor.u32 %v4321, 2147483648
    %v4364 = vmul.f32 %v4362, 1.442695
    %v4365 = vpow.pop %v4364
    %v4366 = vmul.f32 %v4363, 1.442695
    %v4367 = vpow.pop %v4366
    %v4368 = vadd.f32 %v4365, 1.0
    %v4369 = vadd.f32 %v4367, 1.0
    %v4370 = vrcp.pop %v4368
    %v4371 = vmul.f32 %v4368, %v4370
    %v4372 = vsub.f32 1.0, %v4371
    %v4373 = vmul.f32 %v4370, %v4372
    %v4374 = vadd.f32 %v4370, %v4373
    %vm4375 = vweird.f32 %v4368
    %vm4376 = vweird.f32 %v4370
    %vm4377 = vmor %vm4375, %vm4376
    %v4378 = vsel %vm4377, %v4370, %v4374
    %v4379 = vand.u32 2147483647, %v4368
    %vm4380 = vcmp.eq.f32.partialorder %v4379, 8.507059e+37
    %v4381 = vand.u32 %v4368, 2147483648
    %v4382 = vor.u32 1.1754944e-38, %v4381
    %v4383 = vsel %vm4380, %v4382, %v4378
    %v4384 = vmul.f32 1.0, %v4383
    %v4385 = vrcp.pop %v4369
    %v4386 = vmul.f32 %v4369, %v4385
    %v4387 = vsub.f32 1.0, %v4386
    %v4388 = vmul.f32 %v4385, %v4387
    %v4389 = vadd.f32 %v4385, %v4388
    %vm4390 = vweird.f32 %v4369
    %vm4391 = vweird.f32 %v4385
    %vm4392 = vmor %vm4390, %vm4391
    %v4393 = vsel %vm4392, %v4385, %v4389
    %v4394 = vand.u32 2147483647, %v4369
    %vm4395 = vcmp.eq.f32.partialorder %v4394, 8.507059e+37
    %v4396 = vand.u32 %v4369, 2147483648
    %v4397 = vor.u32 1.1754944e-38, %v4396
    %v4398 = vsel %vm4395, %v4397, %v4393
    %v4399 = vmul.f32 1.0, %v4398
    %v4400 = vmul.f32 %v4344, %v4142
    %v4401 = vmul.f32 %v4359, %v4143
    %v4402 = vmul.f32 %v4344, %v4360
    %v4403 = vmul.f32 %v4359, %v4361
    %4406 = vrot.lane.b32.xlu0 %v4402, 64
    %v4407 = vpop.permute.xlu0 %4406
    %4408 = vrot.lane.b32.xlu0 %v4403, 64
    %v4409 = vpop.permute.xlu0 %4408
    %v4412 = vadd.f32 %v4400, %v4407
    %v4413 = vadd.f32 %v4401, %v4409
    %v4414 = vtanh.pop %v4412
    %v4415 = vtanh.pop %v4413
    %v4416 = vmul.f32 %v4384, %v4414
    %v4417 = vmul.f32 %v4399, %v4415
    %v4418 = vpack.c.bf16 %v4282, %v4281
    %4420 = vrot.lane.b32.xlu0 %v4418, 64
    %v4421 = vpop.permute.xlu0 %4420
    %v4423 = vsel %vm2903, %v4421, 0
    %4425 = vmatpush.bf16.msra.mxu0 0
    %4426 = vmatpush.bf16.msra.mxu0 0
    %4427 = vmatpush.bf16.msra.mxu0 0
    %4428 = vmatpush.bf16.msra.mxu0 0
    %4429 = vmatpush.bf16.msra.mxu0 %v3065
    %4430 = vmatpush.bf16.msra.mxu0 %v3063
    %4431 = vmatpush.bf16.msra.mxu0 %v3061
    %4432 = vmatpush.bf16.msra.mxu0 %v3059
    %4433 = vmatmul.bf16.gmra.mxu0 %v4423
    %v4434 = vpop.f32.mrf.mxu0
    %v4435 = vadd.f32 0.0, %v4434
    %v4436 = vpop.f32.mrf.mxu0
    %v4437 = vadd.f32 0.0, %v4436
    %4438 = vdwg.mxu0
    %4439 = vmatpush.bf16.msra.mxu0 0
    %4440 = vmatpush.bf16.msra.mxu0 0
    %4441 = vmatpush.bf16.msra.mxu0 0
    %4442 = vmatpush.bf16.msra.mxu0 0
    %4443 = vmatpush.bf16.msra.mxu0 %v3066
    %4444 = vmatpush.bf16.msra.mxu0 %v3064
    %4445 = vmatpush.bf16.msra.mxu0 %v3062
    %4446 = vmatpush.bf16.msra.mxu0 %v3060
    %4447 = vmatmul.bf16.gmra.mxu0 %v4423
    %v4448 = vpop.f32.mrf.mxu0
    %v4449 = vadd.f32 0.0, %v4448
    %v4450 = vpop.f32.mrf.mxu0
    %v4451 = vadd.f32 0.0, %v4450
    %4452 = vdwg.mxu0
    %v4453 = vadd.f32 %v2835, %v4435
    %v4454 = vadd.f32 %v2836, %v4449
    %v4455 = vadd.f32 %v2837, %v4437
    %v4456 = vadd.f32 %v2838, %v4451
    %v4457 = vxor.u32 %v4453, 2147483648
    %v4458 = vxor.u32 %v4455, 2147483648
    %v4459 = vmul.f32 %v4457, 1.442695
    %v4460 = vpow.pop %v4459
    %v4461 = vmul.f32 %v4458, 1.442695
    %v4462 = vpow.pop %v4461
    %v4463 = vadd.f32 %v4460, 1.0
    %v4464 = vadd.f32 %v4462, 1.0
    %v4465 = vrcp.pop %v4463
    %v4466 = vmul.f32 %v4463, %v4465
    %v4467 = vsub.f32 1.0, %v4466
    %v4468 = vmul.f32 %v4465, %v4467
    %v4469 = vadd.f32 %v4465, %v4468
    %vm4470 = vweird.f32 %v4463
    %vm4471 = vweird.f32 %v4465
    %vm4472 = vmor %vm4470, %vm4471
    %v4473 = vsel %vm4472, %v4465, %v4469
    %v4474 = vand.u32 2147483647, %v4463
    %vm4475 = vcmp.eq.f32.partialorder %v4474, 8.507059e+37
    %v4476 = vand.u32 %v4463, 2147483648
    %v4477 = vor.u32 1.1754944e-38, %v4476
    %v4478 = vsel %vm4475, %v4477, %v4473
    %v4479 = vmul.f32 1.0, %v4478
    %v4480 = vrcp.pop %v4464
    %v4481 = vmul.f32 %v4464, %v4480
    %v4482 = vsub.f32 1.0, %v4481
    %v4483 = vmul.f32 %v4480, %v4482
    %v4484 = vadd.f32 %v4480, %v4483
    %vm4485 = vweird.f32 %v4464
    %vm4486 = vweird.f32 %v4480
    %vm4487 = vmor %vm4485, %vm4486
    %v4488 = vsel %vm4487, %v4480, %v4484
    %v4489 = vand.u32 2147483647, %v4464
    %vm4490 = vcmp.eq.f32.partialorder %v4489, 8.507059e+37
    %v4491 = vand.u32 %v4464, 2147483648
    %v4492 = vor.u32 1.1754944e-38, %v4491
    %v4493 = vsel %vm4490, %v4492, %v4488
    %v4494 = vmul.f32 1.0, %v4493
    %v4495 = vtanh.pop %v4454
    %v4496 = vtanh.pop %v4456
    %v4497 = vxor.u32 %v4454, 2147483648
    %v4498 = vxor.u32 %v4456, 2147483648
    %v4499 = vmul.f32 %v4497, 1.442695
    %v4500 = vpow.pop %v4499
    %v4501 = vmul.f32 %v4498, 1.442695
    %v4502 = vpow.pop %v4501
    %v4503 = vadd.f32 %v4500, 1.0
    %v4504 = vadd.f32 %v4502, 1.0
    %v4505 = vrcp.pop %v4503
    %v4506 = vmul.f32 %v4503, %v4505
    %v4507 = vsub.f32 1.0, %v4506
    %v4508 = vmul.f32 %v4505, %v4507
    %v4509 = vadd.f32 %v4505, %v4508
    %vm4510 = vweird.f32 %v4503
    %vm4511 = vweird.f32 %v4505
    %vm4512 = vmor %vm4510, %vm4511
    %v4513 = vsel %vm4512, %v4505, %v4509
    %v4514 = vand.u32 2147483647, %v4503
    %vm4515 = vcmp.eq.f32.partialorder %v4514, 8.507059e+37
    %v4516 = vand.u32 %v4503, 2147483648
    %v4517 = vor.u32 1.1754944e-38, %v4516
    %v4518 = vsel %vm4515, %v4517, %v4513
    %v4519 = vmul.f32 1.0, %v4518
    %v4520 = vrcp.pop %v4504
    %v4521 = vmul.f32 %v4504, %v4520
    %v4522 = vsub.f32 1.0, %v4521
    %v4523 = vmul.f32 %v4520, %v4522
    %v4524 = vadd.f32 %v4520, %v4523
    %vm4525 = vweird.f32 %v4504
    %vm4526 = vweird.f32 %v4520
    %vm4527 = vmor %vm4525, %vm4526
    %v4528 = vsel %vm4527, %v4520, %v4524
    %v4529 = vand.u32 2147483647, %v4504
    %vm4530 = vcmp.eq.f32.partialorder %v4529, 8.507059e+37
    %v4531 = vand.u32 %v4504, 2147483648
    %v4532 = vor.u32 1.1754944e-38, %v4531
    %v4533 = vsel %vm4530, %v4532, %v4528
    %v4534 = vmul.f32 1.0, %v4533
    %v4535 = vmul.f32 %v4479, %v4277
    %v4536 = vmul.f32 %v4494, %v4278
    %v4537 = vmul.f32 %v4479, %v4495
    %v4538 = vmul.f32 %v4494, %v4496
    %4541 = vrot.lane.b32.xlu0 %v4537, 64
    %v4542 = vpop.permute.xlu0 %4541
    %4543 = vrot.lane.b32.xlu0 %v4538, 64
    %v4544 = vpop.permute.xlu0 %4543
    %v4547 = vadd.f32 %v4535, %v4542
    %v4548 = vadd.f32 %v4536, %v4544
    %v4549 = vtanh.pop %v4547
    %v4550 = vtanh.pop %v4548
    %v4551 = vmul.f32 %v4519, %v4549
    %v4552 = vmul.f32 %v4534, %v4550
    %v4553 = vpack.c.bf16 %v4417, %v4416
    %4555 = vrot.lane.b32.xlu0 %v4553, 64
    %v4556 = vpop.permute.xlu0 %4555
    %v4558 = vsel %vm2903, %v4556, 0
    %4560 = vmatpush.bf16.msra.mxu0 0
    %4561 = vmatpush.bf16.msra.mxu0 0
    %4562 = vmatpush.bf16.msra.mxu0 0
    %4563 = vmatpush.bf16.msra.mxu0 0
    %4564 = vmatpush.bf16.msra.mxu0 %v2893
    %4565 = vmatpush.bf16.msra.mxu0 %v2891
    %4566 = vmatpush.bf16.msra.mxu0 %v2889
    %4567 = vmatpush.bf16.msra.mxu0 %v2887
    %4568 = vmatmul.bf16.gmra.mxu0 %v4558
    %v4569 = vpop.f32.mrf.mxu0
    %v4570 = vadd.f32 0.0, %v4569
    %v4571 = vpop.f32.mrf.mxu0
    %v4572 = vadd.f32 0.0, %v4571
    %4573 = vdwg.mxu0
    %4574 = vmatpush.bf16.msra.mxu0 0
    %4575 = vmatpush.bf16.msra.mxu0 0
    %4576 = vmatpush.bf16.msra.mxu0 0
    %4577 = vmatpush.bf16.msra.mxu0 0
    %4578 = vmatpush.bf16.msra.mxu0 %v2894
    %4579 = vmatpush.bf16.msra.mxu0 %v2892
    %4580 = vmatpush.bf16.msra.mxu0 %v2890
    %4581 = vmatpush.bf16.msra.mxu0 %v2888
    %4582 = vmatmul.bf16.gmra.mxu0 %v4558
    %v4583 = vpop.f32.mrf.mxu0
    %v4584 = vadd.f32 0.0, %v4583
    %v4585 = vpop.f32.mrf.mxu0
    %v4586 = vadd.f32 0.0, %v4585
    %4587 = vdwg.mxu0
    %v4588 = vadd.f32 %v2807, %v4570
    %v4589 = vadd.f32 %v2808, %v4584
    %v4590 = vadd.f32 %v2809, %v4572
    %v4591 = vadd.f32 %v2810, %v4586
    %v4592 = vxor.u32 %v4588, 2147483648
    %v4593 = vxor.u32 %v4590, 2147483648
    %v4594 = vmul.f32 %v4592, 1.442695
    %v4595 = vpow.pop %v4594
    %v4596 = vmul.f32 %v4593, 1.442695
    %v4597 = vpow.pop %v4596
    %v4598 = vadd.f32 %v4595, 1.0
    %v4599 = vadd.f32 %v4597, 1.0
    %v4600 = vrcp.pop %v4598
    %v4601 = vmul.f32 %v4598, %v4600
    %v4602 = vsub.f32 1.0, %v4601
    %v4603 = vmul.f32 %v4600, %v4602
    %v4604 = vadd.f32 %v4600, %v4603
    %vm4605 = vweird.f32 %v4598
    %vm4606 = vweird.f32 %v4600
    %vm4607 = vmor %vm4605, %vm4606
    %v4608 = vsel %vm4607, %v4600, %v4604
    %v4609 = vand.u32 2147483647, %v4598
    %vm4610 = vcmp.eq.f32.partialorder %v4609, 8.507059e+37
    %v4611 = vand.u32 %v4598, 2147483648
    %v4612 = vor.u32 1.1754944e-38, %v4611
    %v4613 = vsel %vm4610, %v4612, %v4608
    %v4614 = vmul.f32 1.0, %v4613
    %v4615 = vrcp.pop %v4599
    %v4616 = vmul.f32 %v4599, %v4615
    %v4617 = vsub.f32 1.0, %v4616
    %v4618 = vmul.f32 %v4615, %v4617
    %v4619 = vadd.f32 %v4615, %v4618
    %vm4620 = vweird.f32 %v4599
    %vm4621 = vweird.f32 %v4615
    %vm4622 = vmor %vm4620, %vm4621
    %v4623 = vsel %vm4622, %v4615, %v4619
    %v4624 = vand.u32 2147483647, %v4599
    %vm4625 = vcmp.eq.f32.partialorder %v4624, 8.507059e+37
    %v4626 = vand.u32 %v4599, 2147483648
    %v4627 = vor.u32 1.1754944e-38, %v4626
    %v4628 = vsel %vm4625, %v4627, %v4623
    %v4629 = vmul.f32 1.0, %v4628
    %v4630 = vtanh.pop %v4589
    %v4631 = vtanh.pop %v4591
    %v4632 = vxor.u32 %v4589, 2147483648
    %v4633 = vxor.u32 %v4591, 2147483648
    %v4634 = vmul.f32 %v4632, 1.442695
    %v4635 = vpow.pop %v4634
    %v4636 = vmul.f32 %v4633, 1.442695
    %v4637 = vpow.pop %v4636
    %v4638 = vadd.f32 %v4635, 1.0
    %v4639 = vadd.f32 %v4637, 1.0
    %v4640 = vrcp.pop %v4638
    %v4641 = vmul.f32 %v4638, %v4640
    %v4642 = vsub.f32 1.0, %v4641
    %v4643 = vmul.f32 %v4640, %v4642
    %v4644 = vadd.f32 %v4640, %v4643
    %vm4645 = vweird.f32 %v4638
    %vm4646 = vweird.f32 %v4640
    %vm4647 = vmor %vm4645, %vm4646
    %v4648 = vsel %vm4647, %v4640, %v4644
    %v4649 = vand.u32 2147483647, %v4638
    %vm4650 = vcmp.eq.f32.partialorder %v4649, 8.507059e+37
    %v4651 = vand.u32 %v4638, 2147483648
    %v4652 = vor.u32 1.1754944e-38, %v4651
    %v4653 = vsel %vm4650, %v4652, %v4648
    %v4654 = vmul.f32 1.0, %v4653
    %v4655 = vrcp.pop %v4639
    %v4656 = vmul.f32 %v4639, %v4655
    %v4657 = vsub.f32 1.0, %v4656
    %v4658 = vmul.f32 %v4655, %v4657
    %v4659 = vadd.f32 %v4655, %v4658
    %vm4660 = vweird.f32 %v4639
    %vm4661 = vweird.f32 %v4655
    %vm4662 = vmor %vm4660, %vm4661
    %v4663 = vsel %vm4662, %v4655, %v4659
    %v4664 = vand.u32 2147483647, %v4639
    %vm4665 = vcmp.eq.f32.partialorder %v4664, 8.507059e+37
    %v4666 = vand.u32 %v4639, 2147483648
    %v4667 = vor.u32 1.1754944e-38, %v4666
    %v4668 = vsel %vm4665, %v4667, %v4663
    %v4669 = vmul.f32 1.0, %v4668
    %v4670 = vmul.f32 %v4614, %v4412
    %v4671 = vmul.f32 %v4629, %v4413
    %v4672 = vmul.f32 %v4614, %v4630
    %v4673 = vmul.f32 %v4629, %v4631
    %4676 = vrot.lane.b32.xlu0 %v4672, 64
    %v4677 = vpop.permute.xlu0 %4676
    %4678 = vrot.lane.b32.xlu0 %v4673, 64
    %v4679 = vpop.permute.xlu0 %4678
    %v4682 = vadd.f32 %v4670, %v4677
    %v4683 = vadd.f32 %v4671, %v4679
    %v4684 = vtanh.pop %v4682
    %v4685 = vtanh.pop %v4683
    %v4686 = vmul.f32 %v4654, %v4684
    %v4687 = vmul.f32 %v4669, %v4685
    %v4688 = vpack.c.bf16 %v4552, %v4551
    %4690 = vrot.lane.b32.xlu0 %v4688, 64
    %v4691 = vpop.permute.xlu0 %4690
    %v4693 = vsel %vm2903, %v4691, 0
    %4695 = vmatpush.bf16.msra.mxu0 0
    %4696 = vmatpush.bf16.msra.mxu0 0
    %4697 = vmatpush.bf16.msra.mxu0 0
    %4698 = vmatpush.bf16.msra.mxu0 0
    %4699 = vmatpush.bf16.msra.mxu0 %v3065
    %4700 = vmatpush.bf16.msra.mxu0 %v3063
    %4701 = vmatpush.bf16.msra.mxu0 %v3061
    %4702 = vmatpush.bf16.msra.mxu0 %v3059
    %4703 = vmatmul.bf16.gmra.mxu0 %v4693
    %v4704 = vpop.f32.mrf.mxu0
    %v4705 = vadd.f32 0.0, %v4704
    %v4706 = vpop.f32.mrf.mxu0
    %v4707 = vadd.f32 0.0, %v4706
    %4708 = vdwg.mxu0
    %4709 = vmatpush.bf16.msra.mxu0 0
    %4710 = vmatpush.bf16.msra.mxu0 0
    %4711 = vmatpush.bf16.msra.mxu0 0
    %4712 = vmatpush.bf16.msra.mxu0 0
    %4713 = vmatpush.bf16.msra.mxu0 %v3066
    %4714 = vmatpush.bf16.msra.mxu0 %v3064
    %4715 = vmatpush.bf16.msra.mxu0 %v3062
    %4716 = vmatpush.bf16.msra.mxu0 %v3060
    %4717 = vmatmul.bf16.gmra.mxu0 %v4693
    %v4718 = vpop.f32.mrf.mxu0
    %v4719 = vadd.f32 0.0, %v4718
    %v4720 = vpop.f32.mrf.mxu0
    %v4721 = vadd.f32 0.0, %v4720
    %4722 = vdwg.mxu0
    %v4723 = vadd.f32 %v2839, %v4705
    %v4724 = vadd.f32 %v2840, %v4719
    %v4725 = vadd.f32 %v2841, %v4707
    %v4726 = vadd.f32 %v2842, %v4721
    %v4727 = vxor.u32 %v4723, 2147483648
    %v4728 = vxor.u32 %v4725, 2147483648
    %v4729 = vmul.f32 %v4727, 1.442695
    %v4730 = vpow.pop %v4729
    %v4731 = vmul.f32 %v4728, 1.442695
    %v4732 = vpow.pop %v4731
    %v4733 = vadd.f32 %v4730, 1.0
    %v4734 = vadd.f32 %v4732, 1.0
    %v4735 = vrcp.pop %v4733
    %v4736 = vmul.f32 %v4733, %v4735
    %v4737 = vsub.f32 1.0, %v4736
    %v4738 = vmul.f32 %v4735, %v4737
    %v4739 = vadd.f32 %v4735, %v4738
    %vm4740 = vweird.f32 %v4733
    %vm4741 = vweird.f32 %v4735
    %vm4742 = vmor %vm4740, %vm4741
    %v4743 = vsel %vm4742, %v4735, %v4739
    %v4744 = vand.u32 2147483647, %v4733
    %vm4745 = vcmp.eq.f32.partialorder %v4744, 8.507059e+37
    %v4746 = vand.u32 %v4733, 2147483648
    %v4747 = vor.u32 1.1754944e-38, %v4746
    %v4748 = vsel %vm4745, %v4747, %v4743
    %v4749 = vmul.f32 1.0, %v4748
    %v4750 = vrcp.pop %v4734
    %v4751 = vmul.f32 %v4734, %v4750
    %v4752 = vsub.f32 1.0, %v4751
    %v4753 = vmul.f32 %v4750, %v4752
    %v4754 = vadd.f32 %v4750, %v4753
    %vm4755 = vweird.f32 %v4734
    %vm4756 = vweird.f32 %v4750
    %vm4757 = vmor %vm4755, %vm4756
    %v4758 = vsel %vm4757, %v4750, %v4754
    %v4759 = vand.u32 2147483647, %v4734
    %vm4760 = vcmp.eq.f32.partialorder %v4759, 8.507059e+37
    %v4761 = vand.u32 %v4734, 2147483648
    %v4762 = vor.u32 1.1754944e-38, %v4761
    %v4763 = vsel %vm4760, %v4762, %v4758
    %v4764 = vmul.f32 1.0, %v4763
    %v4765 = vtanh.pop %v4724
    %v4766 = vtanh.pop %v4726
    %v4767 = vxor.u32 %v4724, 2147483648
    %v4768 = vxor.u32 %v4726, 2147483648
    %v4769 = vmul.f32 %v4767, 1.442695
    %v4770 = vpow.pop %v4769
    %v4771 = vmul.f32 %v4768, 1.442695
    %v4772 = vpow.pop %v4771
    %v4773 = vadd.f32 %v4770, 1.0
    %v4774 = vadd.f32 %v4772, 1.0
    %v4775 = vrcp.pop %v4773
    %v4776 = vmul.f32 %v4773, %v4775
    %v4777 = vsub.f32 1.0, %v4776
    %v4778 = vmul.f32 %v4775, %v4777
    %v4779 = vadd.f32 %v4775, %v4778
    %vm4780 = vweird.f32 %v4773
    %vm4781 = vweird.f32 %v4775
    %vm4782 = vmor %vm4780, %vm4781
    %v4783 = vsel %vm4782, %v4775, %v4779
    %v4784 = vand.u32 2147483647, %v4773
    %vm4785 = vcmp.eq.f32.partialorder %v4784, 8.507059e+37
    %v4786 = vand.u32 %v4773, 2147483648
    %v4787 = vor.u32 1.1754944e-38, %v4786
    %v4788 = vsel %vm4785, %v4787, %v4783
    %v4789 = vmul.f32 1.0, %v4788
    %v4790 = vrcp.pop %v4774
    %v4791 = vmul.f32 %v4774, %v4790
    %v4792 = vsub.f32 1.0, %v4791
    %v4793 = vmul.f32 %v4790, %v4792
    %v4794 = vadd.f32 %v4790, %v4793
    %vm4795 = vweird.f32 %v4774
    %vm4796 = vweird.f32 %v4790
    %vm4797 = vmor %vm4795, %vm4796
    %v4798 = vsel %vm4797, %v4790, %v4794
    %v4799 = vand.u32 2147483647, %v4774
    %vm4800 = vcmp.eq.f32.partialorder %v4799, 8.507059e+37
    %v4801 = vand.u32 %v4774, 2147483648
    %v4802 = vor.u32 1.1754944e-38, %v4801
    %v4803 = vsel %vm4800, %v4802, %v4798
    %v4804 = vmul.f32 1.0, %v4803
    %v4805 = vmul.f32 %v4749, %v4547
    %v4806 = vmul.f32 %v4764, %v4548
    %v4807 = vmul.f32 %v4749, %v4765
    %v4808 = vmul.f32 %v4764, %v4766
    %4811 = vrot.lane.b32.xlu0 %v4807, 64
    %v4812 = vpop.permute.xlu0 %4811
    %4813 = vrot.lane.b32.xlu0 %v4808, 64
    %v4814 = vpop.permute.xlu0 %4813
    %v4817 = vadd.f32 %v4805, %v4812
    %v4818 = vadd.f32 %v4806, %v4814
    %v4819 = vtanh.pop %v4817
    %v4820 = vtanh.pop %v4818
    %v4821 = vmul.f32 %v4789, %v4819
    %v4822 = vmul.f32 %v4804, %v4820
    %v4823 = vpack.c.bf16 %v4687, %v4686
    %4825 = vrot.lane.b32.xlu0 %v4823, 64
    %v4826 = vpop.permute.xlu0 %4825
    %v4828 = vsel %vm2903, %v4826, 0
    %4830 = vmatpush.bf16.msra.mxu0 0
    %4831 = vmatpush.bf16.msra.mxu0 0
    %4832 = vmatpush.bf16.msra.mxu0 0
    %4833 = vmatpush.bf16.msra.mxu0 0
    %4834 = vmatpush.bf16.msra.mxu0 %v2893
    %4835 = vmatpush.bf16.msra.mxu0 %v2891
    %4836 = vmatpush.bf16.msra.mxu0 %v2889
    %4837 = vmatpush.bf16.msra.mxu0 %v2887
    %4838 = vmatmul.bf16.gmra.mxu0 %v4828
    %v4839 = vpop.f32.mrf.mxu0
    %v4840 = vadd.f32 0.0, %v4839
    %v4841 = vpop.f32.mrf.mxu0
    %v4842 = vadd.f32 0.0, %v4841
    %4843 = vdwg.mxu0
    %4844 = vmatpush.bf16.msra.mxu0 0
    %4845 = vmatpush.bf16.msra.mxu0 0
    %4846 = vmatpush.bf16.msra.mxu0 0
    %4847 = vmatpush.bf16.msra.mxu0 0
    %4848 = vmatpush.bf16.msra.mxu0 %v2894
    %4849 = vmatpush.bf16.msra.mxu0 %v2892
    %4850 = vmatpush.bf16.msra.mxu0 %v2890
    %4851 = vmatpush.bf16.msra.mxu0 %v2888
    %4852 = vmatmul.bf16.gmra.mxu0 %v4828
    %v4853 = vpop.f32.mrf.mxu0
    %v4854 = vadd.f32 0.0, %v4853
    %v4855 = vpop.f32.mrf.mxu0
    %v4856 = vadd.f32 0.0, %v4855
    %4857 = vdwg.mxu0
    %v4858 = vadd.f32 %v2811, %v4840
    %v4859 = vadd.f32 %v2812, %v4854
    %v4860 = vadd.f32 %v2813, %v4842
    %v4861 = vadd.f32 %v2814, %v4856
    %v4862 = vxor.u32 %v4858, 2147483648
    %v4863 = vxor.u32 %v4860, 2147483648
    %v4864 = vmul.f32 %v4862, 1.442695
    %v4865 = vpow.pop %v4864
    %v4866 = vmul.f32 %v4863, 1.442695
    %v4867 = vpow.pop %v4866
    %v4868 = vadd.f32 %v4865, 1.0
    %v4869 = vadd.f32 %v4867, 1.0
    %v4870 = vrcp.pop %v4868
    %v4871 = vmul.f32 %v4868, %v4870
    %v4872 = vsub.f32 1.0, %v4871
    %v4873 = vmul.f32 %v4870, %v4872
    %v4874 = vadd.f32 %v4870, %v4873
    %vm4875 = vweird.f32 %v4868
    %vm4876 = vweird.f32 %v4870
    %vm4877 = vmor %vm4875, %vm4876
    %v4878 = vsel %vm4877, %v4870, %v4874
    %v4879 = vand.u32 2147483647, %v4868
    %vm4880 = vcmp.eq.f32.partialorder %v4879, 8.507059e+37
    %v4881 = vand.u32 %v4868, 2147483648
    %v4882 = vor.u32 1.1754944e-38, %v4881
    %v4883 = vsel %vm4880, %v4882, %v4878
    %v4884 = vmul.f32 1.0, %v4883
    %v4885 = vrcp.pop %v4869
    %v4886 = vmul.f32 %v4869, %v4885
    %v4887 = vsub.f32 1.0, %v4886
    %v4888 = vmul.f32 %v4885, %v4887
    %v4889 = vadd.f32 %v4885, %v4888
    %vm4890 = vweird.f32 %v4869
    %vm4891 = vweird.f32 %v4885
    %vm4892 = vmor %vm4890, %vm4891
    %v4893 = vsel %vm4892, %v4885, %v4889
    %v4894 = vand.u32 2147483647, %v4869
    %vm4895 = vcmp.eq.f32.partialorder %v4894, 8.507059e+37
    %v4896 = vand.u32 %v4869, 2147483648
    %v4897 = vor.u32 1.1754944e-38, %v4896
    %v4898 = vsel %vm4895, %v4897, %v4893
    %v4899 = vmul.f32 1.0, %v4898
    %v4900 = vtanh.pop %v4859
    %v4901 = vtanh.pop %v4861
    %v4902 = vxor.u32 %v4859, 2147483648
    %v4903 = vxor.u32 %v4861, 2147483648
    %v4904 = vmul.f32 %v4902, 1.442695
    %v4905 = vpow.pop %v4904
    %v4906 = vmul.f32 %v4903, 1.442695
    %v4907 = vpow.pop %v4906
    %v4908 = vadd.f32 %v4905, 1.0
    %v4909 = vadd.f32 %v4907, 1.0
    %v4910 = vrcp.pop %v4908
    %v4911 = vmul.f32 %v4908, %v4910
    %v4912 = vsub.f32 1.0, %v4911
    %v4913 = vmul.f32 %v4910, %v4912
    %v4914 = vadd.f32 %v4910, %v4913
    %vm4915 = vweird.f32 %v4908
    %vm4916 = vweird.f32 %v4910
    %vm4917 = vmor %vm4915, %vm4916
    %v4918 = vsel %vm4917, %v4910, %v4914
    %v4919 = vand.u32 2147483647, %v4908
    %vm4920 = vcmp.eq.f32.partialorder %v4919, 8.507059e+37
    %v4921 = vand.u32 %v4908, 2147483648
    %v4922 = vor.u32 1.1754944e-38, %v4921
    %v4923 = vsel %vm4920, %v4922, %v4918
    %v4924 = vmul.f32 1.0, %v4923
    %v4925 = vrcp.pop %v4909
    %v4926 = vmul.f32 %v4909, %v4925
    %v4927 = vsub.f32 1.0, %v4926
    %v4928 = vmul.f32 %v4925, %v4927
    %v4929 = vadd.f32 %v4925, %v4928
    %vm4930 = vweird.f32 %v4909
    %vm4931 = vweird.f32 %v4925
    %vm4932 = vmor %vm4930, %vm4931
    %v4933 = vsel %vm4932, %v4925, %v4929
    %v4934 = vand.u32 2147483647, %v4909
    %vm4935 = vcmp.eq.f32.partialorder %v4934, 8.507059e+37
    %v4936 = vand.u32 %v4909, 2147483648
    %v4937 = vor.u32 1.1754944e-38, %v4936
    %v4938 = vsel %vm4935, %v4937, %v4933
    %v4939 = vmul.f32 1.0, %v4938
    %v4940 = vmul.f32 %v4884, %v4682
    %v4941 = vmul.f32 %v4899, %v4683
    %v4942 = vmul.f32 %v4884, %v4900
    %v4943 = vmul.f32 %v4899, %v4901
    %4946 = vrot.lane.b32.xlu0 %v4942, 64
    %v4947 = vpop.permute.xlu0 %4946
    %4948 = vrot.lane.b32.xlu0 %v4943, 64
    %v4949 = vpop.permute.xlu0 %4948
    %v4952 = vadd.f32 %v4940, %v4947
    %v4953 = vadd.f32 %v4941, %v4949
    %v4954 = vtanh.pop %v4952
    %v4955 = vtanh.pop %v4953
    %v4956 = vmul.f32 %v4924, %v4954
    %v4957 = vmul.f32 %v4939, %v4955
    %v4958 = vpack.c.bf16 %v4822, %v4821
    %4960 = vrot.lane.b32.xlu0 %v4958, 64
    %v4961 = vpop.permute.xlu0 %4960
    %v4963 = vsel %vm2903, %v4961, 0
    %4965 = vmatpush.bf16.msra.mxu0 0
    %4966 = vmatpush.bf16.msra.mxu0 0
    %4967 = vmatpush.bf16.msra.mxu0 0
    %4968 = vmatpush.bf16.msra.mxu0 0
    %4969 = vmatpush.bf16.msra.mxu0 %v3065
    %4970 = vmatpush.bf16.msra.mxu0 %v3063
    %4971 = vmatpush.bf16.msra.mxu0 %v3061
    %4972 = vmatpush.bf16.msra.mxu0 %v3059
    %4973 = vmatmul.bf16.gmra.mxu0 %v4963
    %v4974 = vpop.f32.mrf.mxu0
    %v4975 = vadd.f32 0.0, %v4974
    %v4976 = vpop.f32.mrf.mxu0
    %v4977 = vadd.f32 0.0, %v4976
    %4978 = vdwg.mxu0
    %4979 = vmatpush.bf16.msra.mxu0 0
    %4980 = vmatpush.bf16.msra.mxu0 0
    %4981 = vmatpush.bf16.msra.mxu0 0
    %4982 = vmatpush.bf16.msra.mxu0 0
    %4983 = vmatpush.bf16.msra.mxu0 %v3066
    %4984 = vmatpush.bf16.msra.mxu0 %v3064
    %4985 = vmatpush.bf16.msra.mxu0 %v3062
    %4986 = vmatpush.bf16.msra.mxu0 %v3060
    %4987 = vmatmul.bf16.gmra.mxu0 %v4963
    %v4988 = vpop.f32.mrf.mxu0
    %v4989 = vadd.f32 0.0, %v4988
    %v4990 = vpop.f32.mrf.mxu0
    %v4991 = vadd.f32 0.0, %v4990
    %4992 = vdwg.mxu0
    %v4993 = vadd.f32 %v2843, %v4975
    %v4994 = vadd.f32 %v2844, %v4989
    %v4995 = vadd.f32 %v2845, %v4977
    %v4996 = vadd.f32 %v2846, %v4991
    %v4997 = vxor.u32 %v4993, 2147483648
    %v4998 = vxor.u32 %v4995, 2147483648
    %v4999 = vmul.f32 %v4997, 1.442695
    %v5000 = vpow.pop %v4999
    %v5001 = vmul.f32 %v4998, 1.442695
    %v5002 = vpow.pop %v5001
    %v5003 = vadd.f32 %v5000, 1.0
    %v5004 = vadd.f32 %v5002, 1.0
    %v5005 = vrcp.pop %v5003
    %v5006 = vmul.f32 %v5003, %v5005
    %v5007 = vsub.f32 1.0, %v5006
    %v5008 = vmul.f32 %v5005, %v5007
    %v5009 = vadd.f32 %v5005, %v5008
    %vm5010 = vweird.f32 %v5003
    %vm5011 = vweird.f32 %v5005
    %vm5012 = vmor %vm5010, %vm5011
    %v5013 = vsel %vm5012, %v5005, %v5009
    %v5014 = vand.u32 2147483647, %v5003
    %vm5015 = vcmp.eq.f32.partialorder %v5014, 8.507059e+37
    %v5016 = vand.u32 %v5003, 2147483648
    %v5017 = vor.u32 1.1754944e-38, %v5016
    %v5018 = vsel %vm5015, %v5017, %v5013
    %v5019 = vmul.f32 1.0, %v5018
    %v5020 = vrcp.pop %v5004
    %v5021 = vmul.f32 %v5004, %v5020
    %v5022 = vsub.f32 1.0, %v5021
    %v5023 = vmul.f32 %v5020, %v5022
    %v5024 = vadd.f32 %v5020, %v5023
    %vm5025 = vweird.f32 %v5004
    %vm5026 = vweird.f32 %v5020
    %vm5027 = vmor %vm5025, %vm5026
    %v5028 = vsel %vm5027, %v5020, %v5024
    %v5029 = vand.u32 2147483647, %v5004
    %vm5030 = vcmp.eq.f32.partialorder %v5029, 8.507059e+37
    %v5031 = vand.u32 %v5004, 2147483648
    %v5032 = vor.u32 1.1754944e-38, %v5031
    %v5033 = vsel %vm5030, %v5032, %v5028
    %v5034 = vmul.f32 1.0, %v5033
    %v5035 = vtanh.pop %v4994
    %v5036 = vtanh.pop %v4996
    %v5037 = vxor.u32 %v4994, 2147483648
    %v5038 = vxor.u32 %v4996, 2147483648
    %v5039 = vmul.f32 %v5037, 1.442695
    %v5040 = vpow.pop %v5039
    %v5041 = vmul.f32 %v5038, 1.442695
    %v5042 = vpow.pop %v5041
    %v5043 = vadd.f32 %v5040, 1.0
    %v5044 = vadd.f32 %v5042, 1.0
    %v5045 = vrcp.pop %v5043
    %v5046 = vmul.f32 %v5043, %v5045
    %v5047 = vsub.f32 1.0, %v5046
    %v5048 = vmul.f32 %v5045, %v5047
    %v5049 = vadd.f32 %v5045, %v5048
    %vm5050 = vweird.f32 %v5043
    %vm5051 = vweird.f32 %v5045
    %vm5052 = vmor %vm5050, %vm5051
    %v5053 = vsel %vm5052, %v5045, %v5049
    %v5054 = vand.u32 2147483647, %v5043
    %vm5055 = vcmp.eq.f32.partialorder %v5054, 8.507059e+37
    %v5056 = vand.u32 %v5043, 2147483648
    %v5057 = vor.u32 1.1754944e-38, %v5056
    %v5058 = vsel %vm5055, %v5057, %v5053
    %v5059 = vmul.f32 1.0, %v5058
    %v5060 = vrcp.pop %v5044
    %v5061 = vmul.f32 %v5044, %v5060
    %v5062 = vsub.f32 1.0, %v5061
    %v5063 = vmul.f32 %v5060, %v5062
    %v5064 = vadd.f32 %v5060, %v5063
    %vm5065 = vweird.f32 %v5044
    %vm5066 = vweird.f32 %v5060
    %vm5067 = vmor %vm5065, %vm5066
    %v5068 = vsel %vm5067, %v5060, %v5064
    %v5069 = vand.u32 2147483647, %v5044
    %vm5070 = vcmp.eq.f32.partialorder %v5069, 8.507059e+37
    %v5071 = vand.u32 %v5044, 2147483648
    %v5072 = vor.u32 1.1754944e-38, %v5071
    %v5073 = vsel %vm5070, %v5072, %v5068
    %v5074 = vmul.f32 1.0, %v5073
    %v5075 = vmul.f32 %v5019, %v4817
    %v5076 = vmul.f32 %v5034, %v4818
    %v5077 = vmul.f32 %v5019, %v5035
    %v5078 = vmul.f32 %v5034, %v5036
    %5081 = vrot.lane.b32.xlu0 %v5077, 64
    %v5082 = vpop.permute.xlu0 %5081
    %5083 = vrot.lane.b32.xlu0 %v5078, 64
    %v5084 = vpop.permute.xlu0 %5083
    %v5087 = vadd.f32 %v5075, %v5082
    %v5088 = vadd.f32 %v5076, %v5084
    %v5089 = vtanh.pop %v5087
    %v5090 = vtanh.pop %v5088
    %v5091 = vmul.f32 %v5059, %v5089
    %v5092 = vmul.f32 %v5074, %v5090
    %v5093 = vpack.c.bf16 %v4957, %v4956
    %v5094 = vld [vmem:[%s7] sm:$0xf]
    %v5095 = vld [vmem:[%s7 + $0x4] sm:$0xf]
    %v5096 = vld [vmem:[%s7 + $0x8] sm:$0xf]
    %v5097 = vld [vmem:[%s7 + $0xc] sm:$0xf]
    %v5098 = vld [vmem:[%s7 + $0x10] sm:$0xf]
    %v5099 = vld [vmem:[%s7 + $0x14] sm:$0xf]
    %v5100 = vld [vmem:[%s7 + $0x18] sm:$0xf]
    %v5101 = vld [vmem:[%s7 + $0x1c] sm:$0xf]
    %v5102 = vpack.c.bf16 %v5092, %v5091
    %v5103 = vld [vmem:[%s8] sm:$0xf]
    %v5104 = vld [vmem:[%s8 + $0x4] sm:$0xf]
    %v5105 = vld [vmem:[%s8 + $0x8] sm:$0xf]
    %v5106 = vld [vmem:[%s8 + $0xc] sm:$0xf]
    %v5107 = vld [vmem:[%s8 + $0x10] sm:$0xf]
    %v5108 = vld [vmem:[%s8 + $0x14] sm:$0xf]
    %v5109 = vld [vmem:[%s8 + $0x18] sm:$0xf]
    %v5110 = vld [vmem:[%s8 + $0x1c] sm:$0xf]
    %5112 = vrot.lane.b32.xlu0 %v5102, 64
    %v5113 = vpop.permute.xlu0 %5112
    %v5122 = vunpack.c.l.b16 %v5103
    %v5123 = vunpack.c.l.b16 %v5104
    %v5124 = vunpack.c.l.b16 %v5105
    %v5125 = vunpack.c.l.b16 %v5106
    %v5126 = vunpack.c.l.b16 %v5107
    %v5127 = vunpack.c.l.b16 %v5108
    %v5128 = vunpack.c.l.b16 %v5109
    %v5129 = vunpack.c.l.b16 %v5110
    %v5130 = vpack.c.b16 %v5123, %v5122
    %v5131 = vpack.c.b16 %v5125, %v5124
    %v5132 = vpack.c.b16 %v5127, %v5126
    %v5133 = vpack.c.b16 %v5129, %v5128
    %v5139 = vsel %vm2903, %v5113, 0
    %5141 = vmatpush.bf16.msra.mxu0 0
    %5142 = vmatpush.bf16.msra.mxu0 0
    %5143 = vmatpush.bf16.msra.mxu0 0
    %5144 = vmatpush.bf16.msra.mxu0 0
    %5145 = vmatpush.bf16.msra.mxu0 %v5133
    %5146 = vmatpush.bf16.msra.mxu0 %v5132
    %5147 = vmatpush.bf16.msra.mxu0 %v5131
    %5148 = vmatpush.bf16.msra.mxu0 %v5130
    %5149 = vmatmul.bf16.gmra.mxu0 %v5139
    %v5150 = vpop.f32.mrf.mxu0
    %v5151 = vadd.f32 0.0, %v5150
    %v5152 = vpop.f32.mrf.mxu0
    %v5153 = vadd.f32 0.0, %v5152
    %5154 = vdwg.mxu0
    %5156 = vrot.lane.b32.xlu0 %v5093, 64
    %v5157 = vpop.permute.xlu0 %5156
    %v5166 = vunpack.c.l.b16 %v5094
    %v5167 = vunpack.c.l.b16 %v5095
    %v5168 = vunpack.c.l.b16 %v5096
    %v5169 = vunpack.c.l.b16 %v5097
    %v5170 = vunpack.c.l.b16 %v5098
    %v5171 = vunpack.c.l.b16 %v5099
    %v5172 = vunpack.c.l.b16 %v5100
    %v5173 = vunpack.c.l.b16 %v5101
    %v5174 = vpack.c.b16 %v5167, %v5166
    %v5175 = vpack.c.b16 %v5169, %v5168
    %v5176 = vpack.c.b16 %v5171, %v5170
    %v5177 = vpack.c.b16 %v5173, %v5172
    %v5183 = vsel %vm2903, %v5157, 0
    %5185 = vmatpush.bf16.msra.mxu0 0
    %5186 = vmatpush.bf16.msra.mxu0 0
    %5187 = vmatpush.bf16.msra.mxu0 0
    %5188 = vmatpush.bf16.msra.mxu0 0
    %5189 = vmatpush.bf16.msra.mxu0 %v5177
    %5190 = vmatpush.bf16.msra.mxu0 %v5176
    %5191 = vmatpush.bf16.msra.mxu0 %v5175
    %5192 = vmatpush.bf16.msra.mxu0 %v5174
    %5193 = vmatmul.bf16.gmra.mxu0 %v5183
    %v5194 = vpop.f32.mrf.mxu0
    %v5195 = vadd.f32 %v5151, %v5194
    %v5196 = vpop.f32.mrf.mxu0
    %v5197 = vadd.f32 %v5153, %v5196
    %5198 = vdwg.mxu0
    %v5199 = vld [vmem:[%s9] sm:$0x1]
    %v5201 = vperm.slane %v5199, 0
    %v5203 = vadd.f32 %v5195, %v5201
    %v5204 = vadd.f32 %v5197, %v5201
    %vm5205 = vcmp.ge.f32.partialorder %v5203, 0.0
    %vm5206 = vcmp.ge.f32.partialorder %v5204, 0.0
    %v5207 = vmul.f32 %v5203, 0.01
    %v5208 = vmul.f32 %v5204, 0.01
    %v5209 = vsel %vm5205, %v5203, %v5207
    %v5210 = vsel %vm5206, %v5204, %v5208
    %v5211 = vpack.c.bf16 %v5210, %v5209
    %v5212 = vld [vmem:[%s10] sm:$0xf]
    %v5213 = vld [vmem:[%s10 + $0x4] sm:$0xf]
    %v5214 = vld [vmem:[%s10 + $0x8] sm:$0xf]
    %v5215 = vld [vmem:[%s10 + $0xc] sm:$0xf]
    %v5216 = vld [vmem:[%s10 + $0x10] sm:$0xf]
    %v5217 = vld [vmem:[%s10 + $0x14] sm:$0xf]
    %v5218 = vld [vmem:[%s10 + $0x18] sm:$0xf]
    %v5219 = vld [vmem:[%s10 + $0x1c] sm:$0xf]
    %v5220 = vld [vmem:[%s10 + $0x20] sm:$0xf]
    %v5221 = vld [vmem:[%s10 + $0x24] sm:$0xf]
    %v5222 = vld [vmem:[%s10 + $0x28] sm:$0xf]
    %v5223 = vld [vmem:[%s10 + $0x2c] sm:$0xf]
    %v5224 = vld [vmem:[%s10 + $0x30] sm:$0xf]
    %v5225 = vld [vmem:[%s10 + $0x34] sm:$0xf]
    %v5226 = vld [vmem:[%s10 + $0x38] sm:$0xf]
    %v5227 = vld [vmem:[%s10 + $0x3c] sm:$0xf]
    %v5228 = vld [vmem:[%s11] sm:$0x1]
    %v5230 = vperm.slane %v5228, 0
    %v5248 = vunpack.c.l.b16 %v5212
    %v5249 = vunpack.c.l.b16 %v5213
    %v5250 = vunpack.c.l.b16 %v5214
    %v5251 = vunpack.c.l.b16 %v5215
    %v5252 = vunpack.c.l.b16 %v5216
    %v5253 = vunpack.c.l.b16 %v5217
    %v5254 = vunpack.c.l.b16 %v5218
    %v5255 = vunpack.c.l.b16 %v5219
    %v5256 = vunpack.c.l.b16 %v5220
    %v5257 = vunpack.c.l.b16 %v5221
    %v5258 = vunpack.c.l.b16 %v5222
    %v5259 = vunpack.c.l.b16 %v5223
    %v5260 = vunpack.c.l.b16 %v5224
    %v5261 = vunpack.c.l.b16 %v5225
    %v5262 = vunpack.c.l.b16 %v5226
    %v5263 = vunpack.c.l.b16 %v5227
    %v5264 = vpack.c.b16 %v5249, %v5248
    %v5265 = vpack.c.b16 %v5251, %v5250
    %v5266 = vpack.c.b16 %v5253, %v5252
    %v5267 = vpack.c.b16 %v5255, %v5254
    %v5268 = vpack.c.b16 %v5257, %v5256
    %v5269 = vpack.c.b16 %v5259, %v5258
    %v5270 = vpack.c.b16 %v5261, %v5260
    %v5271 = vpack.c.b16 %v5263, %v5262
    %5280 = vmatpush.bf16.msra.mxu0 %v5271
    %5281 = vmatpush.bf16.msra.mxu0 %v5270
    %5282 = vmatpush.bf16.msra.mxu0 %v5269
    %5283 = vmatpush.bf16.msra.mxu0 %v5268
    %5284 = vmatpush.bf16.msra.mxu0 %v5267
    %5285 = vmatpush.bf16.msra.mxu0 %v5266
    %5286 = vmatpush.bf16.msra.mxu0 %v5265
    %5287 = vmatpush.bf16.msra.mxu0 %v5264
    %5288 = vmatmul.bf16.gmra.mxu0 %v5211
    %v5289 = vpop.f32.mrf.mxu0
    %v5290 = vadd.f32 %v5230, %v5289
    %v5291 = vpop.f32.mrf.mxu0
    %v5292 = vadd.f32 %v5230, %v5291
    %5293 = vdwg.mxu0
    %v5294 = vtanh.pop %v5290
    %v5295 = vtanh.pop %v5292
    %v5296 = vpack.c.bf16 %v5295, %v5294
    %v5297 = vld [vmem:[%s12] sm:$0xf]
    %v5298 = vld [vmem:[%s12 + $0x4] sm:$0xf]
    %v5299 = vld [vmem:[%s12 + $0x8] sm:$0xf]
    %v5300 = vld [vmem:[%s12 + $0xc] sm:$0xf]
    %v5301 = vld [vmem:[%s12 + $0x10] sm:$0xf]
    %v5302 = vld [vmem:[%s12 + $0x14] sm:$0xf]
    %v5303 = vld [vmem:[%s12 + $0x18] sm:$0xf]
    %v5304 = vld [vmem:[%s12 + $0x1c] sm:$0xf]
    %v5305 = vld [vmem:[%s13] sm:$0x1]
    %v5307 = vperm.slane %v5305, 0
    %v5317 = vunpack.c.l.b16 %v5297
    %v5318 = vunpack.c.l.b16 %v5298
    %v5319 = vunpack.c.l.b16 %v5299
    %v5320 = vunpack.c.l.b16 %v5300
    %v5321 = vunpack.c.l.b16 %v5301
    %v5322 = vunpack.c.l.b16 %v5302
    %v5323 = vunpack.c.l.b16 %v5303
    %v5324 = vunpack.c.l.b16 %v5304
    %v5325 = vpack.c.b16 %v5318, %v5317
    %v5326 = vpack.c.b16 %v5320, %v5319
    %v5327 = vpack.c.b16 %v5322, %v5321
    %v5328 = vpack.c.b16 %v5324, %v5323
    %v5334 = vsel %vm2903, %v5296, 0
    %5336 = vmatpush.bf16.msra.mxu0 0
    %5337 = vmatpush.bf16.msra.mxu0 0
    %5338 = vmatpush.bf16.msra.mxu0 0
    %5339 = vmatpush.bf16.msra.mxu0 0
    %5340 = vmatpush.bf16.msra.mxu0 %v5328
    %5341 = vmatpush.bf16.msra.mxu0 %v5327
    %5342 = vmatpush.bf16.msra.mxu0 %v5326
    %5343 = vmatpush.bf16.msra.mxu0 %v5325
    %5344 = vmatmul.bf16.gmra.mxu0 %v5334
    %v5345 = vpop.f32.mrf.mxu0
    %v5346 = vadd.f32 %v5307, %v5345
    %v5347 = vpop.f32.mrf.mxu0
    %v5348 = vadd.f32 %v5307, %v5347
    %5349 = vdwg.mxu0
    %vm5350 = vcmp.ge.f32.partialorder %v5346, 0.0
    %vm5351 = vcmp.ge.f32.partialorder %v5348, 0.0
    %v5352 = vmul.f32 %v5346, 0.01
    %v5353 = vmul.f32 %v5348, 0.01
    %v5354 = vsel %vm5350, %v5346, %v5352
    %v5355 = vsel %vm5351, %v5348, %v5353
    %5356 = vst [vmem:[%s14] sm:$0xff] %v5354
    %5357 = vst [vmem:[%s14 + $0x8] sm:$0xff] %v5355
    // Predicated region
    $region62: #{combine_late_forward.1} parent=1 // pred_check
      _
    $region63: #{combine_late_forward.1} parent=1 // pred_check_branch
      %5359 = sbr.rel (0) target = $region65
    $region64: #{combine_late_forward.1} parent=1 // pred_region
      _
    $region65: #{combine_late_forward.1} parent=1 // pred_fallthru
      _
    // Predicated region
    $region66: #{combine_late_forward.1} parent=1 // pred_check
      _
    $region67: #{combine_late_forward.1} parent=1 // pred_check_branch
      %5361 = sbr.rel (0) target = $region69
    $region68: #{combine_late_forward.1} parent=1 // pred_region
      _
    $region69: #{combine_late_forward.1} parent=1 // pred_fallthru
      _
    %5362 = vsyncpa [#allocation3], 1

</llo_original>
